<compile_context>
chip_gen: v6e
topology: v6e:2x2x1
jax: 0.10.0
libtpu: 0.0.40
codegen_flags: <defaults>
</compile_context>

<pallas_src>
import jax
import jax.numpy as jnp
from jax.experimental import pallas as pl
from jax.experimental.pallas import tpu as pltpu

HIDDEN = 20          # nn.LSTM(input_size=1, hidden_size=20)
HP = 32              # hidden padded to 32 lanes (clean gate boundaries)
GATES = 4 * HP       # 128 lanes = exactly one vreg of packed gates


def stock_lstm_kernel(x_ref, w_ih_ref, w_hh_ref, b_ref,
                      w1_ref, b1_ref, w2_ref, b2_ref, w3_ref, b3_ref,
                      out_ref):
    # x_ref: (Bt, T)        w_ih/b: (1, 128)   w_hh: (32, 128)   (gate cols padded, g-gate x2)
    # w1: (32, 64) b1:(1,64) w2:(64,64) b2:(1,64) w3:(64,C) b3:(1,C)
    # out_ref: (Bt, T*C)  lane-dense batch-major probability slab
    Bt, T = x_ref.shape
    C = w3_ref.shape[1]

    w_hh = w_hh_ref[...]
    w1 = w1_ref[...]
    w2 = w2_ref[...]
    w3 = w3_ref[...]
    # Hoist broadcasts out of the unrolled loop (JAX does not CSE broadcast_in_dim).
    w_ih_b = jnp.broadcast_to(w_ih_ref[...], (Bt, GATES))
    b_b = jnp.broadcast_to(b_ref[...], (Bt, GATES))
    b1_b = jnp.broadcast_to(b1_ref[...], (Bt, 64))
    b2_b = jnp.broadcast_to(b2_ref[...], (Bt, 64))
    b3_b = jnp.broadcast_to(b3_ref[...], (Bt, C))

    h = jnp.zeros((Bt, HP), jnp.float32)
    c = jnp.zeros((Bt, HP), jnp.float32)

    # T = window_length is small and static -> full unroll, all indices static.
    for t in range(T):
        x_t = x_ref[:, t:t + 1]                                   # (Bt, 1), input_size == 1
        pre = x_t * w_ih_b + jnp.dot(h, w_hh,
                                     preferred_element_type=jnp.float32) + b_b   # (Bt, 128)
        s = jax.nn.sigmoid(pre)                                    # one EUP pass for all 4 gates
        i = s[:, 0 * HP:1 * HP]
        f = s[:, 1 * HP:2 * HP]
        g = 2.0 * s[:, 2 * HP:3 * HP] - 1.0                        # tanh(x) = 2*sigmoid(2x) - 1
        o = s[:, 3 * HP:4 * HP]
        c = f * c + i * g
        h = o * jnp.tanh(c)

        # MLP head for this timestep (no serial dependency -> overlaps with next step's
        # recurrence; dropout(p=0.5) is identity in eval mode).
        z1 = jnp.maximum(jnp.dot(h, w1, preferred_element_type=jnp.float32) + b1_b, 0.0)
        z2 = jnp.maximum(jnp.dot(z1, w2, preferred_element_type=jnp.float32) + b2_b, 0.0)
        logits = jnp.dot(z2, w3, preferred_element_type=jnp.float32) + b3_b
        m = jnp.max(logits, axis=-1, keepdims=True)
        e = jnp.exp(logits - m)
        p = e * pl.reciprocal(jnp.sum(e, axis=-1, keepdims=True), approx=False)
        out_ref[:, t * C:(t + 1) * C] = p                          # static lane slice


def pack_params(params):
    """Canonical params -> padded / gate-fused kernel operands."""
    H = HIDDEN

    def pad_gates(w, rows_out):
        # (rows_in, 4H) -> (rows_out, 4*HP); each gate padded 20->32 with zeros,
        # g-gate (index 2) columns scaled by 2 for the tanh=2*sigmoid(2x)-1 fusion.
        rows_in = w.shape[0]
        out = jnp.zeros((rows_out, GATES), jnp.float32)
        for gidx in range(4):
            blk = w[:, gidx * H:(gidx + 1) * H]
            if gidx == 2:
                blk = 2.0 * blk
            out = out.at[:rows_in, gidx * HP:gidx * HP + H].set(blk)
        return out

    w1p = jnp.zeros((HP, 64), jnp.float32).at[:H].set(params["w1"])
    return (pad_gates(params["w_ih"], 1),
            pad_gates(params["w_hh"], HP),
            pad_gates(params["b"], 1),
            w1p, params["b1"], params["w2"], params["b2"],
            params["w3"], params["b3"])


def stock_lstm_forward(x, params, *, b_tile=256):
    """x: (B, T, 1) float32 (batch_first, like the PyTorch module). Returns (B, T, C)."""
    B, T, _ = x.shape
    C = params["w3"].shape[1]
    ops = pack_params(params)

    xb = x[..., 0]                                   # (B, T) batch-major (no transpose)
    if B <= b_tile:
        B_TILE, Bp = B, B
    else:
        B_TILE = b_tile
        Bp = pl.cdiv(B, B_TILE) * B_TILE
        xb = jnp.pad(xb, ((0, Bp - B), (0, 0)))

    w_specs = [pl.BlockSpec(w.shape, lambda i: (0, 0)) for w in ops]  # weights resident
    out = pl.pallas_call(
        stock_lstm_kernel,
        out_shape=jax.ShapeDtypeStruct((Bp, T * C), jnp.float32),
        grid=(Bp // B_TILE,),
        in_specs=[pl.BlockSpec((B_TILE, T), lambda i: (i, 0))] + w_specs,
        out_specs=pl.BlockSpec((B_TILE, T * C), lambda i: (i, 0)),
        compiler_params=pltpu.CompilerParams(
            dimension_semantics=("parallel",),      # batch tiles are independent
            vmem_limit_bytes=32 * 1024 * 1024,      # fits v7x's 64 MiB physical VMEM
        ),
    )(xb, *ops)
    return out[:B].reshape(B, T, C)                  # contiguous reshape, no transpose


def init_params(key, num_classes):
    """Deterministic PyTorch-style uniform init. Weights stored pre-transposed (in, out)."""
    H = HIDDEN
    ks = jax.random.split(key, 10)

    def unif(k, shape, fan_in):
        bound = 1.0 / jnp.sqrt(jnp.float32(fan_in))
        return jax.random.uniform(k, shape, jnp.float32, -bound, bound)

    return {
        # LSTM: weight_ih (4H,1), weight_hh (4H,H), b = b_ih + b_hh (stored transposed)
        "w_ih": unif(ks[0], (1, 4 * H), H),
        "w_hh": unif(ks[1], (H, 4 * H), H),
        "b":    unif(ks[2], (1, 4 * H), H) + unif(ks[3], (1, 4 * H), H),
        "w1":   unif(ks[4], (H, 64), H),   "b1": unif(ks[5], (1, 64), H),
        "w2":   unif(ks[6], (64, 64), 64), "b2": unif(ks[7], (1, 64), 64),
        "w3":   unif(ks[8], (64, num_classes), 64), "b3": unif(ks[9], (1, num_classes), 64),
    }


def reference_forward(x, params):
    """Pure-JAX reference mirroring the PyTorch forward (eval mode)."""
    B, T, _ = x.shape
    H = HIDDEN
    h = jnp.zeros((B, H), jnp.float32)
    c = jnp.zeros((B, H), jnp.float32)
    hs = []
    for t in range(T):
        gates = x[:, t, :] @ params["w_ih"] + h @ params["w_hh"] + params["b"]
        i = jax.nn.sigmoid(gates[:, :H])
        f = jax.nn.sigmoid(gates[:, H:2 * H])
        g = jnp.tanh(gates[:, 2 * H:3 * H])
        o = jax.nn.sigmoid(gates[:, 3 * H:])
        c = f * c + i * g
        h = o * jnp.tanh(c)
        hs.append(h)
    hseq = jnp.stack(hs, axis=1)                          # (B, T, H)
    z1 = jax.nn.relu(hseq @ params["w1"] + params["b1"])
    z2 = jax.nn.relu(z1 @ params["w2"] + params["b2"])
    logits = z2 @ params["w3"] + params["b3"]
    # TODO(synk): original code does `nn.Softmax(self.fc3(x))` (module-construction bug);
    # we implement the intended softmax over the class axis.
    return jax.nn.softmax(logits, axis=-1)


if __name__ == "__main__":
    num_classes = 4
    window_length = 8
    batch = 2

    key = jax.random.PRNGKey(0)
    k_param, k_x = jax.random.split(key)
    params = init_params(k_param, num_classes)
    x = jax.random.normal(k_x, (batch, window_length, 1), jnp.float32)

    out = jax.block_until_ready(stock_lstm_forward(x, params))
    ref = jax.block_until_ready(reference_forward(x, params))

    assert out.shape == (batch, window_length, num_classes)
    # tanh = 2*sigmoid(2x)-1 fusion introduces ~1e-7 absolute rounding differences.
    assert jnp.allclose(out, ref, atol=1e-4, rtol=1e-4), (
        f"max abs diff {jnp.max(jnp.abs(out - ref))}")
    print("KERNEL_OK")
</pallas_src>

<mosaic_0001>
module attributes {stable_mosaic.version = 11 : i64} {
  func.func @stock_lstm_kernel(%arg0: i32, %arg1: memref<2x8xf32, #tpu.memory_space<vmem>>, %arg2: memref<1x128xf32, #tpu.memory_space<vmem>>, %arg3: memref<32x128xf32, #tpu.memory_space<vmem>>, %arg4: memref<1x128xf32, #tpu.memory_space<vmem>>, %arg5: memref<32x64xf32, #tpu.memory_space<vmem>>, %arg6: memref<1x64xf32, #tpu.memory_space<vmem>>, %arg7: memref<64x64xf32, #tpu.memory_space<vmem>>, %arg8: memref<1x64xf32, #tpu.memory_space<vmem>>, %arg9: memref<64x4xf32, #tpu.memory_space<vmem>>, %arg10: memref<1x4xf32, #tpu.memory_space<vmem>>, %arg11: memref<2x32xf32, #tpu.memory_space<vmem>>) attributes {dimension_semantics = [#tpu.dimension_semantics<parallel>], iteration_bounds = array<i64: 1>, scalar_prefetch = 0 : i64, scratch_operands = 0 : i64, tpu.core_type = #tpu.core_type<tc>, window_params = [{transform_indices = @transform_0, window_bounds = array<i64: 2, 8>}, {pipeline_mode = #tpu.pipeline_mode<synchronous>, transform_indices = @transform_1, window_bounds = array<i64: 1, 128>}, {pipeline_mode = #tpu.pipeline_mode<synchronous>, transform_indices = @transform_2, window_bounds = array<i64: 32, 128>}, {pipeline_mode = #tpu.pipeline_mode<synchronous>, transform_indices = @transform_3, window_bounds = array<i64: 1, 128>}, {pipeline_mode = #tpu.pipeline_mode<synchronous>, transform_indices = @transform_4, window_bounds = array<i64: 32, 64>}, {pipeline_mode = #tpu.pipeline_mode<synchronous>, transform_indices = @transform_5, window_bounds = array<i64: 1, 64>}, {pipeline_mode = #tpu.pipeline_mode<synchronous>, transform_indices = @transform_6, window_bounds = array<i64: 64, 64>}, {pipeline_mode = #tpu.pipeline_mode<synchronous>, transform_indices = @transform_7, window_bounds = array<i64: 1, 64>}, {pipeline_mode = #tpu.pipeline_mode<synchronous>, transform_indices = @transform_8, window_bounds = array<i64: 64, 4>}, {pipeline_mode = #tpu.pipeline_mode<synchronous>, transform_indices = @transform_9, window_bounds = array<i64: 1, 4>}, {transform_indices = @transform_10, window_bounds = array<i64: 2, 32>}]} {
    %c0 = arith.constant 0 : index
    %c0_0 = arith.constant 0 : index
    %0 = vector.load %arg3[%c0, %c0_0] : memref<32x128xf32, #tpu.memory_space<vmem>>, vector<32x128xf32>
    %c0_1 = arith.constant 0 : index
    %c0_2 = arith.constant 0 : index
    %1 = vector.load %arg5[%c0_1, %c0_2] : memref<32x64xf32, #tpu.memory_space<vmem>>, vector<32x64xf32>
    %c0_3 = arith.constant 0 : index
    %c0_4 = arith.constant 0 : index
    %2 = vector.load %arg7[%c0_3, %c0_4] : memref<64x64xf32, #tpu.memory_space<vmem>>, vector<64x64xf32>
    %c0_5 = arith.constant 0 : index
    %c0_6 = arith.constant 0 : index
    %3 = vector.load %arg9[%c0_5, %c0_6] : memref<64x4xf32, #tpu.memory_space<vmem>>, vector<64x4xf32>
    %c0_7 = arith.constant 0 : index
    %c0_8 = arith.constant 0 : index
    %4 = vector.load %arg2[%c0_7, %c0_8] : memref<1x128xf32, #tpu.memory_space<vmem>>, vector<1x128xf32>
    %5 = vector.shape_cast %4 : vector<1x128xf32> to vector<1x128xf32>
    %6 = vector.broadcast %5 : vector<1x128xf32> to vector<2x128xf32>
    %c0_9 = arith.constant 0 : index
    %c0_10 = arith.constant 0 : index
    %7 = vector.load %arg4[%c0_9, %c0_10] : memref<1x128xf32, #tpu.memory_space<vmem>>, vector<1x128xf32>
    %8 = vector.shape_cast %7 : vector<1x128xf32> to vector<1x128xf32>
    %9 = vector.broadcast %8 : vector<1x128xf32> to vector<2x128xf32>
    %c0_11 = arith.constant 0 : index
    %c0_12 = arith.constant 0 : index
    %10 = vector.load %arg6[%c0_11, %c0_12] : memref<1x64xf32, #tpu.memory_space<vmem>>, vector<1x64xf32>
    %11 = vector.shape_cast %10 : vector<1x64xf32> to vector<1x64xf32>
    %12 = vector.broadcast %11 : vector<1x64xf32> to vector<2x64xf32>
    %c0_13 = arith.constant 0 : index
    %c0_14 = arith.constant 0 : index
    %13 = vector.load %arg8[%c0_13, %c0_14] : memref<1x64xf32, #tpu.memory_space<vmem>>, vector<1x64xf32>
    %14 = vector.shape_cast %13 : vector<1x64xf32> to vector<1x64xf32>
    %15 = vector.broadcast %14 : vector<1x64xf32> to vector<2x64xf32>
    %c0_15 = arith.constant 0 : index
    %c0_16 = arith.constant 0 : index
    %16 = vector.load %arg10[%c0_15, %c0_16] : memref<1x4xf32, #tpu.memory_space<vmem>>, vector<1x4xf32>
    %17 = vector.shape_cast %16 : vector<1x4xf32> to vector<1x4xf32>
    %18 = vector.broadcast %17 : vector<1x4xf32> to vector<2x4xf32>
    %cst = arith.constant 0.000000e+00 : f32
    %19 = vector.broadcast %cst : f32 to vector<2x32xf32>
    %cst_17 = arith.constant 0.000000e+00 : f32
    %20 = vector.broadcast %cst_17 : f32 to vector<2x32xf32>
    %c0_18 = arith.constant 0 : index
    %c0_19 = arith.constant 0 : index
    %21 = vector.load %arg1[%c0_18, %c0_19] : memref<2x8xf32, #tpu.memory_space<vmem>>, vector<2x1xf32>
    %22 = vector.broadcast %21 : vector<2x1xf32> to vector<2x128xf32>
    %23 = arith.mulf %22, %6 : vector<2x128xf32>
    %cst_20 = arith.constant dense<0.000000e+00> : vector<2x128xf32>
    %24 = tpu.matmul %19, %0, %cst_20 {dimension_numbers = #tpu.dot_dimension_numbers<[1], [0], [0], [1], [0, 0, 1, 1], [], []>} : vector<2x32xf32>, vector<32x128xf32>, vector<2x128xf32> -> vector<2x128xf32>
    %25 = arith.addf %23, %24 : vector<2x128xf32>
    %26 = arith.addf %25, %9 : vector<2x128xf32>
    %27 = arith.negf %26 : vector<2x128xf32>
    %28 = math.exp %27 : vector<2x128xf32>
    %cst_21 = arith.constant 1.000000e+00 : f32
    %29 = vector.broadcast %cst_21 : f32 to vector<2x128xf32>
    %30 = arith.addf %29, %28 : vector<2x128xf32>
    %31 = arith.divf %29, %30 : vector<2x128xf32>
    %32 = vector.extract_strided_slice %31 {offsets = [0, 0], sizes = [2, 32], strides = [1, 1]} : vector<2x128xf32> to vector<2x32xf32>
    %33 = vector.extract_strided_slice %31 {offsets = [0, 32], sizes = [2, 32], strides = [1, 1]} : vector<2x128xf32> to vector<2x32xf32>
    %34 = vector.extract_strided_slice %31 {offsets = [0, 64], sizes = [2, 32], strides = [1, 1]} : vector<2x128xf32> to vector<2x32xf32>
    %cst_22 = arith.constant 2.000000e+00 : f32
    %35 = vector.broadcast %cst_22 : f32 to vector<2x32xf32>
    %36 = arith.mulf %35, %34 : vector<2x32xf32>
    %cst_23 = arith.constant 1.000000e+00 : f32
    %37 = vector.broadcast %cst_23 : f32 to vector<2x32xf32>
    %38 = arith.subf %36, %37 : vector<2x32xf32>
    %39 = vector.extract_strided_slice %31 {offsets = [0, 96], sizes = [2, 32], strides = [1, 1]} : vector<2x128xf32> to vector<2x32xf32>
    %40 = arith.mulf %33, %20 : vector<2x32xf32>
    %41 = arith.mulf %32, %38 : vector<2x32xf32>
    %42 = arith.addf %40, %41 : vector<2x32xf32>
    %43 = math.tanh %42 : vector<2x32xf32>
    %44 = arith.mulf %39, %43 : vector<2x32xf32>
    %cst_24 = arith.constant dense<0.000000e+00> : vector<2x64xf32>
    %45 = tpu.matmul %44, %1, %cst_24 {dimension_numbers = #tpu.dot_dimension_numbers<[1], [0], [0], [1], [0, 0, 1, 1], [], []>} : vector<2x32xf32>, vector<32x64xf32>, vector<2x64xf32> -> vector<2x64xf32>
    %46 = arith.addf %45, %12 : vector<2x64xf32>
    %cst_25 = arith.constant 0.000000e+00 : f32
    %47 = vector.broadcast %cst_25 : f32 to vector<2x64xf32>
    %48 = arith.maximumf %46, %47 : vector<2x64xf32>
    %cst_26 = arith.constant dense<0.000000e+00> : vector<2x64xf32>
    %49 = tpu.matmul %48, %2, %cst_26 {dimension_numbers = #tpu.dot_dimension_numbers<[1], [0], [0], [1], [0, 0, 1, 1], [], []>} : vector<2x64xf32>, vector<64x64xf32>, vector<2x64xf32> -> vector<2x64xf32>
    %50 = arith.addf %49, %15 : vector<2x64xf32>
    %cst_27 = arith.constant 0.000000e+00 : f32
    %51 = vector.broadcast %cst_27 : f32 to vector<2x64xf32>
    %52 = arith.maximumf %50, %51 : vector<2x64xf32>
    %cst_28 = arith.constant dense<0.000000e+00> : vector<2x4xf32>
    %53 = tpu.matmul %52, %3, %cst_28 {dimension_numbers = #tpu.dot_dimension_numbers<[1], [0], [0], [1], [0, 0, 1, 1], [], []>} : vector<2x64xf32>, vector<64x4xf32>, vector<2x4xf32> -> vector<2x4xf32>
    %54 = arith.addf %53, %18 : vector<2x4xf32>
    %cst_29 = arith.constant dense<0xFF800000> : vector<2xf32>
    %55 = vector.multi_reduction <maximumf>, %54, %cst_29 [1] : vector<2x4xf32> to vector<2xf32>
    %56 = vector.shape_cast %55 : vector<2xf32> to vector<2x1xf32>
    %57 = vector.broadcast %56 : vector<2x1xf32> to vector<2x4xf32>
    %58 = arith.subf %54, %57 : vector<2x4xf32>
    %59 = math.exp %58 : vector<2x4xf32>
    %cst_30 = arith.constant dense<0.000000e+00> : vector<2xf32>
    %60 = vector.multi_reduction <add>, %59, %cst_30 [1] : vector<2x4xf32> to vector<2xf32>
    %61 = vector.shape_cast %60 : vector<2xf32> to vector<2x1xf32>
    %62 = tpu.reciprocal %61 : vector<2x1xf32> -> vector<2x1xf32>
    %63 = vector.broadcast %62 : vector<2x1xf32> to vector<2x4xf32>
    %64 = arith.mulf %59, %63 : vector<2x4xf32>
    %c0_31 = arith.constant 0 : index
    %c0_32 = arith.constant 0 : index
    %65 = vector.load %arg11[%c0_31, %c0_32] : memref<2x32xf32, #tpu.memory_space<vmem>>, vector<2x4xf32>
    tpu.vector_store %arg11[%c0_31, %c0_32], %64 {strides = array<i32>} : memref<2x32xf32, #tpu.memory_space<vmem>>, vector<2x4xf32>,
    %c0_33 = arith.constant 0 : index
    %c1 = arith.constant 1 : index
    %66 = vector.load %arg1[%c0_33, %c1] : memref<2x8xf32, #tpu.memory_space<vmem>>, vector<2x1xf32>
    %67 = vector.broadcast %66 : vector<2x1xf32> to vector<2x128xf32>
    %68 = arith.mulf %67, %6 : vector<2x128xf32>
    %cst_34 = arith.constant dense<0.000000e+00> : vector<2x128xf32>
    %69 = tpu.matmul %44, %0, %cst_34 {dimension_numbers = #tpu.dot_dimension_numbers<[1], [0], [0], [1], [0, 0, 1, 1], [], []>} : vector<2x32xf32>, vector<32x128xf32>, vector<2x128xf32> -> vector<2x128xf32>
    %70 = arith.addf %68, %69 : vector<2x128xf32>
    %71 = arith.addf %70, %9 : vector<2x128xf32>
    %72 = arith.negf %71 : vector<2x128xf32>
    %73 = math.exp %72 : vector<2x128xf32>
    %cst_35 = arith.constant 1.000000e+00 : f32
    %74 = vector.broadcast %cst_35 : f32 to vector<2x128xf32>
    %75 = arith.addf %74, %73 : vector<2x128xf32>
    %76 = arith.divf %74, %75 : vector<2x128xf32>
    %77 = vector.extract_strided_slice %76 {offsets = [0, 0], sizes = [2, 32], strides = [1, 1]} : vector<2x128xf32> to vector<2x32xf32>
    %78 = vector.extract_strided_slice %76 {offsets = [0, 32], sizes = [2, 32], strides = [1, 1]} : vector<2x128xf32> to vector<2x32xf32>
    %79 = vector.extract_strided_slice %76 {offsets = [0, 64], sizes = [2, 32], strides = [1, 1]} : vector<2x128xf32> to vector<2x32xf32>
    %cst_36 = arith.constant 2.000000e+00 : f32
    %80 = vector.broadcast %cst_36 : f32 to vector<2x32xf32>
    %81 = arith.mulf %80, %79 : vector<2x32xf32>
    %cst_37 = arith.constant 1.000000e+00 : f32
    %82 = vector.broadcast %cst_37 : f32 to vector<2x32xf32>
    %83 = arith.subf %81, %82 : vector<2x32xf32>
    %84 = vector.extract_strided_slice %76 {offsets = [0, 96], sizes = [2, 32], strides = [1, 1]} : vector<2x128xf32> to vector<2x32xf32>
    %85 = arith.mulf %78, %42 : vector<2x32xf32>
    %86 = arith.mulf %77, %83 : vector<2x32xf32>
    %87 = arith.addf %85, %86 : vector<2x32xf32>
    %88 = math.tanh %87 : vector<2x32xf32>
    %89 = arith.mulf %84, %88 : vector<2x32xf32>
    %cst_38 = arith.constant dense<0.000000e+00> : vector<2x64xf32>
    %90 = tpu.matmul %89, %1, %cst_38 {dimension_numbers = #tpu.dot_dimension_numbers<[1], [0], [0], [1], [0, 0, 1, 1], [], []>} : vector<2x32xf32>, vector<32x64xf32>, vector<2x64xf32> -> vector<2x64xf32>
    %91 = arith.addf %90, %12 : vector<2x64xf32>
    %cst_39 = arith.constant 0.000000e+00 : f32
    %92 = vector.broadcast %cst_39 : f32 to vector<2x64xf32>
    %93 = arith.maximumf %91, %92 : vector<2x64xf32>
    %cst_40 = arith.constant dense<0.000000e+00> : vector<2x64xf32>
    %94 = tpu.matmul %93, %2, %cst_40 {dimension_numbers = #tpu.dot_dimension_numbers<[1], [0], [0], [1], [0, 0, 1, 1], [], []>} : vector<2x64xf32>, vector<64x64xf32>, vector<2x64xf32> -> vector<2x64xf32>
    %95 = arith.addf %94, %15 : vector<2x64xf32>
    %cst_41 = arith.constant 0.000000e+00 : f32
    %96 = vector.broadcast %cst_41 : f32 to vector<2x64xf32>
    %97 = arith.maximumf %95, %96 : vector<2x64xf32>
    %cst_42 = arith.constant dense<0.000000e+00> : vector<2x4xf32>
    %98 = tpu.matmul %97, %3, %cst_42 {dimension_numbers = #tpu.dot_dimension_numbers<[1], [0], [0], [1], [0, 0, 1, 1], [], []>} : vector<2x64xf32>, vector<64x4xf32>, vector<2x4xf32> -> vector<2x4xf32>
    %99 = arith.addf %98, %18 : vector<2x4xf32>
    %cst_43 = arith.constant dense<0xFF800000> : vector<2xf32>
    %100 = vector.multi_reduction <maximumf>, %99, %cst_43 [1] : vector<2x4xf32> to vector<2xf32>
    %101 = vector.shape_cast %100 : vector<2xf32> to vector<2x1xf32>
    %102 = vector.broadcast %101 : vector<2x1xf32> to vector<2x4xf32>
    %103 = arith.subf %99, %102 : vector<2x4xf32>
    %104 = math.exp %103 : vector<2x4xf32>
    %cst_44 = arith.constant dense<0.000000e+00> : vector<2xf32>
    %105 = vector.multi_reduction <add>, %104, %cst_44 [1] : vector<2x4xf32> to vector<2xf32>
    %106 = vector.shape_cast %105 : vector<2xf32> to vector<2x1xf32>
    %107 = tpu.reciprocal %106 : vector<2x1xf32> -> vector<2x1xf32>
    %108 = vector.broadcast %107 : vector<2x1xf32> to vector<2x4xf32>
    %109 = arith.mulf %104, %108 : vector<2x4xf32>
    %c0_45 = arith.constant 0 : index
    %c4 = arith.constant 4 : index
    %110 = vector.load %arg11[%c0_45, %c4] : memref<2x32xf32, #tpu.memory_space<vmem>>, vector<2x4xf32>
    tpu.vector_store %arg11[%c0_45, %c4], %109 {strides = array<i32>} : memref<2x32xf32, #tpu.memory_space<vmem>>, vector<2x4xf32>,
    %c0_46 = arith.constant 0 : index
    %c2 = arith.constant 2 : index
    %111 = vector.load %arg1[%c0_46, %c2] : memref<2x8xf32, #tpu.memory_space<vmem>>, vector<2x1xf32>
    %112 = vector.broadcast %111 : vector<2x1xf32> to vector<2x128xf32>
    %113 = arith.mulf %112, %6 : vector<2x128xf32>
    %cst_47 = arith.constant dense<0.000000e+00> : vector<2x128xf32>
    %114 = tpu.matmul %89, %0, %cst_47 {dimension_numbers = #tpu.dot_dimension_numbers<[1], [0], [0], [1], [0, 0, 1, 1], [], []>} : vector<2x32xf32>, vector<32x128xf32>, vector<2x128xf32> -> vector<2x128xf32>
    %115 = arith.addf %113, %114 : vector<2x128xf32>
    %116 = arith.addf %115, %9 : vector<2x128xf32>
    %117 = arith.negf %116 : vector<2x128xf32>
    %118 = math.exp %117 : vector<2x128xf32>
    %cst_48 = arith.constant 1.000000e+00 : f32
    %119 = vector.broadcast %cst_48 : f32 to vector<2x128xf32>
    %120 = arith.addf %119, %118 : vector<2x128xf32>
    %121 = arith.divf %119, %120 : vector<2x128xf32>
    %122 = vector.extract_strided_slice %121 {offsets = [0, 0], sizes = [2, 32], strides = [1, 1]} : vector<2x128xf32> to vector<2x32xf32>
    %123 = vector.extract_strided_slice %121 {offsets = [0, 32], sizes = [2, 32], strides = [1, 1]} : vector<2x128xf32> to vector<2x32xf32>
    %124 = vector.extract_strided_slice %121 {offsets = [0, 64], sizes = [2, 32], strides = [1, 1]} : vector<2x128xf32> to vector<2x32xf32>
    %cst_49 = arith.constant 2.000000e+00 : f32
    %125 = vector.broadcast %cst_49 : f32 to vector<2x32xf32>
    %126 = arith.mulf %125, %124 : vector<2x32xf32>
    %cst_50 = arith.constant 1.000000e+00 : f32
    %127 = vector.broadcast %cst_50 : f32 to vector<2x32xf32>
    %128 = arith.subf %126, %127 : vector<2x32xf32>
    %129 = vector.extract_strided_slice %121 {offsets = [0, 96], sizes = [2, 32], strides = [1, 1]} : vector<2x128xf32> to vector<2x32xf32>
    %130 = arith.mulf %123, %87 : vector<2x32xf32>
    %131 = arith.mulf %122, %128 : vector<2x32xf32>
    %132 = arith.addf %130, %131 : vector<2x32xf32>
    %133 = math.tanh %132 : vector<2x32xf32>
    %134 = arith.mulf %129, %133 : vector<2x32xf32>
    %cst_51 = arith.constant dense<0.000000e+00> : vector<2x64xf32>
    %135 = tpu.matmul %134, %1, %cst_51 {dimension_numbers = #tpu.dot_dimension_numbers<[1], [0], [0], [1], [0, 0, 1, 1], [], []>} : vector<2x32xf32>, vector<32x64xf32>, vector<2x64xf32> -> vector<2x64xf32>
    %136 = arith.addf %135, %12 : vector<2x64xf32>
    %cst_52 = arith.constant 0.000000e+00 : f32
    %137 = vector.broadcast %cst_52 : f32 to vector<2x64xf32>
    %138 = arith.maximumf %136, %137 : vector<2x64xf32>
    %cst_53 = arith.constant dense<0.000000e+00> : vector<2x64xf32>
    %139 = tpu.matmul %138, %2, %cst_53 {dimension_numbers = #tpu.dot_dimension_numbers<[1], [0], [0], [1], [0, 0, 1, 1], [], []>} : vector<2x64xf32>, vector<64x64xf32>, vector<2x64xf32> -> vector<2x64xf32>
    %140 = arith.addf %139, %15 : vector<2x64xf32>
    %cst_54 = arith.constant 0.000000e+00 : f32
    %141 = vector.broadcast %cst_54 : f32 to vector<2x64xf32>
    %142 = arith.maximumf %140, %141 : vector<2x64xf32>
    %cst_55 = arith.constant dense<0.000000e+00> : vector<2x4xf32>
    %143 = tpu.matmul %142, %3, %cst_55 {dimension_numbers = #tpu.dot_dimension_numbers<[1], [0], [0], [1], [0, 0, 1, 1], [], []>} : vector<2x64xf32>, vector<64x4xf32>, vector<2x4xf32> -> vector<2x4xf32>
    %144 = arith.addf %143, %18 : vector<2x4xf32>
    %cst_56 = arith.constant dense<0xFF800000> : vector<2xf32>
    %145 = vector.multi_reduction <maximumf>, %144, %cst_56 [1] : vector<2x4xf32> to vector<2xf32>
    %146 = vector.shape_cast %145 : vector<2xf32> to vector<2x1xf32>
    %147 = vector.broadcast %146 : vector<2x1xf32> to vector<2x4xf32>
    %148 = arith.subf %144, %147 : vector<2x4xf32>
    %149 = math.exp %148 : vector<2x4xf32>
    %cst_57 = arith.constant dense<0.000000e+00> : vector<2xf32>
    %150 = vector.multi_reduction <add>, %149, %cst_57 [1] : vector<2x4xf32> to vector<2xf32>
    %151 = vector.shape_cast %150 : vector<2xf32> to vector<2x1xf32>
    %152 = tpu.reciprocal %151 : vector<2x1xf32> -> vector<2x1xf32>
    %153 = vector.broadcast %152 : vector<2x1xf32> to vector<2x4xf32>
    %154 = arith.mulf %149, %153 : vector<2x4xf32>
    %c0_58 = arith.constant 0 : index
    %c8 = arith.constant 8 : index
    %155 = vector.load %arg11[%c0_58, %c8] : memref<2x32xf32, #tpu.memory_space<vmem>>, vector<2x4xf32>
    tpu.vector_store %arg11[%c0_58, %c8], %154 {strides = array<i32>} : memref<2x32xf32, #tpu.memory_space<vmem>>, vector<2x4xf32>,
    %c0_59 = arith.constant 0 : index
    %c3 = arith.constant 3 : index
    %156 = vector.load %arg1[%c0_59, %c3] : memref<2x8xf32, #tpu.memory_space<vmem>>, vector<2x1xf32>
    %157 = vector.broadcast %156 : vector<2x1xf32> to vector<2x128xf32>
    %158 = arith.mulf %157, %6 : vector<2x128xf32>
    %cst_60 = arith.constant dense<0.000000e+00> : vector<2x128xf32>
    %159 = tpu.matmul %134, %0, %cst_60 {dimension_numbers = #tpu.dot_dimension_numbers<[1], [0], [0], [1], [0, 0, 1, 1], [], []>} : vector<2x32xf32>, vector<32x128xf32>, vector<2x128xf32> -> vector<2x128xf32>
    %160 = arith.addf %158, %159 : vector<2x128xf32>
    %161 = arith.addf %160, %9 : vector<2x128xf32>
    %162 = arith.negf %161 : vector<2x128xf32>
    %163 = math.exp %162 : vector<2x128xf32>
    %cst_61 = arith.constant 1.000000e+00 : f32
    %164 = vector.broadcast %cst_61 : f32 to vector<2x128xf32>
    %165 = arith.addf %164, %163 : vector<2x128xf32>
    %166 = arith.divf %164, %165 : vector<2x128xf32>
    %167 = vector.extract_strided_slice %166 {offsets = [0, 0], sizes = [2, 32], strides = [1, 1]} : vector<2x128xf32> to vector<2x32xf32>
    %168 = vector.extract_strided_slice %166 {offsets = [0, 32], sizes = [2, 32], strides = [1, 1]} : vector<2x128xf32> to vector<2x32xf32>
    %169 = vector.extract_strided_slice %166 {offsets = [0, 64], sizes = [2, 32], strides = [1, 1]} : vector<2x128xf32> to vector<2x32xf32>
    %cst_62 = arith.constant 2.000000e+00 : f32
    %170 = vector.broadcast %cst_62 : f32 to vector<2x32xf32>
    %171 = arith.mulf %170, %169 : vector<2x32xf32>
    %cst_63 = arith.constant 1.000000e+00 : f32
    %172 = vector.broadcast %cst_63 : f32 to vector<2x32xf32>
    %173 = arith.subf %171, %172 : vector<2x32xf32>
    %174 = vector.extract_strided_slice %166 {offsets = [0, 96], sizes = [2, 32], strides = [1, 1]} : vector<2x128xf32> to vector<2x32xf32>
    %175 = arith.mulf %168, %132 : vector<2x32xf32>
    %176 = arith.mulf %167, %173 : vector<2x32xf32>
    %177 = arith.addf %175, %176 : vector<2x32xf32>
    %178 = math.tanh %177 : vector<2x32xf32>
    %179 = arith.mulf %174, %178 : vector<2x32xf32>
    %cst_64 = arith.constant dense<0.000000e+00> : vector<2x64xf32>
    %180 = tpu.matmul %179, %1, %cst_64 {dimension_numbers = #tpu.dot_dimension_numbers<[1], [0], [0], [1], [0, 0, 1, 1], [], []>} : vector<2x32xf32>, vector<32x64xf32>, vector<2x64xf32> -> vector<2x64xf32>
    %181 = arith.addf %180, %12 : vector<2x64xf32>
    %cst_65 = arith.constant 0.000000e+00 : f32
    %182 = vector.broadcast %cst_65 : f32 to vector<2x64xf32>
    %183 = arith.maximumf %181, %182 : vector<2x64xf32>
    %cst_66 = arith.constant dense<0.000000e+00> : vector<2x64xf32>
    %184 = tpu.matmul %183, %2, %cst_66 {dimension_numbers = #tpu.dot_dimension_numbers<[1], [0], [0], [1], [0, 0, 1, 1], [], []>} : vector<2x64xf32>, vector<64x64xf32>, vector<2x64xf32> -> vector<2x64xf32>
    %185 = arith.addf %184, %15 : vector<2x64xf32>
    %cst_67 = arith.constant 0.000000e+00 : f32
    %186 = vector.broadcast %cst_67 : f32 to vector<2x64xf32>
    %187 = arith.maximumf %185, %186 : vector<2x64xf32>
    %cst_68 = arith.constant dense<0.000000e+00> : vector<2x4xf32>
    %188 = tpu.matmul %187, %3, %cst_68 {dimension_numbers = #tpu.dot_dimension_numbers<[1], [0], [0], [1], [0, 0, 1, 1], [], []>} : vector<2x64xf32>, vector<64x4xf32>, vector<2x4xf32> -> vector<2x4xf32>
    %189 = arith.addf %188, %18 : vector<2x4xf32>
    %cst_69 = arith.constant dense<0xFF800000> : vector<2xf32>
    %190 = vector.multi_reduction <maximumf>, %189, %cst_69 [1] : vector<2x4xf32> to vector<2xf32>
    %191 = vector.shape_cast %190 : vector<2xf32> to vector<2x1xf32>
    %192 = vector.broadcast %191 : vector<2x1xf32> to vector<2x4xf32>
    %193 = arith.subf %189, %192 : vector<2x4xf32>
    %194 = math.exp %193 : vector<2x4xf32>
    %cst_70 = arith.constant dense<0.000000e+00> : vector<2xf32>
    %195 = vector.multi_reduction <add>, %194, %cst_70 [1] : vector<2x4xf32> to vector<2xf32>
    %196 = vector.shape_cast %195 : vector<2xf32> to vector<2x1xf32>
    %197 = tpu.reciprocal %196 : vector<2x1xf32> -> vector<2x1xf32>
    %198 = vector.broadcast %197 : vector<2x1xf32> to vector<2x4xf32>
    %199 = arith.mulf %194, %198 : vector<2x4xf32>
    %c0_71 = arith.constant 0 : index
    %c12 = arith.constant 12 : index
    %200 = vector.load %arg11[%c0_71, %c12] : memref<2x32xf32, #tpu.memory_space<vmem>>, vector<2x4xf32>
    tpu.vector_store %arg11[%c0_71, %c12], %199 {strides = array<i32>} : memref<2x32xf32, #tpu.memory_space<vmem>>, vector<2x4xf32>,
    %c0_72 = arith.constant 0 : index
    %c4_73 = arith.constant 4 : index
    %201 = vector.load %arg1[%c0_72, %c4_73] : memref<2x8xf32, #tpu.memory_space<vmem>>, vector<2x1xf32>
    %202 = vector.broadcast %201 : vector<2x1xf32> to vector<2x128xf32>
    %203 = arith.mulf %202, %6 : vector<2x128xf32>
    %cst_74 = arith.constant dense<0.000000e+00> : vector<2x128xf32>
    %204 = tpu.matmul %179, %0, %cst_74 {dimension_numbers = #tpu.dot_dimension_numbers<[1], [0], [0], [1], [0, 0, 1, 1], [], []>} : vector<2x32xf32>, vector<32x128xf32>, vector<2x128xf32> -> vector<2x128xf32>
    %205 = arith.addf %203, %204 : vector<2x128xf32>
    %206 = arith.addf %205, %9 : vector<2x128xf32>
    %207 = arith.negf %206 : vector<2x128xf32>
    %208 = math.exp %207 : vector<2x128xf32>
    %cst_75 = arith.constant 1.000000e+00 : f32
    %209 = vector.broadcast %cst_75 : f32 to vector<2x128xf32>
    %210 = arith.addf %209, %208 : vector<2x128xf32>
    %211 = arith.divf %209, %210 : vector<2x128xf32>
    %212 = vector.extract_strided_slice %211 {offsets = [0, 0], sizes = [2, 32], strides = [1, 1]} : vector<2x128xf32> to vector<2x32xf32>
    %213 = vector.extract_strided_slice %211 {offsets = [0, 32], sizes = [2, 32], strides = [1, 1]} : vector<2x128xf32> to vector<2x32xf32>
    %214 = vector.extract_strided_slice %211 {offsets = [0, 64], sizes = [2, 32], strides = [1, 1]} : vector<2x128xf32> to vector<2x32xf32>
    %cst_76 = arith.constant 2.000000e+00 : f32
    %215 = vector.broadcast %cst_76 : f32 to vector<2x32xf32>
    %216 = arith.mulf %215, %214 : vector<2x32xf32>
    %cst_77 = arith.constant 1.000000e+00 : f32
    %217 = vector.broadcast %cst_77 : f32 to vector<2x32xf32>
    %218 = arith.subf %216, %217 : vector<2x32xf32>
    %219 = vector.extract_strided_slice %211 {offsets = [0, 96], sizes = [2, 32], strides = [1, 1]} : vector<2x128xf32> to vector<2x32xf32>
    %220 = arith.mulf %213, %177 : vector<2x32xf32>
    %221 = arith.mulf %212, %218 : vector<2x32xf32>
    %222 = arith.addf %220, %221 : vector<2x32xf32>
    %223 = math.tanh %222 : vector<2x32xf32>
    %224 = arith.mulf %219, %223 : vector<2x32xf32>
    %cst_78 = arith.constant dense<0.000000e+00> : vector<2x64xf32>
    %225 = tpu.matmul %224, %1, %cst_78 {dimension_numbers = #tpu.dot_dimension_numbers<[1], [0], [0], [1], [0, 0, 1, 1], [], []>} : vector<2x32xf32>, vector<32x64xf32>, vector<2x64xf32> -> vector<2x64xf32>
    %226 = arith.addf %225, %12 : vector<2x64xf32>
    %cst_79 = arith.constant 0.000000e+00 : f32
    %227 = vector.broadcast %cst_79 : f32 to vector<2x64xf32>
    %228 = arith.maximumf %226, %227 : vector<2x64xf32>
    %cst_80 = arith.constant dense<0.000000e+00> : vector<2x64xf32>
    %229 = tpu.matmul %228, %2, %cst_80 {dimension_numbers = #tpu.dot_dimension_numbers<[1], [0], [0], [1], [0, 0, 1, 1], [], []>} : vector<2x64xf32>, vector<64x64xf32>, vector<2x64xf32> -> vector<2x64xf32>
    %230 = arith.addf %229, %15 : vector<2x64xf32>
    %cst_81 = arith.constant 0.000000e+00 : f32
    %231 = vector.broadcast %cst_81 : f32 to vector<2x64xf32>
    %232 = arith.maximumf %230, %231 : vector<2x64xf32>
    %cst_82 = arith.constant dense<0.000000e+00> : vector<2x4xf32>
    %233 = tpu.matmul %232, %3, %cst_82 {dimension_numbers = #tpu.dot_dimension_numbers<[1], [0], [0], [1], [0, 0, 1, 1], [], []>} : vector<2x64xf32>, vector<64x4xf32>, vector<2x4xf32> -> vector<2x4xf32>
    %234 = arith.addf %233, %18 : vector<2x4xf32>
    %cst_83 = arith.constant dense<0xFF800000> : vector<2xf32>
    %235 = vector.multi_reduction <maximumf>, %234, %cst_83 [1] : vector<2x4xf32> to vector<2xf32>
    %236 = vector.shape_cast %235 : vector<2xf32> to vector<2x1xf32>
    %237 = vector.broadcast %236 : vector<2x1xf32> to vector<2x4xf32>
    %238 = arith.subf %234, %237 : vector<2x4xf32>
    %239 = math.exp %238 : vector<2x4xf32>
    %cst_84 = arith.constant dense<0.000000e+00> : vector<2xf32>
    %240 = vector.multi_reduction <add>, %239, %cst_84 [1] : vector<2x4xf32> to vector<2xf32>
    %241 = vector.shape_cast %240 : vector<2xf32> to vector<2x1xf32>
    %242 = tpu.reciprocal %241 : vector<2x1xf32> -> vector<2x1xf32>
    %243 = vector.broadcast %242 : vector<2x1xf32> to vector<2x4xf32>
    %244 = arith.mulf %239, %243 : vector<2x4xf32>
    %c0_85 = arith.constant 0 : index
    %c16 = arith.constant 16 : index
    %245 = vector.load %arg11[%c0_85, %c16] : memref<2x32xf32, #tpu.memory_space<vmem>>, vector<2x4xf32>
    tpu.vector_store %arg11[%c0_85, %c16], %244 {strides = array<i32>} : memref<2x32xf32, #tpu.memory_space<vmem>>, vector<2x4xf32>,
    %c0_86 = arith.constant 0 : index
    %c5 = arith.constant 5 : index
    %246 = vector.load %arg1[%c0_86, %c5] : memref<2x8xf32, #tpu.memory_space<vmem>>, vector<2x1xf32>
    %247 = vector.broadcast %246 : vector<2x1xf32> to vector<2x128xf32>
    %248 = arith.mulf %247, %6 : vector<2x128xf32>
    %cst_87 = arith.constant dense<0.000000e+00> : vector<2x128xf32>
    %249 = tpu.matmul %224, %0, %cst_87 {dimension_numbers = #tpu.dot_dimension_numbers<[1], [0], [0], [1], [0, 0, 1, 1], [], []>} : vector<2x32xf32>, vector<32x128xf32>, vector<2x128xf32> -> vector<2x128xf32>
    %250 = arith.addf %248, %249 : vector<2x128xf32>
    %251 = arith.addf %250, %9 : vector<2x128xf32>
    %252 = arith.negf %251 : vector<2x128xf32>
    %253 = math.exp %252 : vector<2x128xf32>
    %cst_88 = arith.constant 1.000000e+00 : f32
    %254 = vector.broadcast %cst_88 : f32 to vector<2x128xf32>
    %255 = arith.addf %254, %253 : vector<2x128xf32>
    %256 = arith.divf %254, %255 : vector<2x128xf32>
    %257 = vector.extract_strided_slice %256 {offsets = [0, 0], sizes = [2, 32], strides = [1, 1]} : vector<2x128xf32> to vector<2x32xf32>
    %258 = vector.extract_strided_slice %256 {offsets = [0, 32], sizes = [2, 32], strides = [1, 1]} : vector<2x128xf32> to vector<2x32xf32>
    %259 = vector.extract_strided_slice %256 {offsets = [0, 64], sizes = [2, 32], strides = [1, 1]} : vector<2x128xf32> to vector<2x32xf32>
    %cst_89 = arith.constant 2.000000e+00 : f32
    %260 = vector.broadcast %cst_89 : f32 to vector<2x32xf32>
    %261 = arith.mulf %260, %259 : vector<2x32xf32>
    %cst_90 = arith.constant 1.000000e+00 : f32
    %262 = vector.broadcast %cst_90 : f32 to vector<2x32xf32>
    %263 = arith.subf %261, %262 : vector<2x32xf32>
    %264 = vector.extract_strided_slice %256 {offsets = [0, 96], sizes = [2, 32], strides = [1, 1]} : vector<2x128xf32> to vector<2x32xf32>
    %265 = arith.mulf %258, %222 : vector<2x32xf32>
    %266 = arith.mulf %257, %263 : vector<2x32xf32>
    %267 = arith.addf %265, %266 : vector<2x32xf32>
    %268 = math.tanh %267 : vector<2x32xf32>
    %269 = arith.mulf %264, %268 : vector<2x32xf32>
    %cst_91 = arith.constant dense<0.000000e+00> : vector<2x64xf32>
    %270 = tpu.matmul %269, %1, %cst_91 {dimension_numbers = #tpu.dot_dimension_numbers<[1], [0], [0], [1], [0, 0, 1, 1], [], []>} : vector<2x32xf32>, vector<32x64xf32>, vector<2x64xf32> -> vector<2x64xf32>
    %271 = arith.addf %270, %12 : vector<2x64xf32>
    %cst_92 = arith.constant 0.000000e+00 : f32
    %272 = vector.broadcast %cst_92 : f32 to vector<2x64xf32>
    %273 = arith.maximumf %271, %272 : vector<2x64xf32>
    %cst_93 = arith.constant dense<0.000000e+00> : vector<2x64xf32>
    %274 = tpu.matmul %273, %2, %cst_93 {dimension_numbers = #tpu.dot_dimension_numbers<[1], [0], [0], [1], [0, 0, 1, 1], [], []>} : vector<2x64xf32>, vector<64x64xf32>, vector<2x64xf32> -> vector<2x64xf32>
    %275 = arith.addf %274, %15 : vector<2x64xf32>
    %cst_94 = arith.constant 0.000000e+00 : f32
    %276 = vector.broadcast %cst_94 : f32 to vector<2x64xf32>
    %277 = arith.maximumf %275, %276 : vector<2x64xf32>
    %cst_95 = arith.constant dense<0.000000e+00> : vector<2x4xf32>
    %278 = tpu.matmul %277, %3, %cst_95 {dimension_numbers = #tpu.dot_dimension_numbers<[1], [0], [0], [1], [0, 0, 1, 1], [], []>} : vector<2x64xf32>, vector<64x4xf32>, vector<2x4xf32> -> vector<2x4xf32>
    %279 = arith.addf %278, %18 : vector<2x4xf32>
    %cst_96 = arith.constant dense<0xFF800000> : vector<2xf32>
    %280 = vector.multi_reduction <maximumf>, %279, %cst_96 [1] : vector<2x4xf32> to vector<2xf32>
    %281 = vector.shape_cast %280 : vector<2xf32> to vector<2x1xf32>
    %282 = vector.broadcast %281 : vector<2x1xf32> to vector<2x4xf32>
    %283 = arith.subf %279, %282 : vector<2x4xf32>
    %284 = math.exp %283 : vector<2x4xf32>
    %cst_97 = arith.constant dense<0.000000e+00> : vector<2xf32>
    %285 = vector.multi_reduction <add>, %284, %cst_97 [1] : vector<2x4xf32> to vector<2xf32>
    %286 = vector.shape_cast %285 : vector<2xf32> to vector<2x1xf32>
    %287 = tpu.reciprocal %286 : vector<2x1xf32> -> vector<2x1xf32>
    %288 = vector.broadcast %287 : vector<2x1xf32> to vector<2x4xf32>
    %289 = arith.mulf %284, %288 : vector<2x4xf32>
    %c0_98 = arith.constant 0 : index
    %c20 = arith.constant 20 : index
    %290 = vector.load %arg11[%c0_98, %c20] : memref<2x32xf32, #tpu.memory_space<vmem>>, vector<2x4xf32>
    tpu.vector_store %arg11[%c0_98, %c20], %289 {strides = array<i32>} : memref<2x32xf32, #tpu.memory_space<vmem>>, vector<2x4xf32>,
    %c0_99 = arith.constant 0 : index
    %c6 = arith.constant 6 : index
    %291 = vector.load %arg1[%c0_99, %c6] : memref<2x8xf32, #tpu.memory_space<vmem>>, vector<2x1xf32>
    %292 = vector.broadcast %291 : vector<2x1xf32> to vector<2x128xf32>
    %293 = arith.mulf %292, %6 : vector<2x128xf32>
    %cst_100 = arith.constant dense<0.000000e+00> : vector<2x128xf32>
    %294 = tpu.matmul %269, %0, %cst_100 {dimension_numbers = #tpu.dot_dimension_numbers<[1], [0], [0], [1], [0, 0, 1, 1], [], []>} : vector<2x32xf32>, vector<32x128xf32>, vector<2x128xf32> -> vector<2x128xf32>
    %295 = arith.addf %293, %294 : vector<2x128xf32>
    %296 = arith.addf %295, %9 : vector<2x128xf32>
    %297 = arith.negf %296 : vector<2x128xf32>
    %298 = math.exp %297 : vector<2x128xf32>
    %cst_101 = arith.constant 1.000000e+00 : f32
    %299 = vector.broadcast %cst_101 : f32 to vector<2x128xf32>
    %300 = arith.addf %299, %298 : vector<2x128xf32>
    %301 = arith.divf %299, %300 : vector<2x128xf32>
    %302 = vector.extract_strided_slice %301 {offsets = [0, 0], sizes = [2, 32], strides = [1, 1]} : vector<2x128xf32> to vector<2x32xf32>
    %303 = vector.extract_strided_slice %301 {offsets = [0, 32], sizes = [2, 32], strides = [1, 1]} : vector<2x128xf32> to vector<2x32xf32>
    %304 = vector.extract_strided_slice %301 {offsets = [0, 64], sizes = [2, 32], strides = [1, 1]} : vector<2x128xf32> to vector<2x32xf32>
    %cst_102 = arith.constant 2.000000e+00 : f32
    %305 = vector.broadcast %cst_102 : f32 to vector<2x32xf32>
    %306 = arith.mulf %305, %304 : vector<2x32xf32>
    %cst_103 = arith.constant 1.000000e+00 : f32
    %307 = vector.broadcast %cst_103 : f32 to vector<2x32xf32>
    %308 = arith.subf %306, %307 : vector<2x32xf32>
    %309 = vector.extract_strided_slice %301 {offsets = [0, 96], sizes = [2, 32], strides = [1, 1]} : vector<2x128xf32> to vector<2x32xf32>
    %310 = arith.mulf %303, %267 : vector<2x32xf32>
    %311 = arith.mulf %302, %308 : vector<2x32xf32>
    %312 = arith.addf %310, %311 : vector<2x32xf32>
    %313 = math.tanh %312 : vector<2x32xf32>
    %314 = arith.mulf %309, %313 : vector<2x32xf32>
    %cst_104 = arith.constant dense<0.000000e+00> : vector<2x64xf32>
    %315 = tpu.matmul %314, %1, %cst_104 {dimension_numbers = #tpu.dot_dimension_numbers<[1], [0], [0], [1], [0, 0, 1, 1], [], []>} : vector<2x32xf32>, vector<32x64xf32>, vector<2x64xf32> -> vector<2x64xf32>
    %316 = arith.addf %315, %12 : vector<2x64xf32>
    %cst_105 = arith.constant 0.000000e+00 : f32
    %317 = vector.broadcast %cst_105 : f32 to vector<2x64xf32>
    %318 = arith.maximumf %316, %317 : vector<2x64xf32>
    %cst_106 = arith.constant dense<0.000000e+00> : vector<2x64xf32>
    %319 = tpu.matmul %318, %2, %cst_106 {dimension_numbers = #tpu.dot_dimension_numbers<[1], [0], [0], [1], [0, 0, 1, 1], [], []>} : vector<2x64xf32>, vector<64x64xf32>, vector<2x64xf32> -> vector<2x64xf32>
    %320 = arith.addf %319, %15 : vector<2x64xf32>
    %cst_107 = arith.constant 0.000000e+00 : f32
    %321 = vector.broadcast %cst_107 : f32 to vector<2x64xf32>
    %322 = arith.maximumf %320, %321 : vector<2x64xf32>
    %cst_108 = arith.constant dense<0.000000e+00> : vector<2x4xf32>
    %323 = tpu.matmul %322, %3, %cst_108 {dimension_numbers = #tpu.dot_dimension_numbers<[1], [0], [0], [1], [0, 0, 1, 1], [], []>} : vector<2x64xf32>, vector<64x4xf32>, vector<2x4xf32> -> vector<2x4xf32>
    %324 = arith.addf %323, %18 : vector<2x4xf32>
    %cst_109 = arith.constant dense<0xFF800000> : vector<2xf32>
    %325 = vector.multi_reduction <maximumf>, %324, %cst_109 [1] : vector<2x4xf32> to vector<2xf32>
    %326 = vector.shape_cast %325 : vector<2xf32> to vector<2x1xf32>
    %327 = vector.broadcast %326 : vector<2x1xf32> to vector<2x4xf32>
    %328 = arith.subf %324, %327 : vector<2x4xf32>
    %329 = math.exp %328 : vector<2x4xf32>
    %cst_110 = arith.constant dense<0.000000e+00> : vector<2xf32>
    %330 = vector.multi_reduction <add>, %329, %cst_110 [1] : vector<2x4xf32> to vector<2xf32>
    %331 = vector.shape_cast %330 : vector<2xf32> to vector<2x1xf32>
    %332 = tpu.reciprocal %331 : vector<2x1xf32> -> vector<2x1xf32>
    %333 = vector.broadcast %332 : vector<2x1xf32> to vector<2x4xf32>
    %334 = arith.mulf %329, %333 : vector<2x4xf32>
    %c0_111 = arith.constant 0 : index
    %c24 = arith.constant 24 : index
    %335 = vector.load %arg11[%c0_111, %c24] : memref<2x32xf32, #tpu.memory_space<vmem>>, vector<2x4xf32>
    tpu.vector_store %arg11[%c0_111, %c24], %334 {strides = array<i32>} : memref<2x32xf32, #tpu.memory_space<vmem>>, vector<2x4xf32>,
    %c0_112 = arith.constant 0 : index
    %c7 = arith.constant 7 : index
    %336 = vector.load %arg1[%c0_112, %c7] : memref<2x8xf32, #tpu.memory_space<vmem>>, vector<2x1xf32>
    %337 = vector.broadcast %336 : vector<2x1xf32> to vector<2x128xf32>
    %338 = arith.mulf %337, %6 : vector<2x128xf32>
    %cst_113 = arith.constant dense<0.000000e+00> : vector<2x128xf32>
    %339 = tpu.matmul %314, %0, %cst_113 {dimension_numbers = #tpu.dot_dimension_numbers<[1], [0], [0], [1], [0, 0, 1, 1], [], []>} : vector<2x32xf32>, vector<32x128xf32>, vector<2x128xf32> -> vector<2x128xf32>
    %340 = arith.addf %338, %339 : vector<2x128xf32>
    %341 = arith.addf %340, %9 : vector<2x128xf32>
    %342 = arith.negf %341 : vector<2x128xf32>
    %343 = math.exp %342 : vector<2x128xf32>
    %cst_114 = arith.constant 1.000000e+00 : f32
    %344 = vector.broadcast %cst_114 : f32 to vector<2x128xf32>
    %345 = arith.addf %344, %343 : vector<2x128xf32>
    %346 = arith.divf %344, %345 : vector<2x128xf32>
    %347 = vector.extract_strided_slice %346 {offsets = [0, 0], sizes = [2, 32], strides = [1, 1]} : vector<2x128xf32> to vector<2x32xf32>
    %348 = vector.extract_strided_slice %346 {offsets = [0, 32], sizes = [2, 32], strides = [1, 1]} : vector<2x128xf32> to vector<2x32xf32>
    %349 = vector.extract_strided_slice %346 {offsets = [0, 64], sizes = [2, 32], strides = [1, 1]} : vector<2x128xf32> to vector<2x32xf32>
    %cst_115 = arith.constant 2.000000e+00 : f32
    %350 = vector.broadcast %cst_115 : f32 to vector<2x32xf32>
    %351 = arith.mulf %350, %349 : vector<2x32xf32>
    %cst_116 = arith.constant 1.000000e+00 : f32
    %352 = vector.broadcast %cst_116 : f32 to vector<2x32xf32>
    %353 = arith.subf %351, %352 : vector<2x32xf32>
    %354 = vector.extract_strided_slice %346 {offsets = [0, 96], sizes = [2, 32], strides = [1, 1]} : vector<2x128xf32> to vector<2x32xf32>
    %355 = arith.mulf %348, %312 : vector<2x32xf32>
    %356 = arith.mulf %347, %353 : vector<2x32xf32>
    %357 = arith.addf %355, %356 : vector<2x32xf32>
    %358 = math.tanh %357 : vector<2x32xf32>
    %359 = arith.mulf %354, %358 : vector<2x32xf32>
    %cst_117 = arith.constant dense<0.000000e+00> : vector<2x64xf32>
    %360 = tpu.matmul %359, %1, %cst_117 {dimension_numbers = #tpu.dot_dimension_numbers<[1], [0], [0], [1], [0, 0, 1, 1], [], []>} : vector<2x32xf32>, vector<32x64xf32>, vector<2x64xf32> -> vector<2x64xf32>
    %361 = arith.addf %360, %12 : vector<2x64xf32>
    %cst_118 = arith.constant 0.000000e+00 : f32
    %362 = vector.broadcast %cst_118 : f32 to vector<2x64xf32>
    %363 = arith.maximumf %361, %362 : vector<2x64xf32>
    %cst_119 = arith.constant dense<0.000000e+00> : vector<2x64xf32>
    %364 = tpu.matmul %363, %2, %cst_119 {dimension_numbers = #tpu.dot_dimension_numbers<[1], [0], [0], [1], [0, 0, 1, 1], [], []>} : vector<2x64xf32>, vector<64x64xf32>, vector<2x64xf32> -> vector<2x64xf32>
    %365 = arith.addf %364, %15 : vector<2x64xf32>
    %cst_120 = arith.constant 0.000000e+00 : f32
    %366 = vector.broadcast %cst_120 : f32 to vector<2x64xf32>
    %367 = arith.maximumf %365, %366 : vector<2x64xf32>
    %cst_121 = arith.constant dense<0.000000e+00> : vector<2x4xf32>
    %368 = tpu.matmul %367, %3, %cst_121 {dimension_numbers = #tpu.dot_dimension_numbers<[1], [0], [0], [1], [0, 0, 1, 1], [], []>} : vector<2x64xf32>, vector<64x4xf32>, vector<2x4xf32> -> vector<2x4xf32>
    %369 = arith.addf %368, %18 : vector<2x4xf32>
    %cst_122 = arith.constant dense<0xFF800000> : vector<2xf32>
    %370 = vector.multi_reduction <maximumf>, %369, %cst_122 [1] : vector<2x4xf32> to vector<2xf32>
    %371 = vector.shape_cast %370 : vector<2xf32> to vector<2x1xf32>
    %372 = vector.broadcast %371 : vector<2x1xf32> to vector<2x4xf32>
    %373 = arith.subf %369, %372 : vector<2x4xf32>
    %374 = math.exp %373 : vector<2x4xf32>
    %cst_123 = arith.constant dense<0.000000e+00> : vector<2xf32>
    %375 = vector.multi_reduction <add>, %374, %cst_123 [1] : vector<2x4xf32> to vector<2xf32>
    %376 = vector.shape_cast %375 : vector<2xf32> to vector<2x1xf32>
    %377 = tpu.reciprocal %376 : vector<2x1xf32> -> vector<2x1xf32>
    %378 = vector.broadcast %377 : vector<2x1xf32> to vector<2x4xf32>
    %379 = arith.mulf %374, %378 : vector<2x4xf32>
    %c0_124 = arith.constant 0 : index
    %c28 = arith.constant 28 : index
    %380 = vector.load %arg11[%c0_124, %c28] : memref<2x32xf32, #tpu.memory_space<vmem>>, vector<2x4xf32>
    tpu.vector_store %arg11[%c0_124, %c28], %379 {strides = array<i32>} : memref<2x32xf32, #tpu.memory_space<vmem>>, vector<2x4xf32>,
    return
  }
  func.func @transform_0(%arg0: i32) -> (i32, i32) {
    %c0_i32 = arith.constant 0 : i32
    %c0_i32_0 = arith.constant 0 : i32
    return %arg0, %c0_i32 : i32, i32
  }
  func.func @transform_1(%arg0: i32) -> (i32, i32) {
    %c0_i32 = arith.constant 0 : i32
    %c0_i32_0 = arith.constant 0 : i32
    %c0_i32_1 = arith.constant 0 : i32
    return %c0_i32, %c0_i32_0 : i32, i32
  }
  func.func @transform_2(%arg0: i32) -> (i32, i32) {
    %c0_i32 = arith.constant 0 : i32
    %c0_i32_0 = arith.constant 0 : i32
    %c0_i32_1 = arith.constant 0 : i32
    return %c0_i32, %c0_i32_0 : i32, i32
  }
  func.func @transform_3(%arg0: i32) -> (i32, i32) {
    %c0_i32 = arith.constant 0 : i32
    %c0_i32_0 = arith.constant 0 : i32
    %c0_i32_1 = arith.constant 0 : i32
    return %c0_i32, %c0_i32_0 : i32, i32
  }
  func.func @transform_4(%arg0: i32) -> (i32, i32) {
    %c0_i32 = arith.constant 0 : i32
    %c0_i32_0 = arith.constant 0 : i32
    %c0_i32_1 = arith.constant 0 : i32
    return %c0_i32, %c0_i32_0 : i32, i32
  }
  func.func @transform_5(%arg0: i32) -> (i32, i32) {
    %c0_i32 = arith.constant 0 : i32
    %c0_i32_0 = arith.constant 0 : i32
    %c0_i32_1 = arith.constant 0 : i32
    return %c0_i32, %c0_i32_0 : i32, i32
  }
  func.func @transform_6(%arg0: i32) -> (i32, i32) {
    %c0_i32 = arith.constant 0 : i32
    %c0_i32_0 = arith.constant 0 : i32
    %c0_i32_1 = arith.constant 0 : i32
    return %c0_i32, %c0_i32_0 : i32, i32
  }
  func.func @transform_7(%arg0: i32) -> (i32, i32) {
    %c0_i32 = arith.constant 0 : i32
    %c0_i32_0 = arith.constant 0 : i32
    %c0_i32_1 = arith.constant 0 : i32
    return %c0_i32, %c0_i32_0 : i32, i32
  }
  func.func @transform_8(%arg0: i32) -> (i32, i32) {
    %c0_i32 = arith.constant 0 : i32
    %c0_i32_0 = arith.constant 0 : i32
    %c0_i32_1 = arith.constant 0 : i32
    return %c0_i32, %c0_i32_0 : i32, i32
  }
  func.func @transform_9(%arg0: i32) -> (i32, i32) {
    %c0_i32 = arith.constant 0 : i32
    %c0_i32_0 = arith.constant 0 : i32
    %c0_i32_1 = arith.constant 0 : i32
    return %c0_i32, %c0_i32_0 : i32, i32
  }
  func.func @transform_10(%arg0: i32) -> (i32, i32) {
    %c0_i32 = arith.constant 0 : i32
    %c0_i32_0 = arith.constant 0 : i32
    return %arg0, %c0_i32 : i32, i32
  }
}

</mosaic_0001>

<llo_original>
// kernel: tpu_custom_call.1
$region0: #{tpu_custom_call.1}
  #allocation0 [shape = 'u32[]', space=smem, size = 0x4, offset = 0x4, fixed_abs, tag = 'smem constant byte address 0x4 - core index']
  #allocation1 [shape = 'u32[144,128]{1,0:T(1,128)}', space=vmem, size = 0x12000, scoped, tag = 'internal scratch']
  %s0 = inlined_call_operand.vmem [shape: f32[2,8], index: 0, kind: input, shape index: {}]
  %s1 = inlined_call_operand.vmem [shape: f32[1,128], index: 1, kind: input, shape index: {}]
  %s2 = inlined_call_operand.hbm [shape: f32[32,128], index: 2, kind: input, shape index: {}]
  %s3 = inlined_call_operand.vmem [shape: f32[1,128], index: 3, kind: input, shape index: {}]
  %s4 = inlined_call_operand.hbm [shape: f32[32,64], index: 4, kind: input, shape index: {}]
  %s5 = inlined_call_operand.vmem [shape: f32[1,64], index: 5, kind: input, shape index: {}]
  %s6 = inlined_call_operand.vmem [shape: f32[64,64], index: 6, kind: input, shape index: {}]
  %s7 = inlined_call_operand.vmem [shape: f32[1,64], index: 7, kind: input, shape index: {}]
  %s8 = inlined_call_operand.vmem [shape: f32[64,4], index: 8, kind: input, shape index: {}]
  %s9 = inlined_call_operand.vmem [shape: f32[1,4], index: 9, kind: input, shape index: {}]
  %s10 = inlined_call_operand.hbm [shape: f32[2,32], index: 10, kind: output, shape index: {}]
  %s11 = sld [smem:[#allocation0]]
  $region58: #{tpu_custom_call.1} parent=0
    _
  %s13 = ssub.s32 1, %s11
  %s14 = scalar_select 0, %s13, %s11
  $region1: #{tpu_custom_call.1} parent=0
    #allocation2 [shape = 'u8[16384]{0}', space=vmem, size = 0x4000, scoped, tag = 'input window, operand 2, single buffered']
    #allocation3 [shape = 's32[1]{0}', space=sflag, size = 0x4, scoped, tag = 'scoped memory for tpu_custom_call.1']
    #allocation4 [shape = 's32[1]{0}', space=sflag, size = 0x4, scoped, tag = 'scoped memory for tpu_custom_call.1']
    #allocation5 [shape = 'u8[16384]{0}', space=vmem, size = 0x4000, scoped, tag = 'input window, operand 4, single buffered']
    #allocation6 [shape = 's32[1]{0}', space=sflag, size = 0x4, scoped, tag = 'scoped memory for tpu_custom_call.1']
    #allocation7 [shape = 'u8[1024]{0}', space=vmem, size = 0x400, scoped, tag = 'output window, operand 0, single buffered']
    %15 = vsyncpa [#allocation3], 0
    %16 = vsyncpa [#allocation6], 0
    %17 = vsyncpa [#allocation4], 0
    // Predicated region
    $region2: #{tpu_custom_call.1} parent=1 // pred_check
      _
    $region3: #{tpu_custom_call.1} parent=1 // pred_check_branch
      %19 = sbr.rel (0) target = $region5
    $region4: #{tpu_custom_call.1} parent=1 // pred_region
      _
    $region5: #{tpu_custom_call.1} parent=1 // pred_fallthru
      _
    // Predicated region
    $region6: #{tpu_custom_call.1} parent=1 // pred_check
      _
    $region7: #{tpu_custom_call.1} parent=1 // pred_check_branch
      %21 = sbr.rel (0) target = $region9
    $region8: #{tpu_custom_call.1} parent=1 // pred_region
      _
    $region9: #{tpu_custom_call.1} parent=1 // pred_fallthru
      _
    // Predicated region
    $region10: #{tpu_custom_call.1} parent=1 // pred_check
      _
    $region11: #{tpu_custom_call.1} parent=1 // pred_check_branch
      %23 = sbr.rel (0) target = $region13
    $region12: #{tpu_custom_call.1} parent=1 // pred_region
      %s25 = ssub.s32 512, 512
      %26 = vsyncadd [#allocation3], %s25
      %s27 = sshll.u32 [#allocation2], 4
      %s28 = int_to_ptr.vmem [resolvable:$true] %s27
      %33 = dma.hbm_to_vmem [thread:$0]  %s2, 512, %s28, [#allocation3], 128, 128, 8
    $region13: #{tpu_custom_call.1} parent=1 // pred_fallthru
      _
    // Predicated region
    $region14: #{tpu_custom_call.1} parent=1 // pred_check
      _
    $region15: #{tpu_custom_call.1} parent=1 // pred_check_branch
      %35 = sbr.rel (0) target = $region17
    $region16: #{tpu_custom_call.1} parent=1 // pred_region
      _
    $region17: #{tpu_custom_call.1} parent=1 // pred_fallthru
      _
    // Predicated region
    $region18: #{tpu_custom_call.1} parent=1 // pred_check
      _
    $region19: #{tpu_custom_call.1} parent=1 // pred_check_branch
      %37 = sbr.rel (0) target = $region21
    $region20: #{tpu_custom_call.1} parent=1 // pred_region
      %s39 = ssub.s32 512, 512
      %40 = vsyncadd [#allocation6], %s39
      %s41 = sshll.u32 [#allocation5], 4
      %s42 = int_to_ptr.vmem [resolvable:$true] %s41
      %47 = dma.hbm_to_vmem [thread:$0]  %s4, 512, %s42, [#allocation6], 128, 128, 8
    $region21: #{tpu_custom_call.1} parent=1 // pred_fallthru
      _
    // Predicated region
    $region22: #{tpu_custom_call.1} parent=1 // pred_check
      _
    $region23: #{tpu_custom_call.1} parent=1 // pred_check_branch
      %49 = sbr.rel (0) target = $region25
    $region24: #{tpu_custom_call.1} parent=1 // pred_region
      _
    $region25: #{tpu_custom_call.1} parent=1 // pred_fallthru
      _
    // Predicated region
    $region26: #{tpu_custom_call.1} parent=1 // pred_check
      _
    $region27: #{tpu_custom_call.1} parent=1 // pred_check_branch
      %51 = sbr.rel (0) target = $region29
    $region28: #{tpu_custom_call.1} parent=1 // pred_region
      _
    $region29: #{tpu_custom_call.1} parent=1 // pred_fallthru
      _
    // Predicated region
    $region30: #{tpu_custom_call.1} parent=1 // pred_check
      _
    $region31: #{tpu_custom_call.1} parent=1 // pred_check_branch
      %53 = sbr.rel (0) target = $region33
    $region32: #{tpu_custom_call.1} parent=1 // pred_region
      _
    $region33: #{tpu_custom_call.1} parent=1 // pred_fallthru
      _
    // Predicated region
    $region34: #{tpu_custom_call.1} parent=1 // pred_check
      _
    $region35: #{tpu_custom_call.1} parent=1 // pred_check_branch
      %55 = sbr.rel (0) target = $region37
    $region36: #{tpu_custom_call.1} parent=1 // pred_region
      _
    $region37: #{tpu_custom_call.1} parent=1 // pred_fallthru
      _
    // Predicated region
    $region38: #{tpu_custom_call.1} parent=1 // pred_check
      _
    $region39: #{tpu_custom_call.1} parent=1 // pred_check_branch
      %57 = sbr.rel (0) target = $region41
    $region40: #{tpu_custom_call.1} parent=1 // pred_region
      _
    $region41: #{tpu_custom_call.1} parent=1 // pred_fallthru
      _
    // Predicated region
    $region42: #{tpu_custom_call.1} parent=1 // pred_check
      _
    $region43: #{tpu_custom_call.1} parent=1 // pred_check_branch
      %59 = sbr.rel (0) target = $region45
    $region44: #{tpu_custom_call.1} parent=1 // pred_region
      %60 = dma.done [#allocation3], 512
    $region45: #{tpu_custom_call.1} parent=1 // pred_fallthru
      _
    // Predicated region
    $region46: #{tpu_custom_call.1} parent=1 // pred_check
      _
    $region47: #{tpu_custom_call.1} parent=1 // pred_check_branch
      %62 = sbr.rel (0) target = $region49
    $region48: #{tpu_custom_call.1} parent=1 // pred_region
      %63 = dma.done [#allocation6], 512
    $region49: #{tpu_custom_call.1} parent=1 // pred_fallthru
      _
    %v64 = vld [vmem:[#allocation2] sm:$0xff]
    %v65 = vld [vmem:[#allocation2 + $0x8] sm:$0xff]
    %v66 = vld [vmem:[#allocation2 + $0x10] sm:$0xff]
    %v67 = vld [vmem:[#allocation2 + $0x18] sm:$0xff]
    %v68 = vld [vmem:[#allocation5] sm:$0xff]
    %v69 = vld [vmem:[#allocation5 + $0x8] sm:$0xff]
    %v70 = vld [vmem:[#allocation5 + $0x10] sm:$0xff]
    %v71 = vld [vmem:[#allocation5 + $0x18] sm:$0xff]
    %v72 = vld [vmem:[%s6] sm:$0xff]
    %v73 = vld [vmem:[%s6 + $0x8] sm:$0xff]
    %v74 = vld [vmem:[%s6 + $0x10] sm:$0xff]
    %v75 = vld [vmem:[%s6 + $0x18] sm:$0xff]
    %v76 = vld [vmem:[%s6 + $0x20] sm:$0xff]
    %v77 = vld [vmem:[%s6 + $0x28] sm:$0xff]
    %v78 = vld [vmem:[%s6 + $0x30] sm:$0xff]
    %v79 = vld [vmem:[%s6 + $0x38] sm:$0xff]
    %v80 = vld [vmem:[%s8] sm:$0xff]
    %v81 = vld [vmem:[%s8 + $0x8] sm:$0xff]
    %v82 = vld [vmem:[%s8 + $0x10] sm:$0xff]
    %v83 = vld [vmem:[%s8 + $0x18] sm:$0xff]
    %v84 = vld [vmem:[%s8 + $0x20] sm:$0xff]
    %v85 = vld [vmem:[%s8 + $0x28] sm:$0xff]
    %v86 = vld [vmem:[%s8 + $0x30] sm:$0xff]
    %v87 = vld [vmem:[%s8 + $0x38] sm:$0xff]
    %v88 = vld [vmem:[%s1] sm:$0x1]
    %v90 = vlaneseq
    %v91 = vshrl.u32 %v90, 7
    %v92 = vsub.s32 0, %v91
    %v93 = vrot.slane %v88, %v92
    %v95 = vld [vmem:[%s3] sm:$0x1]
    %v97 = vlaneseq
    %v98 = vshrl.u32 %v97, 7
    %v99 = vsub.s32 0, %v98
    %v100 = vrot.slane %v95, %v99
    %v102 = vld [vmem:[%s5] sm:$0x1]
    %v104 = vlaneseq
    %v105 = vshrl.u32 %v104, 7
    %v106 = vsub.s32 0, %v105
    %v107 = vrot.slane %v102, %v106
    %v109 = vld [vmem:[%s7] sm:$0x1]
    %v111 = vlaneseq
    %v112 = vshrl.u32 %v111, 7
    %v113 = vsub.s32 0, %v112
    %v114 = vrot.slane %v109, %v113
    %v116 = vld [vmem:[%s9] sm:$0x1]
    %v118 = vlaneseq
    %v119 = vshrl.u32 %v118, 7
    %v120 = vsub.s32 0, %v119
    %v121 = vrot.slane %v116, %v120
    %v123 = vld [vmem:[%s0] sm:$0x3]
    %125 = vset.pattern.permute.xlu0 0
    %126 = vperm.xlu0 %125, %v123
    %v127 = vpop.permute.xlu0 %126
    %v129 = vmul.f32 %v127, %v93
    %vm130 = vcmask 261120
    %v132 = vsel %vm130, 0.0, 0
    %134 = vmatprep.subr.mxu0 0.0
    %135 = vmatpush1.msra.mxu0 0.0
    %136 = vmatprep.subr.mxu0 0.0
    %137 = vmatpush1.msra.mxu0 0.0
    %138 = vmatprep.subr.mxu0 0.0
    %139 = vmatpush1.msra.mxu0 0.0
    %140 = vmatprep.subr.mxu0 0.0
    %141 = vmatpush1.msra.mxu0 0.0
    %142 = vmatprep.subr.mxu0 0.0
    %143 = vmatpush1.msra.mxu0 0.0
    %144 = vmatprep.subr.mxu0 0.0
    %145 = vmatpush1.msra.mxu0 0.0
    %146 = vmatprep.subr.mxu0 0.0
    %147 = vmatpush1.msra.mxu0 0.0
    %148 = vmatprep.subr.mxu0 0.0
    %149 = vmatpush1.msra.mxu0 0.0
    %150 = vmatprep.subr.mxu0 0.0
    %151 = vmatpush1.msra.mxu0 0.0
    %152 = vmatprep.subr.mxu0 0.0
    %153 = vmatpush1.msra.mxu0 0.0
    %154 = vmatprep.subr.mxu0 0.0
    %155 = vmatpush1.msra.mxu0 0.0
    %156 = vmatprep.subr.mxu0 0.0
    %157 = vmatpush1.msra.mxu0 0.0
    %158 = vmatprep.subr.mxu0 0.0
    %159 = vmatpush1.msra.mxu0 %v67
    %160 = vmatprep.subr.mxu0 0.0
    %161 = vmatpush1.msra.mxu0 %v66
    %162 = vmatprep.subr.mxu0 0.0
    %163 = vmatpush1.msra.mxu0 %v65
    %164 = vmatprep.subr.mxu0 0.0
    %165 = vmatpush1.msra.mxu0 %v64
    %166 = vmatprep.subr.mxu0 0.0
    %167 = vmatpush2.msra.mxu0 0.0
    %168 = vmatprep.subr.mxu0 0.0
    %169 = vmatpush2.msra.mxu0 0.0
    %170 = vmatprep.subr.mxu0 0.0
    %171 = vmatpush2.msra.mxu0 0.0
    %172 = vmatprep.subr.mxu0 0.0
    %173 = vmatpush2.msra.mxu0 0.0
    %174 = vmatprep.subr.mxu0 0.0
    %175 = vmatpush2.msra.mxu0 0.0
    %176 = vmatprep.subr.mxu0 0.0
    %177 = vmatpush2.msra.mxu0 0.0
    %178 = vmatprep.subr.mxu0 0.0
    %179 = vmatpush2.msra.mxu0 0.0
    %180 = vmatprep.subr.mxu0 0.0
    %181 = vmatpush2.msra.mxu0 0.0
    %182 = vmatprep.subr.mxu0 0.0
    %183 = vmatpush2.msra.mxu0 0.0
    %184 = vmatprep.subr.mxu0 0.0
    %185 = vmatpush2.msra.mxu0 0.0
    %186 = vmatprep.subr.mxu0 0.0
    %187 = vmatpush2.msra.mxu0 0.0
    %188 = vmatprep.subr.mxu0 0.0
    %189 = vmatpush2.msra.mxu0 0.0
    %190 = vmatprep.subr.mxu0 0.0
    %191 = vmatpush2.msra.mxu0 0.0
    %192 = vmatprep.subr.mxu0 0.0
    %193 = vmatpush2.msra.mxu0 0.0
    %194 = vmatprep.subr.mxu0 0.0
    %195 = vmatpush2.msra.mxu0 0.0
    %196 = vmatprep.subr.mxu0 0.0
    %197 = vmatpush2.msra.mxu0 0.0
    %198 = vmatprep.mubr.f32.mxu0 0.0
    %199 = vmatmul.mubr.f32.gmra.mxu0 %v132
    %v200 = vpop.f32.mrf.mxu0
    %v201 = vadd.f32 0.0, %v200
    %v202 = vpop.f32.mrf.mxu0
    %203 = vdwg.mxu0
    %v204 = vadd.f32 %v129, %v201
    %v205 = vadd.f32 %v204, %v100
    %v206 = vxor.u32 %v205, 2147483648
    %v207 = vmul.f32 %v206, 1.442695
    %v208 = vpow.pop %v207
    %v209 = vadd.f32 %v208, 1.0
    %v210 = vrcp.pop %v209
    %v211 = vmul.f32 1.0, %v210
    %v212 = vmul.f32 %v211, 2.0
    %v213 = vsub.f32 %v212, 1.0
    %v214 = vmul.f32 %v211, 0.0
    %216 = vrot.lane.b32.xlu0 %v213, 64
    %v217 = vpop.permute.xlu0 %216
    %v219 = vmul.f32 %v211, %v217
    %221 = vrot.lane.b32.xlu0 %v219, 32
    %v222 = vpop.permute.xlu0 %221
    %v224 = vadd.f32 %v214, %v222
    %v225 = vtanh.pop %v224
    %227 = vrot.lane.b32.xlu0 %v225, 64
    %v228 = vpop.permute.xlu0 %227
    %v230 = vmul.f32 %v211, %v228
    %232 = vrot.lane.b32.xlu0 %v230, 32
    %v233 = vpop.permute.xlu0 %232
    %v234 = vsel %vm130, %v233, 0
    %236 = vmatprep.subr.mxu0 0.0
    %237 = vmatpush1.msra.mxu0 0.0
    %238 = vmatprep.subr.mxu0 0.0
    %239 = vmatpush1.msra.mxu0 0.0
    %240 = vmatprep.subr.mxu0 0.0
    %241 = vmatpush1.msra.mxu0 0.0
    %242 = vmatprep.subr.mxu0 0.0
    %243 = vmatpush1.msra.mxu0 0.0
    %244 = vmatprep.subr.mxu0 0.0
    %245 = vmatpush1.msra.mxu0 0.0
    %246 = vmatprep.subr.mxu0 0.0
    %247 = vmatpush1.msra.mxu0 0.0
    %248 = vmatprep.subr.mxu0 0.0
    %249 = vmatpush1.msra.mxu0 0.0
    %250 = vmatprep.subr.mxu0 0.0
    %251 = vmatpush1.msra.mxu0 0.0
    %252 = vmatprep.subr.mxu0 0.0
    %253 = vmatpush1.msra.mxu0 0.0
    %254 = vmatprep.subr.mxu0 0.0
    %255 = vmatpush1.msra.mxu0 0.0
    %256 = vmatprep.subr.mxu0 0.0
    %257 = vmatpush1.msra.mxu0 0.0
    %258 = vmatprep.subr.mxu0 0.0
    %259 = vmatpush1.msra.mxu0 0.0
    %260 = vmatprep.subr.mxu0 0.0
    %261 = vmatpush1.msra.mxu0 %v71
    %262 = vmatprep.subr.mxu0 0.0
    %263 = vmatpush1.msra.mxu0 %v70
    %264 = vmatprep.subr.mxu0 0.0
    %265 = vmatpush1.msra.mxu0 %v69
    %266 = vmatprep.subr.mxu0 0.0
    %267 = vmatpush1.msra.mxu0 %v68
    %268 = vmatprep.subr.mxu0 0.0
    %269 = vmatpush2.msra.mxu0 0.0
    %270 = vmatprep.subr.mxu0 0.0
    %271 = vmatpush2.msra.mxu0 0.0
    %272 = vmatprep.subr.mxu0 0.0
    %273 = vmatpush2.msra.mxu0 0.0
    %274 = vmatprep.subr.mxu0 0.0
    %275 = vmatpush2.msra.mxu0 0.0
    %276 = vmatprep.subr.mxu0 0.0
    %277 = vmatpush2.msra.mxu0 0.0
    %278 = vmatprep.subr.mxu0 0.0
    %279 = vmatpush2.msra.mxu0 0.0
    %280 = vmatprep.subr.mxu0 0.0
    %281 = vmatpush2.msra.mxu0 0.0
    %282 = vmatprep.subr.mxu0 0.0
    %283 = vmatpush2.msra.mxu0 0.0
    %284 = vmatprep.subr.mxu0 0.0
    %285 = vmatpush2.msra.mxu0 0.0
    %286 = vmatprep.subr.mxu0 0.0
    %287 = vmatpush2.msra.mxu0 0.0
    %288 = vmatprep.subr.mxu0 0.0
    %289 = vmatpush2.msra.mxu0 0.0
    %290 = vmatprep.subr.mxu0 0.0
    %291 = vmatpush2.msra.mxu0 0.0
    %292 = vmatprep.subr.mxu0 0.0
    %293 = vmatpush2.msra.mxu0 0.0
    %294 = vmatprep.subr.mxu0 0.0
    %295 = vmatpush2.msra.mxu0 0.0
    %296 = vmatprep.subr.mxu0 0.0
    %297 = vmatpush2.msra.mxu0 0.0
    %298 = vmatprep.subr.mxu0 0.0
    %299 = vmatpush2.msra.mxu0 0.0
    %300 = vmatprep.mubr.f32.mxu0 0.0
    %301 = vmatmul.mubr.f32.gmra.mxu0 %v234
    %v302 = vpop.f32.mrf.mxu0
    %v303 = vadd.f32 %v107, %v302
    %v304 = vpop.f32.mrf.mxu0
    %305 = vdwg.mxu0
    %v306 = vmax.f32 %v303, 0.0
    %vm307 = vcmask 523264
    %v309 = vsel %vm307, %v306, 0
    %311 = vmatprep.subr.mxu0 0.0
    %312 = vmatpush1.msra.mxu0 0.0
    %313 = vmatprep.subr.mxu0 0.0
    %314 = vmatpush1.msra.mxu0 0.0
    %315 = vmatprep.subr.mxu0 0.0
    %316 = vmatpush1.msra.mxu0 0.0
    %317 = vmatprep.subr.mxu0 0.0
    %318 = vmatpush1.msra.mxu0 0.0
    %319 = vmatprep.subr.mxu0 0.0
    %320 = vmatpush1.msra.mxu0 0.0
    %321 = vmatprep.subr.mxu0 0.0
    %322 = vmatpush1.msra.mxu0 0.0
    %323 = vmatprep.subr.mxu0 0.0
    %324 = vmatpush1.msra.mxu0 0.0
    %325 = vmatprep.subr.mxu0 0.0
    %326 = vmatpush1.msra.mxu0 0.0
    %327 = vmatprep.subr.mxu0 0.0
    %328 = vmatpush1.msra.mxu0 %v79
    %329 = vmatprep.subr.mxu0 0.0
    %330 = vmatpush1.msra.mxu0 %v78
    %331 = vmatprep.subr.mxu0 0.0
    %332 = vmatpush1.msra.mxu0 %v77
    %333 = vmatprep.subr.mxu0 0.0
    %334 = vmatpush1.msra.mxu0 %v76
    %335 = vmatprep.subr.mxu0 0.0
    %336 = vmatpush1.msra.mxu0 %v75
    %337 = vmatprep.subr.mxu0 0.0
    %338 = vmatpush1.msra.mxu0 %v74
    %339 = vmatprep.subr.mxu0 0.0
    %340 = vmatpush1.msra.mxu0 %v73
    %341 = vmatprep.subr.mxu0 0.0
    %342 = vmatpush1.msra.mxu0 %v72
    %343 = vmatprep.subr.mxu0 0.0
    %344 = vmatpush2.msra.mxu0 0.0
    %345 = vmatprep.subr.mxu0 0.0
    %346 = vmatpush2.msra.mxu0 0.0
    %347 = vmatprep.subr.mxu0 0.0
    %348 = vmatpush2.msra.mxu0 0.0
    %349 = vmatprep.subr.mxu0 0.0
    %350 = vmatpush2.msra.mxu0 0.0
    %351 = vmatprep.subr.mxu0 0.0
    %352 = vmatpush2.msra.mxu0 0.0
    %353 = vmatprep.subr.mxu0 0.0
    %354 = vmatpush2.msra.mxu0 0.0
    %355 = vmatprep.subr.mxu0 0.0
    %356 = vmatpush2.msra.mxu0 0.0
    %357 = vmatprep.subr.mxu0 0.0
    %358 = vmatpush2.msra.mxu0 0.0
    %359 = vmatprep.subr.mxu0 0.0
    %360 = vmatpush2.msra.mxu0 0.0
    %361 = vmatprep.subr.mxu0 0.0
    %362 = vmatpush2.msra.mxu0 0.0
    %363 = vmatprep.subr.mxu0 0.0
    %364 = vmatpush2.msra.mxu0 0.0
    %365 = vmatprep.subr.mxu0 0.0
    %366 = vmatpush2.msra.mxu0 0.0
    %367 = vmatprep.subr.mxu0 0.0
    %368 = vmatpush2.msra.mxu0 0.0
    %369 = vmatprep.subr.mxu0 0.0
    %370 = vmatpush2.msra.mxu0 0.0
    %371 = vmatprep.subr.mxu0 0.0
    %372 = vmatpush2.msra.mxu0 0.0
    %373 = vmatprep.subr.mxu0 0.0
    %374 = vmatpush2.msra.mxu0 0.0
    %375 = vmatprep.mubr.f32.mxu0 0.0
    %376 = vmatmul.mubr.f32.gmra.mxu0 %v309
    %v377 = vpop.f32.mrf.mxu0
    %v378 = vadd.f32 %v114, %v377
    %v379 = vpop.f32.mrf.mxu0
    %380 = vdwg.mxu0
    %v381 = vmax.f32 %v378, 0.0
    %v383 = vsel %vm307, %v381, 0
    %385 = vmatprep.subr.mxu0 0.0
    %386 = vmatpush1.msra.mxu0 0.0
    %387 = vmatprep.subr.mxu0 0.0
    %388 = vmatpush1.msra.mxu0 0.0
    %389 = vmatprep.subr.mxu0 0.0
    %390 = vmatpush1.msra.mxu0 0.0
    %391 = vmatprep.subr.mxu0 0.0
    %392 = vmatpush1.msra.mxu0 0.0
    %393 = vmatprep.subr.mxu0 0.0
    %394 = vmatpush1.msra.mxu0 0.0
    %395 = vmatprep.subr.mxu0 0.0
    %396 = vmatpush1.msra.mxu0 0.0
    %397 = vmatprep.subr.mxu0 0.0
    %398 = vmatpush1.msra.mxu0 0.0
    %399 = vmatprep.subr.mxu0 0.0
    %400 = vmatpush1.msra.mxu0 0.0
    %401 = vmatprep.subr.mxu0 0.0
    %402 = vmatpush1.msra.mxu0 %v87
    %403 = vmatprep.subr.mxu0 0.0
    %404 = vmatpush1.msra.mxu0 %v86
    %405 = vmatprep.subr.mxu0 0.0
    %406 = vmatpush1.msra.mxu0 %v85
    %407 = vmatprep.subr.mxu0 0.0
    %408 = vmatpush1.msra.mxu0 %v84
    %409 = vmatprep.subr.mxu0 0.0
    %410 = vmatpush1.msra.mxu0 %v83
    %411 = vmatprep.subr.mxu0 0.0
    %412 = vmatpush1.msra.mxu0 %v82
    %413 = vmatprep.subr.mxu0 0.0
    %414 = vmatpush1.msra.mxu0 %v81
    %415 = vmatprep.subr.mxu0 0.0
    %416 = vmatpush1.msra.mxu0 %v80
    %417 = vmatprep.subr.mxu0 0.0
    %418 = vmatpush2.msra.mxu0 0.0
    %419 = vmatprep.subr.mxu0 0.0
    %420 = vmatpush2.msra.mxu0 0.0
    %421 = vmatprep.subr.mxu0 0.0
    %422 = vmatpush2.msra.mxu0 0.0
    %423 = vmatprep.subr.mxu0 0.0
    %424 = vmatpush2.msra.mxu0 0.0
    %425 = vmatprep.subr.mxu0 0.0
    %426 = vmatpush2.msra.mxu0 0.0
    %427 = vmatprep.subr.mxu0 0.0
    %428 = vmatpush2.msra.mxu0 0.0
    %429 = vmatprep.subr.mxu0 0.0
    %430 = vmatpush2.msra.mxu0 0.0
    %431 = vmatprep.subr.mxu0 0.0
    %432 = vmatpush2.msra.mxu0 0.0
    %433 = vmatprep.subr.mxu0 0.0
    %434 = vmatpush2.msra.mxu0 0.0
    %435 = vmatprep.subr.mxu0 0.0
    %436 = vmatpush2.msra.mxu0 0.0
    %437 = vmatprep.subr.mxu0 0.0
    %438 = vmatpush2.msra.mxu0 0.0
    %439 = vmatprep.subr.mxu0 0.0
    %440 = vmatpush2.msra.mxu0 0.0
    %441 = vmatprep.subr.mxu0 0.0
    %442 = vmatpush2.msra.mxu0 0.0
    %443 = vmatprep.subr.mxu0 0.0
    %444 = vmatpush2.msra.mxu0 0.0
    %445 = vmatprep.subr.mxu0 0.0
    %446 = vmatpush2.msra.mxu0 0.0
    %447 = vmatprep.subr.mxu0 0.0
    %448 = vmatpush2.msra.mxu0 0.0
    %449 = vmatprep.mubr.f32.mxu0 0.0
    %450 = vmatmul.mubr.f32.gmra.mxu0 %v383
    %v451 = vpop.f32.mrf.mxu0
    %v452 = vadd.f32 %v121, %v451
    %v453 = vpop.f32.mrf.mxu0
    %454 = vdwg.mxu0
    %vm455 = vcmask 25600
    %v456 = vsel %vm455, %v452, -inf
    %457 = vmax.xlane.f32.xlu0 %v456
    %v458 = vpop.xlane.xlu0 %457
    %v459 = vsub.f32 %v452, %v458
    %v460 = vmul.f32 %v459, 1.442695
    %v461 = vpow.pop %v460
    %v462 = vsel %vm455, %v461, 0.0
    %463 = vadd.xlane.f32.xlu0 %v462
    %v464 = vpop.xlane.xlu0 %463
    %v465 = vrcp.pop %v464
    %v466 = vmul.f32 %v461, %v465
    %467 = vst.msk [vmem:[#allocation7] sm:$0x3] %vm455, %v466
    %v468 = vld [vmem:[%s0] sm:$0x3]
    %470 = vset.pattern.permute.xlu0 1
    %471 = vperm.xlu0 %470, %v468
    %v472 = vpop.permute.xlu0 %471
    %v474 = vmul.f32 %v472, %v93
    %475 = vmatprep.subr.mxu0 0.0
    %476 = vmatpush1.msra.mxu0 0.0
    %477 = vmatprep.subr.mxu0 0.0
    %478 = vmatpush1.msra.mxu0 0.0
    %479 = vmatprep.subr.mxu0 0.0
    %480 = vmatpush1.msra.mxu0 0.0
    %481 = vmatprep.subr.mxu0 0.0
    %482 = vmatpush1.msra.mxu0 0.0
    %483 = vmatprep.subr.mxu0 0.0
    %484 = vmatpush1.msra.mxu0 0.0
    %485 = vmatprep.subr.mxu0 0.0
    %486 = vmatpush1.msra.mxu0 0.0
    %487 = vmatprep.subr.mxu0 0.0
    %488 = vmatpush1.msra.mxu0 0.0
    %489 = vmatprep.subr.mxu0 0.0
    %490 = vmatpush1.msra.mxu0 0.0
    %491 = vmatprep.subr.mxu0 0.0
    %492 = vmatpush1.msra.mxu0 0.0
    %493 = vmatprep.subr.mxu0 0.0
    %494 = vmatpush1.msra.mxu0 0.0
    %495 = vmatprep.subr.mxu0 0.0
    %496 = vmatpush1.msra.mxu0 0.0
    %497 = vmatprep.subr.mxu0 0.0
    %498 = vmatpush1.msra.mxu0 0.0
    %499 = vmatprep.subr.mxu0 0.0
    %500 = vmatpush1.msra.mxu0 %v67
    %501 = vmatprep.subr.mxu0 0.0
    %502 = vmatpush1.msra.mxu0 %v66
    %503 = vmatprep.subr.mxu0 0.0
    %504 = vmatpush1.msra.mxu0 %v65
    %505 = vmatprep.subr.mxu0 0.0
    %506 = vmatpush1.msra.mxu0 %v64
    %507 = vmatprep.subr.mxu0 0.0
    %508 = vmatpush2.msra.mxu0 0.0
    %509 = vmatprep.subr.mxu0 0.0
    %510 = vmatpush2.msra.mxu0 0.0
    %511 = vmatprep.subr.mxu0 0.0
    %512 = vmatpush2.msra.mxu0 0.0
    %513 = vmatprep.subr.mxu0 0.0
    %514 = vmatpush2.msra.mxu0 0.0
    %515 = vmatprep.subr.mxu0 0.0
    %516 = vmatpush2.msra.mxu0 0.0
    %517 = vmatprep.subr.mxu0 0.0
    %518 = vmatpush2.msra.mxu0 0.0
    %519 = vmatprep.subr.mxu0 0.0
    %520 = vmatpush2.msra.mxu0 0.0
    %521 = vmatprep.subr.mxu0 0.0
    %522 = vmatpush2.msra.mxu0 0.0
    %523 = vmatprep.subr.mxu0 0.0
    %524 = vmatpush2.msra.mxu0 0.0
    %525 = vmatprep.subr.mxu0 0.0
    %526 = vmatpush2.msra.mxu0 0.0
    %527 = vmatprep.subr.mxu0 0.0
    %528 = vmatpush2.msra.mxu0 0.0
    %529 = vmatprep.subr.mxu0 0.0
    %530 = vmatpush2.msra.mxu0 0.0
    %531 = vmatprep.subr.mxu0 0.0
    %532 = vmatpush2.msra.mxu0 0.0
    %533 = vmatprep.subr.mxu0 0.0
    %534 = vmatpush2.msra.mxu0 0.0
    %535 = vmatprep.subr.mxu0 0.0
    %536 = vmatpush2.msra.mxu0 0.0
    %537 = vmatprep.subr.mxu0 0.0
    %538 = vmatpush2.msra.mxu0 0.0
    %539 = vmatprep.mubr.f32.mxu0 0.0
    %540 = vmatmul.mubr.f32.gmra.mxu0 %v234
    %v541 = vpop.f32.mrf.mxu0
    %v542 = vadd.f32 0.0, %v541
    %v543 = vpop.f32.mrf.mxu0
    %544 = vdwg.mxu0
    %v545 = vadd.f32 %v474, %v542
    %v546 = vadd.f32 %v545, %v100
    %v547 = vxor.u32 %v546, 2147483648
    %v548 = vmul.f32 %v547, 1.442695
    %v549 = vpow.pop %v548
    %v550 = vadd.f32 %v549, 1.0
    %v551 = vrcp.pop %v550
    %v552 = vmul.f32 1.0, %v551
    %v553 = vmul.f32 %v552, 2.0
    %v554 = vsub.f32 %v553, 1.0
    %v555 = vmul.f32 %v552, %v224
    %557 = vrot.lane.b32.xlu0 %v554, 64
    %v558 = vpop.permute.xlu0 %557
    %v560 = vmul.f32 %v552, %v558
    %562 = vrot.lane.b32.xlu0 %v560, 32
    %v563 = vpop.permute.xlu0 %562
    %v565 = vadd.f32 %v555, %v563
    %v566 = vtanh.pop %v565
    %568 = vrot.lane.b32.xlu0 %v566, 64
    %v569 = vpop.permute.xlu0 %568
    %v571 = vmul.f32 %v552, %v569
    %573 = vrot.lane.b32.xlu0 %v571, 32
    %v574 = vpop.permute.xlu0 %573
    %v575 = vsel %vm130, %v574, 0
    %577 = vmatprep.subr.mxu0 0.0
    %578 = vmatpush1.msra.mxu0 0.0
    %579 = vmatprep.subr.mxu0 0.0
    %580 = vmatpush1.msra.mxu0 0.0
    %581 = vmatprep.subr.mxu0 0.0
    %582 = vmatpush1.msra.mxu0 0.0
    %583 = vmatprep.subr.mxu0 0.0
    %584 = vmatpush1.msra.mxu0 0.0
    %585 = vmatprep.subr.mxu0 0.0
    %586 = vmatpush1.msra.mxu0 0.0
    %587 = vmatprep.subr.mxu0 0.0
    %588 = vmatpush1.msra.mxu0 0.0
    %589 = vmatprep.subr.mxu0 0.0
    %590 = vmatpush1.msra.mxu0 0.0
    %591 = vmatprep.subr.mxu0 0.0
    %592 = vmatpush1.msra.mxu0 0.0
    %593 = vmatprep.subr.mxu0 0.0
    %594 = vmatpush1.msra.mxu0 0.0
    %595 = vmatprep.subr.mxu0 0.0
    %596 = vmatpush1.msra.mxu0 0.0
    %597 = vmatprep.subr.mxu0 0.0
    %598 = vmatpush1.msra.mxu0 0.0
    %599 = vmatprep.subr.mxu0 0.0
    %600 = vmatpush1.msra.mxu0 0.0
    %601 = vmatprep.subr.mxu0 0.0
    %602 = vmatpush1.msra.mxu0 %v71
    %603 = vmatprep.subr.mxu0 0.0
    %604 = vmatpush1.msra.mxu0 %v70
    %605 = vmatprep.subr.mxu0 0.0
    %606 = vmatpush1.msra.mxu0 %v69
    %607 = vmatprep.subr.mxu0 0.0
    %608 = vmatpush1.msra.mxu0 %v68
    %609 = vmatprep.subr.mxu0 0.0
    %610 = vmatpush2.msra.mxu0 0.0
    %611 = vmatprep.subr.mxu0 0.0
    %612 = vmatpush2.msra.mxu0 0.0
    %613 = vmatprep.subr.mxu0 0.0
    %614 = vmatpush2.msra.mxu0 0.0
    %615 = vmatprep.subr.mxu0 0.0
    %616 = vmatpush2.msra.mxu0 0.0
    %617 = vmatprep.subr.mxu0 0.0
    %618 = vmatpush2.msra.mxu0 0.0
    %619 = vmatprep.subr.mxu0 0.0
    %620 = vmatpush2.msra.mxu0 0.0
    %621 = vmatprep.subr.mxu0 0.0
    %622 = vmatpush2.msra.mxu0 0.0
    %623 = vmatprep.subr.mxu0 0.0
    %624 = vmatpush2.msra.mxu0 0.0
    %625 = vmatprep.subr.mxu0 0.0
    %626 = vmatpush2.msra.mxu0 0.0
    %627 = vmatprep.subr.mxu0 0.0
    %628 = vmatpush2.msra.mxu0 0.0
    %629 = vmatprep.subr.mxu0 0.0
    %630 = vmatpush2.msra.mxu0 0.0
    %631 = vmatprep.subr.mxu0 0.0
    %632 = vmatpush2.msra.mxu0 0.0
    %633 = vmatprep.subr.mxu0 0.0
    %634 = vmatpush2.msra.mxu0 0.0
    %635 = vmatprep.subr.mxu0 0.0
    %636 = vmatpush2.msra.mxu0 0.0
    %637 = vmatprep.subr.mxu0 0.0
    %638 = vmatpush2.msra.mxu0 0.0
    %639 = vmatprep.subr.mxu0 0.0
    %640 = vmatpush2.msra.mxu0 0.0
    %641 = vmatprep.mubr.f32.mxu0 0.0
    %642 = vmatmul.mubr.f32.gmra.mxu0 %v575
    %v643 = vpop.f32.mrf.mxu0
    %v644 = vadd.f32 %v107, %v643
    %v645 = vpop.f32.mrf.mxu0
    %646 = vdwg.mxu0
    %v647 = vmax.f32 %v644, 0.0
    %v649 = vsel %vm307, %v647, 0
    %651 = vmatprep.subr.mxu0 0.0
    %652 = vmatpush1.msra.mxu0 0.0
    %653 = vmatprep.subr.mxu0 0.0
    %654 = vmatpush1.msra.mxu0 0.0
    %655 = vmatprep.subr.mxu0 0.0
    %656 = vmatpush1.msra.mxu0 0.0
    %657 = vmatprep.subr.mxu0 0.0
    %658 = vmatpush1.msra.mxu0 0.0
    %659 = vmatprep.subr.mxu0 0.0
    %660 = vmatpush1.msra.mxu0 0.0
    %661 = vmatprep.subr.mxu0 0.0
    %662 = vmatpush1.msra.mxu0 0.0
    %663 = vmatprep.subr.mxu0 0.0
    %664 = vmatpush1.msra.mxu0 0.0
    %665 = vmatprep.subr.mxu0 0.0
    %666 = vmatpush1.msra.mxu0 0.0
    %667 = vmatprep.subr.mxu0 0.0
    %668 = vmatpush1.msra.mxu0 %v79
    %669 = vmatprep.subr.mxu0 0.0
    %670 = vmatpush1.msra.mxu0 %v78
    %671 = vmatprep.subr.mxu0 0.0
    %672 = vmatpush1.msra.mxu0 %v77
    %673 = vmatprep.subr.mxu0 0.0
    %674 = vmatpush1.msra.mxu0 %v76
    %675 = vmatprep.subr.mxu0 0.0
    %676 = vmatpush1.msra.mxu0 %v75
    %677 = vmatprep.subr.mxu0 0.0
    %678 = vmatpush1.msra.mxu0 %v74
    %679 = vmatprep.subr.mxu0 0.0
    %680 = vmatpush1.msra.mxu0 %v73
    %681 = vmatprep.subr.mxu0 0.0
    %682 = vmatpush1.msra.mxu0 %v72
    %683 = vmatprep.subr.mxu0 0.0
    %684 = vmatpush2.msra.mxu0 0.0
    %685 = vmatprep.subr.mxu0 0.0
    %686 = vmatpush2.msra.mxu0 0.0
    %687 = vmatprep.subr.mxu0 0.0
    %688 = vmatpush2.msra.mxu0 0.0
    %689 = vmatprep.subr.mxu0 0.0
    %690 = vmatpush2.msra.mxu0 0.0
    %691 = vmatprep.subr.mxu0 0.0
    %692 = vmatpush2.msra.mxu0 0.0
    %693 = vmatprep.subr.mxu0 0.0
    %694 = vmatpush2.msra.mxu0 0.0
    %695 = vmatprep.subr.mxu0 0.0
    %696 = vmatpush2.msra.mxu0 0.0
    %697 = vmatprep.subr.mxu0 0.0
    %698 = vmatpush2.msra.mxu0 0.0
    %699 = vmatprep.subr.mxu0 0.0
    %700 = vmatpush2.msra.mxu0 0.0
    %701 = vmatprep.subr.mxu0 0.0
    %702 = vmatpush2.msra.mxu0 0.0
    %703 = vmatprep.subr.mxu0 0.0
    %704 = vmatpush2.msra.mxu0 0.0
    %705 = vmatprep.subr.mxu0 0.0
    %706 = vmatpush2.msra.mxu0 0.0
    %707 = vmatprep.subr.mxu0 0.0
    %708 = vmatpush2.msra.mxu0 0.0
    %709 = vmatprep.subr.mxu0 0.0
    %710 = vmatpush2.msra.mxu0 0.0
    %711 = vmatprep.subr.mxu0 0.0
    %712 = vmatpush2.msra.mxu0 0.0
    %713 = vmatprep.subr.mxu0 0.0
    %714 = vmatpush2.msra.mxu0 0.0
    %715 = vmatprep.mubr.f32.mxu0 0.0
    %716 = vmatmul.mubr.f32.gmra.mxu0 %v649
    %v717 = vpop.f32.mrf.mxu0
    %v718 = vadd.f32 %v114, %v717
    %v719 = vpop.f32.mrf.mxu0
    %720 = vdwg.mxu0
    %v721 = vmax.f32 %v718, 0.0
    %v723 = vsel %vm307, %v721, 0
    %725 = vmatprep.subr.mxu0 0.0
    %726 = vmatpush1.msra.mxu0 0.0
    %727 = vmatprep.subr.mxu0 0.0
    %728 = vmatpush1.msra.mxu0 0.0
    %729 = vmatprep.subr.mxu0 0.0
    %730 = vmatpush1.msra.mxu0 0.0
    %731 = vmatprep.subr.mxu0 0.0
    %732 = vmatpush1.msra.mxu0 0.0
    %733 = vmatprep.subr.mxu0 0.0
    %734 = vmatpush1.msra.mxu0 0.0
    %735 = vmatprep.subr.mxu0 0.0
    %736 = vmatpush1.msra.mxu0 0.0
    %737 = vmatprep.subr.mxu0 0.0
    %738 = vmatpush1.msra.mxu0 0.0
    %739 = vmatprep.subr.mxu0 0.0
    %740 = vmatpush1.msra.mxu0 0.0
    %741 = vmatprep.subr.mxu0 0.0
    %742 = vmatpush1.msra.mxu0 %v87
    %743 = vmatprep.subr.mxu0 0.0
    %744 = vmatpush1.msra.mxu0 %v86
    %745 = vmatprep.subr.mxu0 0.0
    %746 = vmatpush1.msra.mxu0 %v85
    %747 = vmatprep.subr.mxu0 0.0
    %748 = vmatpush1.msra.mxu0 %v84
    %749 = vmatprep.subr.mxu0 0.0
    %750 = vmatpush1.msra.mxu0 %v83
    %751 = vmatprep.subr.mxu0 0.0
    %752 = vmatpush1.msra.mxu0 %v82
    %753 = vmatprep.subr.mxu0 0.0
    %754 = vmatpush1.msra.mxu0 %v81
    %755 = vmatprep.subr.mxu0 0.0
    %756 = vmatpush1.msra.mxu0 %v80
    %757 = vmatprep.subr.mxu0 0.0
    %758 = vmatpush2.msra.mxu0 0.0
    %759 = vmatprep.subr.mxu0 0.0
    %760 = vmatpush2.msra.mxu0 0.0
    %761 = vmatprep.subr.mxu0 0.0
    %762 = vmatpush2.msra.mxu0 0.0
    %763 = vmatprep.subr.mxu0 0.0
    %764 = vmatpush2.msra.mxu0 0.0
    %765 = vmatprep.subr.mxu0 0.0
    %766 = vmatpush2.msra.mxu0 0.0
    %767 = vmatprep.subr.mxu0 0.0
    %768 = vmatpush2.msra.mxu0 0.0
    %769 = vmatprep.subr.mxu0 0.0
    %770 = vmatpush2.msra.mxu0 0.0
    %771 = vmatprep.subr.mxu0 0.0
    %772 = vmatpush2.msra.mxu0 0.0
    %773 = vmatprep.subr.mxu0 0.0
    %774 = vmatpush2.msra.mxu0 0.0
    %775 = vmatprep.subr.mxu0 0.0
    %776 = vmatpush2.msra.mxu0 0.0
    %777 = vmatprep.subr.mxu0 0.0
    %778 = vmatpush2.msra.mxu0 0.0
    %779 = vmatprep.subr.mxu0 0.0
    %780 = vmatpush2.msra.mxu0 0.0
    %781 = vmatprep.subr.mxu0 0.0
    %782 = vmatpush2.msra.mxu0 0.0
    %783 = vmatprep.subr.mxu0 0.0
    %784 = vmatpush2.msra.mxu0 0.0
    %785 = vmatprep.subr.mxu0 0.0
    %786 = vmatpush2.msra.mxu0 0.0
    %787 = vmatprep.subr.mxu0 0.0
    %788 = vmatpush2.msra.mxu0 0.0
    %789 = vmatprep.mubr.f32.mxu0 0.0
    %790 = vmatmul.mubr.f32.gmra.mxu0 %v723
    %v791 = vpop.f32.mrf.mxu0
    %v792 = vadd.f32 %v121, %v791
    %v793 = vpop.f32.mrf.mxu0
    %794 = vdwg.mxu0
    %v795 = vsel %vm455, %v792, -inf
    %796 = vmax.xlane.f32.xlu0 %v795
    %v797 = vpop.xlane.xlu0 %796
    %v798 = vsub.f32 %v792, %v797
    %v799 = vmul.f32 %v798, 1.442695
    %v800 = vpow.pop %v799
    %v801 = vsel %vm455, %v800, 0.0
    %802 = vadd.xlane.f32.xlu0 %v801
    %v803 = vpop.xlane.xlu0 %802
    %v804 = vrcp.pop %v803
    %v805 = vmul.f32 %v800, %v804
    %807 = vrot.lane.b32.xlu0 %v805, 4
    %v808 = vpop.permute.xlu0 %807
    %vm810 = vcmask 58400
    %811 = vst.msk [vmem:[#allocation7] sm:$0x3] %vm810, %v808
    %v812 = vld [vmem:[%s0] sm:$0x3]
    %814 = vset.pattern.permute.xlu0 2
    %815 = vperm.xlu0 %814, %v812
    %v816 = vpop.permute.xlu0 %815
    %v818 = vmul.f32 %v816, %v93
    %819 = vmatprep.subr.mxu0 0.0
    %820 = vmatpush1.msra.mxu0 0.0
    %821 = vmatprep.subr.mxu0 0.0
    %822 = vmatpush1.msra.mxu0 0.0
    %823 = vmatprep.subr.mxu0 0.0
    %824 = vmatpush1.msra.mxu0 0.0
    %825 = vmatprep.subr.mxu0 0.0
    %826 = vmatpush1.msra.mxu0 0.0
    %827 = vmatprep.subr.mxu0 0.0
    %828 = vmatpush1.msra.mxu0 0.0
    %829 = vmatprep.subr.mxu0 0.0
    %830 = vmatpush1.msra.mxu0 0.0
    %831 = vmatprep.subr.mxu0 0.0
    %832 = vmatpush1.msra.mxu0 0.0
    %833 = vmatprep.subr.mxu0 0.0
    %834 = vmatpush1.msra.mxu0 0.0
    %835 = vmatprep.subr.mxu0 0.0
    %836 = vmatpush1.msra.mxu0 0.0
    %837 = vmatprep.subr.mxu0 0.0
    %838 = vmatpush1.msra.mxu0 0.0
    %839 = vmatprep.subr.mxu0 0.0
    %840 = vmatpush1.msra.mxu0 0.0
    %841 = vmatprep.subr.mxu0 0.0
    %842 = vmatpush1.msra.mxu0 0.0
    %843 = vmatprep.subr.mxu0 0.0
    %844 = vmatpush1.msra.mxu0 %v67
    %845 = vmatprep.subr.mxu0 0.0
    %846 = vmatpush1.msra.mxu0 %v66
    %847 = vmatprep.subr.mxu0 0.0
    %848 = vmatpush1.msra.mxu0 %v65
    %849 = vmatprep.subr.mxu0 0.0
    %850 = vmatpush1.msra.mxu0 %v64
    %851 = vmatprep.subr.mxu0 0.0
    %852 = vmatpush2.msra.mxu0 0.0
    %853 = vmatprep.subr.mxu0 0.0
    %854 = vmatpush2.msra.mxu0 0.0
    %855 = vmatprep.subr.mxu0 0.0
    %856 = vmatpush2.msra.mxu0 0.0
    %857 = vmatprep.subr.mxu0 0.0
    %858 = vmatpush2.msra.mxu0 0.0
    %859 = vmatprep.subr.mxu0 0.0
    %860 = vmatpush2.msra.mxu0 0.0
    %861 = vmatprep.subr.mxu0 0.0
    %862 = vmatpush2.msra.mxu0 0.0
    %863 = vmatprep.subr.mxu0 0.0
    %864 = vmatpush2.msra.mxu0 0.0
    %865 = vmatprep.subr.mxu0 0.0
    %866 = vmatpush2.msra.mxu0 0.0
    %867 = vmatprep.subr.mxu0 0.0
    %868 = vmatpush2.msra.mxu0 0.0
    %869 = vmatprep.subr.mxu0 0.0
    %870 = vmatpush2.msra.mxu0 0.0
    %871 = vmatprep.subr.mxu0 0.0
    %872 = vmatpush2.msra.mxu0 0.0
    %873 = vmatprep.subr.mxu0 0.0
    %874 = vmatpush2.msra.mxu0 0.0
    %875 = vmatprep.subr.mxu0 0.0
    %876 = vmatpush2.msra.mxu0 0.0
    %877 = vmatprep.subr.mxu0 0.0
    %878 = vmatpush2.msra.mxu0 0.0
    %879 = vmatprep.subr.mxu0 0.0
    %880 = vmatpush2.msra.mxu0 0.0
    %881 = vmatprep.subr.mxu0 0.0
    %882 = vmatpush2.msra.mxu0 0.0
    %883 = vmatprep.mubr.f32.mxu0 0.0
    %884 = vmatmul.mubr.f32.gmra.mxu0 %v575
    %v885 = vpop.f32.mrf.mxu0
    %v886 = vadd.f32 0.0, %v885
    %v887 = vpop.f32.mrf.mxu0
    %888 = vdwg.mxu0
    %v889 = vadd.f32 %v818, %v886
    %v890 = vadd.f32 %v889, %v100
    %v891 = vxor.u32 %v890, 2147483648
    %v892 = vmul.f32 %v891, 1.442695
    %v893 = vpow.pop %v892
    %v894 = vadd.f32 %v893, 1.0
    %v895 = vrcp.pop %v894
    %v896 = vmul.f32 1.0, %v895
    %v897 = vmul.f32 %v896, 2.0
    %v898 = vsub.f32 %v897, 1.0
    %v899 = vmul.f32 %v896, %v565
    %901 = vrot.lane.b32.xlu0 %v898, 64
    %v902 = vpop.permute.xlu0 %901
    %v904 = vmul.f32 %v896, %v902
    %906 = vrot.lane.b32.xlu0 %v904, 32
    %v907 = vpop.permute.xlu0 %906
    %v909 = vadd.f32 %v899, %v907
    %v910 = vtanh.pop %v909
    %912 = vrot.lane.b32.xlu0 %v910, 64
    %v913 = vpop.permute.xlu0 %912
    %v915 = vmul.f32 %v896, %v913
    %917 = vrot.lane.b32.xlu0 %v915, 32
    %v918 = vpop.permute.xlu0 %917
    %v919 = vsel %vm130, %v918, 0
    %921 = vmatprep.subr.mxu0 0.0
    %922 = vmatpush1.msra.mxu0 0.0
    %923 = vmatprep.subr.mxu0 0.0
    %924 = vmatpush1.msra.mxu0 0.0
    %925 = vmatprep.subr.mxu0 0.0
    %926 = vmatpush1.msra.mxu0 0.0
    %927 = vmatprep.subr.mxu0 0.0
    %928 = vmatpush1.msra.mxu0 0.0
    %929 = vmatprep.subr.mxu0 0.0
    %930 = vmatpush1.msra.mxu0 0.0
    %931 = vmatprep.subr.mxu0 0.0
    %932 = vmatpush1.msra.mxu0 0.0
    %933 = vmatprep.subr.mxu0 0.0
    %934 = vmatpush1.msra.mxu0 0.0
    %935 = vmatprep.subr.mxu0 0.0
    %936 = vmatpush1.msra.mxu0 0.0
    %937 = vmatprep.subr.mxu0 0.0
    %938 = vmatpush1.msra.mxu0 0.0
    %939 = vmatprep.subr.mxu0 0.0
    %940 = vmatpush1.msra.mxu0 0.0
    %941 = vmatprep.subr.mxu0 0.0
    %942 = vmatpush1.msra.mxu0 0.0
    %943 = vmatprep.subr.mxu0 0.0
    %944 = vmatpush1.msra.mxu0 0.0
    %945 = vmatprep.subr.mxu0 0.0
    %946 = vmatpush1.msra.mxu0 %v71
    %947 = vmatprep.subr.mxu0 0.0
    %948 = vmatpush1.msra.mxu0 %v70
    %949 = vmatprep.subr.mxu0 0.0
    %950 = vmatpush1.msra.mxu0 %v69
    %951 = vmatprep.subr.mxu0 0.0
    %952 = vmatpush1.msra.mxu0 %v68
    %953 = vmatprep.subr.mxu0 0.0
    %954 = vmatpush2.msra.mxu0 0.0
    %955 = vmatprep.subr.mxu0 0.0
    %956 = vmatpush2.msra.mxu0 0.0
    %957 = vmatprep.subr.mxu0 0.0
    %958 = vmatpush2.msra.mxu0 0.0
    %959 = vmatprep.subr.mxu0 0.0
    %960 = vmatpush2.msra.mxu0 0.0
    %961 = vmatprep.subr.mxu0 0.0
    %962 = vmatpush2.msra.mxu0 0.0
    %963 = vmatprep.subr.mxu0 0.0
    %964 = vmatpush2.msra.mxu0 0.0
    %965 = vmatprep.subr.mxu0 0.0
    %966 = vmatpush2.msra.mxu0 0.0
    %967 = vmatprep.subr.mxu0 0.0
    %968 = vmatpush2.msra.mxu0 0.0
    %969 = vmatprep.subr.mxu0 0.0
    %970 = vmatpush2.msra.mxu0 0.0
    %971 = vmatprep.subr.mxu0 0.0
    %972 = vmatpush2.msra.mxu0 0.0
    %973 = vmatprep.subr.mxu0 0.0
    %974 = vmatpush2.msra.mxu0 0.0
    %975 = vmatprep.subr.mxu0 0.0
    %976 = vmatpush2.msra.mxu0 0.0
    %977 = vmatprep.subr.mxu0 0.0
    %978 = vmatpush2.msra.mxu0 0.0
    %979 = vmatprep.subr.mxu0 0.0
    %980 = vmatpush2.msra.mxu0 0.0
    %981 = vmatprep.subr.mxu0 0.0
    %982 = vmatpush2.msra.mxu0 0.0
    %983 = vmatprep.subr.mxu0 0.0
    %984 = vmatpush2.msra.mxu0 0.0
    %985 = vmatprep.mubr.f32.mxu0 0.0
    %986 = vmatmul.mubr.f32.gmra.mxu0 %v919
    %v987 = vpop.f32.mrf.mxu0
    %v988 = vadd.f32 %v107, %v987
    %v989 = vpop.f32.mrf.mxu0
    %990 = vdwg.mxu0
    %v991 = vmax.f32 %v988, 0.0
    %v993 = vsel %vm307, %v991, 0
    %995 = vmatprep.subr.mxu0 0.0
    %996 = vmatpush1.msra.mxu0 0.0
    %997 = vmatprep.subr.mxu0 0.0
    %998 = vmatpush1.msra.mxu0 0.0
    %999 = vmatprep.subr.mxu0 0.0
    %1000 = vmatpush1.msra.mxu0 0.0
    %1001 = vmatprep.subr.mxu0 0.0
    %1002 = vmatpush1.msra.mxu0 0.0
    %1003 = vmatprep.subr.mxu0 0.0
    %1004 = vmatpush1.msra.mxu0 0.0
    %1005 = vmatprep.subr.mxu0 0.0
    %1006 = vmatpush1.msra.mxu0 0.0
    %1007 = vmatprep.subr.mxu0 0.0
    %1008 = vmatpush1.msra.mxu0 0.0
    %1009 = vmatprep.subr.mxu0 0.0
    %1010 = vmatpush1.msra.mxu0 0.0
    %1011 = vmatprep.subr.mxu0 0.0
    %1012 = vmatpush1.msra.mxu0 %v79
    %1013 = vmatprep.subr.mxu0 0.0
    %1014 = vmatpush1.msra.mxu0 %v78
    %1015 = vmatprep.subr.mxu0 0.0
    %1016 = vmatpush1.msra.mxu0 %v77
    %1017 = vmatprep.subr.mxu0 0.0
    %1018 = vmatpush1.msra.mxu0 %v76
    %1019 = vmatprep.subr.mxu0 0.0
    %1020 = vmatpush1.msra.mxu0 %v75
    %1021 = vmatprep.subr.mxu0 0.0
    %1022 = vmatpush1.msra.mxu0 %v74
    %1023 = vmatprep.subr.mxu0 0.0
    %1024 = vmatpush1.msra.mxu0 %v73
    %1025 = vmatprep.subr.mxu0 0.0
    %1026 = vmatpush1.msra.mxu0 %v72
    %1027 = vmatprep.subr.mxu0 0.0
    %1028 = vmatpush2.msra.mxu0 0.0
    %1029 = vmatprep.subr.mxu0 0.0
    %1030 = vmatpush2.msra.mxu0 0.0
    %1031 = vmatprep.subr.mxu0 0.0
    %1032 = vmatpush2.msra.mxu0 0.0
    %1033 = vmatprep.subr.mxu0 0.0
    %1034 = vmatpush2.msra.mxu0 0.0
    %1035 = vmatprep.subr.mxu0 0.0
    %1036 = vmatpush2.msra.mxu0 0.0
    %1037 = vmatprep.subr.mxu0 0.0
    %1038 = vmatpush2.msra.mxu0 0.0
    %1039 = vmatprep.subr.mxu0 0.0
    %1040 = vmatpush2.msra.mxu0 0.0
    %1041 = vmatprep.subr.mxu0 0.0
    %1042 = vmatpush2.msra.mxu0 0.0
    %1043 = vmatprep.subr.mxu0 0.0
    %1044 = vmatpush2.msra.mxu0 0.0
    %1045 = vmatprep.subr.mxu0 0.0
    %1046 = vmatpush2.msra.mxu0 0.0
    %1047 = vmatprep.subr.mxu0 0.0
    %1048 = vmatpush2.msra.mxu0 0.0
    %1049 = vmatprep.subr.mxu0 0.0
    %1050 = vmatpush2.msra.mxu0 0.0
    %1051 = vmatprep.subr.mxu0 0.0
    %1052 = vmatpush2.msra.mxu0 0.0
    %1053 = vmatprep.subr.mxu0 0.0
    %1054 = vmatpush2.msra.mxu0 0.0
    %1055 = vmatprep.subr.mxu0 0.0
    %1056 = vmatpush2.msra.mxu0 0.0
    %1057 = vmatprep.subr.mxu0 0.0
    %1058 = vmatpush2.msra.mxu0 0.0
    %1059 = vmatprep.mubr.f32.mxu0 0.0
    %1060 = vmatmul.mubr.f32.gmra.mxu0 %v993
    %v1061 = vpop.f32.mrf.mxu0
    %v1062 = vadd.f32 %v114, %v1061
    %v1063 = vpop.f32.mrf.mxu0
    %1064 = vdwg.mxu0
    %v1065 = vmax.f32 %v1062, 0.0
    %v1067 = vsel %vm307, %v1065, 0
    %1069 = vmatprep.subr.mxu0 0.0
    %1070 = vmatpush1.msra.mxu0 0.0
    %1071 = vmatprep.subr.mxu0 0.0
    %1072 = vmatpush1.msra.mxu0 0.0
    %1073 = vmatprep.subr.mxu0 0.0
    %1074 = vmatpush1.msra.mxu0 0.0
    %1075 = vmatprep.subr.mxu0 0.0
    %1076 = vmatpush1.msra.mxu0 0.0
    %1077 = vmatprep.subr.mxu0 0.0
    %1078 = vmatpush1.msra.mxu0 0.0
    %1079 = vmatprep.subr.mxu0 0.0
    %1080 = vmatpush1.msra.mxu0 0.0
    %1081 = vmatprep.subr.mxu0 0.0
    %1082 = vmatpush1.msra.mxu0 0.0
    %1083 = vmatprep.subr.mxu0 0.0
    %1084 = vmatpush1.msra.mxu0 0.0
    %1085 = vmatprep.subr.mxu0 0.0
    %1086 = vmatpush1.msra.mxu0 %v87
    %1087 = vmatprep.subr.mxu0 0.0
    %1088 = vmatpush1.msra.mxu0 %v86
    %1089 = vmatprep.subr.mxu0 0.0
    %1090 = vmatpush1.msra.mxu0 %v85
    %1091 = vmatprep.subr.mxu0 0.0
    %1092 = vmatpush1.msra.mxu0 %v84
    %1093 = vmatprep.subr.mxu0 0.0
    %1094 = vmatpush1.msra.mxu0 %v83
    %1095 = vmatprep.subr.mxu0 0.0
    %1096 = vmatpush1.msra.mxu0 %v82
    %1097 = vmatprep.subr.mxu0 0.0
    %1098 = vmatpush1.msra.mxu0 %v81
    %1099 = vmatprep.subr.mxu0 0.0
    %1100 = vmatpush1.msra.mxu0 %v80
    %1101 = vmatprep.subr.mxu0 0.0
    %1102 = vmatpush2.msra.mxu0 0.0
    %1103 = vmatprep.subr.mxu0 0.0
    %1104 = vmatpush2.msra.mxu0 0.0
    %1105 = vmatprep.subr.mxu0 0.0
    %1106 = vmatpush2.msra.mxu0 0.0
    %1107 = vmatprep.subr.mxu0 0.0
    %1108 = vmatpush2.msra.mxu0 0.0
    %1109 = vmatprep.subr.mxu0 0.0
    %1110 = vmatpush2.msra.mxu0 0.0
    %1111 = vmatprep.subr.mxu0 0.0
    %1112 = vmatpush2.msra.mxu0 0.0
    %1113 = vmatprep.subr.mxu0 0.0
    %1114 = vmatpush2.msra.mxu0 0.0
    %1115 = vmatprep.subr.mxu0 0.0
    %1116 = vmatpush2.msra.mxu0 0.0
    %1117 = vmatprep.subr.mxu0 0.0
    %1118 = vmatpush2.msra.mxu0 0.0
    %1119 = vmatprep.subr.mxu0 0.0
    %1120 = vmatpush2.msra.mxu0 0.0
    %1121 = vmatprep.subr.mxu0 0.0
    %1122 = vmatpush2.msra.mxu0 0.0
    %1123 = vmatprep.subr.mxu0 0.0
    %1124 = vmatpush2.msra.mxu0 0.0
    %1125 = vmatprep.subr.mxu0 0.0
    %1126 = vmatpush2.msra.mxu0 0.0
    %1127 = vmatprep.subr.mxu0 0.0
    %1128 = vmatpush2.msra.mxu0 0.0
    %1129 = vmatprep.subr.mxu0 0.0
    %1130 = vmatpush2.msra.mxu0 0.0
    %1131 = vmatprep.subr.mxu0 0.0
    %1132 = vmatpush2.msra.mxu0 0.0
    %1133 = vmatprep.mubr.f32.mxu0 0.0
    %1134 = vmatmul.mubr.f32.gmra.mxu0 %v1067
    %v1135 = vpop.f32.mrf.mxu0
    %v1136 = vadd.f32 %v121, %v1135
    %v1137 = vpop.f32.mrf.mxu0
    %1138 = vdwg.mxu0
    %v1139 = vsel %vm455, %v1136, -inf
    %1140 = vmax.xlane.f32.xlu0 %v1139
    %v1141 = vpop.xlane.xlu0 %1140
    %v1142 = vsub.f32 %v1136, %v1141
    %v1143 = vmul.f32 %v1142, 1.442695
    %v1144 = vpow.pop %v1143
    %v1145 = vsel %vm455, %v1144, 0.0
    %1146 = vadd.xlane.f32.xlu0 %v1145
    %v1147 = vpop.xlane.xlu0 %1146
    %v1148 = vrcp.pop %v1147
    %v1149 = vmul.f32 %v1144, %v1148
    %1151 = vrot.lane.b32.xlu0 %v1149, 8
    %v1152 = vpop.permute.xlu0 %1151
    %vm1154 = vcmask 91200
    %1155 = vst.msk [vmem:[#allocation7] sm:$0x3] %vm1154, %v1152
    %v1156 = vld [vmem:[%s0] sm:$0x3]
    %1158 = vset.pattern.permute.xlu0 3
    %1159 = vperm.xlu0 %1158, %v1156
    %v1160 = vpop.permute.xlu0 %1159
    %v1162 = vmul.f32 %v1160, %v93
    %1163 = vmatprep.subr.mxu0 0.0
    %1164 = vmatpush1.msra.mxu0 0.0
    %1165 = vmatprep.subr.mxu0 0.0
    %1166 = vmatpush1.msra.mxu0 0.0
    %1167 = vmatprep.subr.mxu0 0.0
    %1168 = vmatpush1.msra.mxu0 0.0
    %1169 = vmatprep.subr.mxu0 0.0
    %1170 = vmatpush1.msra.mxu0 0.0
    %1171 = vmatprep.subr.mxu0 0.0
    %1172 = vmatpush1.msra.mxu0 0.0
    %1173 = vmatprep.subr.mxu0 0.0
    %1174 = vmatpush1.msra.mxu0 0.0
    %1175 = vmatprep.subr.mxu0 0.0
    %1176 = vmatpush1.msra.mxu0 0.0
    %1177 = vmatprep.subr.mxu0 0.0
    %1178 = vmatpush1.msra.mxu0 0.0
    %1179 = vmatprep.subr.mxu0 0.0
    %1180 = vmatpush1.msra.mxu0 0.0
    %1181 = vmatprep.subr.mxu0 0.0
    %1182 = vmatpush1.msra.mxu0 0.0
    %1183 = vmatprep.subr.mxu0 0.0
    %1184 = vmatpush1.msra.mxu0 0.0
    %1185 = vmatprep.subr.mxu0 0.0
    %1186 = vmatpush1.msra.mxu0 0.0
    %1187 = vmatprep.subr.mxu0 0.0
    %1188 = vmatpush1.msra.mxu0 %v67
    %1189 = vmatprep.subr.mxu0 0.0
    %1190 = vmatpush1.msra.mxu0 %v66
    %1191 = vmatprep.subr.mxu0 0.0
    %1192 = vmatpush1.msra.mxu0 %v65
    %1193 = vmatprep.subr.mxu0 0.0
    %1194 = vmatpush1.msra.mxu0 %v64
    %1195 = vmatprep.subr.mxu0 0.0
    %1196 = vmatpush2.msra.mxu0 0.0
    %1197 = vmatprep.subr.mxu0 0.0
    %1198 = vmatpush2.msra.mxu0 0.0
    %1199 = vmatprep.subr.mxu0 0.0
    %1200 = vmatpush2.msra.mxu0 0.0
    %1201 = vmatprep.subr.mxu0 0.0
    %1202 = vmatpush2.msra.mxu0 0.0
    %1203 = vmatprep.subr.mxu0 0.0
    %1204 = vmatpush2.msra.mxu0 0.0
    %1205 = vmatprep.subr.mxu0 0.0
    %1206 = vmatpush2.msra.mxu0 0.0
    %1207 = vmatprep.subr.mxu0 0.0
    %1208 = vmatpush2.msra.mxu0 0.0
    %1209 = vmatprep.subr.mxu0 0.0
    %1210 = vmatpush2.msra.mxu0 0.0
    %1211 = vmatprep.subr.mxu0 0.0
    %1212 = vmatpush2.msra.mxu0 0.0
    %1213 = vmatprep.subr.mxu0 0.0
    %1214 = vmatpush2.msra.mxu0 0.0
    %1215 = vmatprep.subr.mxu0 0.0
    %1216 = vmatpush2.msra.mxu0 0.0
    %1217 = vmatprep.subr.mxu0 0.0
    %1218 = vmatpush2.msra.mxu0 0.0
    %1219 = vmatprep.subr.mxu0 0.0
    %1220 = vmatpush2.msra.mxu0 0.0
    %1221 = vmatprep.subr.mxu0 0.0
    %1222 = vmatpush2.msra.mxu0 0.0
    %1223 = vmatprep.subr.mxu0 0.0
    %1224 = vmatpush2.msra.mxu0 0.0
    %1225 = vmatprep.subr.mxu0 0.0
    %1226 = vmatpush2.msra.mxu0 0.0
    %1227 = vmatprep.mubr.f32.mxu0 0.0
    %1228 = vmatmul.mubr.f32.gmra.mxu0 %v919
    %v1229 = vpop.f32.mrf.mxu0
    %v1230 = vadd.f32 0.0, %v1229
    %v1231 = vpop.f32.mrf.mxu0
    %1232 = vdwg.mxu0
    %v1233 = vadd.f32 %v1162, %v1230
    %v1234 = vadd.f32 %v1233, %v100
    %v1235 = vxor.u32 %v1234, 2147483648
    %v1236 = vmul.f32 %v1235, 1.442695
    %v1237 = vpow.pop %v1236
    %v1238 = vadd.f32 %v1237, 1.0
    %v1239 = vrcp.pop %v1238
    %v1240 = vmul.f32 1.0, %v1239
    %v1241 = vmul.f32 %v1240, 2.0
    %v1242 = vsub.f32 %v1241, 1.0
    %v1243 = vmul.f32 %v1240, %v909
    %1245 = vrot.lane.b32.xlu0 %v1242, 64
    %v1246 = vpop.permute.xlu0 %1245
    %v1248 = vmul.f32 %v1240, %v1246
    %1250 = vrot.lane.b32.xlu0 %v1248, 32
    %v1251 = vpop.permute.xlu0 %1250
    %v1253 = vadd.f32 %v1243, %v1251
    %v1254 = vtanh.pop %v1253
    %1256 = vrot.lane.b32.xlu0 %v1254, 64
    %v1257 = vpop.permute.xlu0 %1256
    %v1259 = vmul.f32 %v1240, %v1257
    %1261 = vrot.lane.b32.xlu0 %v1259, 32
    %v1262 = vpop.permute.xlu0 %1261
    %v1263 = vsel %vm130, %v1262, 0
    %1265 = vmatprep.subr.mxu0 0.0
    %1266 = vmatpush1.msra.mxu0 0.0
    %1267 = vmatprep.subr.mxu0 0.0
    %1268 = vmatpush1.msra.mxu0 0.0
    %1269 = vmatprep.subr.mxu0 0.0
    %1270 = vmatpush1.msra.mxu0 0.0
    %1271 = vmatprep.subr.mxu0 0.0
    %1272 = vmatpush1.msra.mxu0 0.0
    %1273 = vmatprep.subr.mxu0 0.0
    %1274 = vmatpush1.msra.mxu0 0.0
    %1275 = vmatprep.subr.mxu0 0.0
    %1276 = vmatpush1.msra.mxu0 0.0
    %1277 = vmatprep.subr.mxu0 0.0
    %1278 = vmatpush1.msra.mxu0 0.0
    %1279 = vmatprep.subr.mxu0 0.0
    %1280 = vmatpush1.msra.mxu0 0.0
    %1281 = vmatprep.subr.mxu0 0.0
    %1282 = vmatpush1.msra.mxu0 0.0
    %1283 = vmatprep.subr.mxu0 0.0
    %1284 = vmatpush1.msra.mxu0 0.0
    %1285 = vmatprep.subr.mxu0 0.0
    %1286 = vmatpush1.msra.mxu0 0.0
    %1287 = vmatprep.subr.mxu0 0.0
    %1288 = vmatpush1.msra.mxu0 0.0
    %1289 = vmatprep.subr.mxu0 0.0
    %1290 = vmatpush1.msra.mxu0 %v71
    %1291 = vmatprep.subr.mxu0 0.0
    %1292 = vmatpush1.msra.mxu0 %v70
    %1293 = vmatprep.subr.mxu0 0.0
    %1294 = vmatpush1.msra.mxu0 %v69
    %1295 = vmatprep.subr.mxu0 0.0
    %1296 = vmatpush1.msra.mxu0 %v68
    %1297 = vmatprep.subr.mxu0 0.0
    %1298 = vmatpush2.msra.mxu0 0.0
    %1299 = vmatprep.subr.mxu0 0.0
    %1300 = vmatpush2.msra.mxu0 0.0
    %1301 = vmatprep.subr.mxu0 0.0
    %1302 = vmatpush2.msra.mxu0 0.0
    %1303 = vmatprep.subr.mxu0 0.0
    %1304 = vmatpush2.msra.mxu0 0.0
    %1305 = vmatprep.subr.mxu0 0.0
    %1306 = vmatpush2.msra.mxu0 0.0
    %1307 = vmatprep.subr.mxu0 0.0
    %1308 = vmatpush2.msra.mxu0 0.0
    %1309 = vmatprep.subr.mxu0 0.0
    %1310 = vmatpush2.msra.mxu0 0.0
    %1311 = vmatprep.subr.mxu0 0.0
    %1312 = vmatpush2.msra.mxu0 0.0
    %1313 = vmatprep.subr.mxu0 0.0
    %1314 = vmatpush2.msra.mxu0 0.0
    %1315 = vmatprep.subr.mxu0 0.0
    %1316 = vmatpush2.msra.mxu0 0.0
    %1317 = vmatprep.subr.mxu0 0.0
    %1318 = vmatpush2.msra.mxu0 0.0
    %1319 = vmatprep.subr.mxu0 0.0
    %1320 = vmatpush2.msra.mxu0 0.0
    %1321 = vmatprep.subr.mxu0 0.0
    %1322 = vmatpush2.msra.mxu0 0.0
    %1323 = vmatprep.subr.mxu0 0.0
    %1324 = vmatpush2.msra.mxu0 0.0
    %1325 = vmatprep.subr.mxu0 0.0
    %1326 = vmatpush2.msra.mxu0 0.0
    %1327 = vmatprep.subr.mxu0 0.0
    %1328 = vmatpush2.msra.mxu0 0.0
    %1329 = vmatprep.mubr.f32.mxu0 0.0
    %1330 = vmatmul.mubr.f32.gmra.mxu0 %v1263
    %v1331 = vpop.f32.mrf.mxu0
    %v1332 = vadd.f32 %v107, %v1331
    %v1333 = vpop.f32.mrf.mxu0
    %1334 = vdwg.mxu0
    %v1335 = vmax.f32 %v1332, 0.0
    %v1337 = vsel %vm307, %v1335, 0
    %1339 = vmatprep.subr.mxu0 0.0
    %1340 = vmatpush1.msra.mxu0 0.0
    %1341 = vmatprep.subr.mxu0 0.0
    %1342 = vmatpush1.msra.mxu0 0.0
    %1343 = vmatprep.subr.mxu0 0.0
    %1344 = vmatpush1.msra.mxu0 0.0
    %1345 = vmatprep.subr.mxu0 0.0
    %1346 = vmatpush1.msra.mxu0 0.0
    %1347 = vmatprep.subr.mxu0 0.0
    %1348 = vmatpush1.msra.mxu0 0.0
    %1349 = vmatprep.subr.mxu0 0.0
    %1350 = vmatpush1.msra.mxu0 0.0
    %1351 = vmatprep.subr.mxu0 0.0
    %1352 = vmatpush1.msra.mxu0 0.0
    %1353 = vmatprep.subr.mxu0 0.0
    %1354 = vmatpush1.msra.mxu0 0.0
    %1355 = vmatprep.subr.mxu0 0.0
    %1356 = vmatpush1.msra.mxu0 %v79
    %1357 = vmatprep.subr.mxu0 0.0
    %1358 = vmatpush1.msra.mxu0 %v78
    %1359 = vmatprep.subr.mxu0 0.0
    %1360 = vmatpush1.msra.mxu0 %v77
    %1361 = vmatprep.subr.mxu0 0.0
    %1362 = vmatpush1.msra.mxu0 %v76
    %1363 = vmatprep.subr.mxu0 0.0
    %1364 = vmatpush1.msra.mxu0 %v75
    %1365 = vmatprep.subr.mxu0 0.0
    %1366 = vmatpush1.msra.mxu0 %v74
    %1367 = vmatprep.subr.mxu0 0.0
    %1368 = vmatpush1.msra.mxu0 %v73
    %1369 = vmatprep.subr.mxu0 0.0
    %1370 = vmatpush1.msra.mxu0 %v72
    %1371 = vmatprep.subr.mxu0 0.0
    %1372 = vmatpush2.msra.mxu0 0.0
    %1373 = vmatprep.subr.mxu0 0.0
    %1374 = vmatpush2.msra.mxu0 0.0
    %1375 = vmatprep.subr.mxu0 0.0
    %1376 = vmatpush2.msra.mxu0 0.0
    %1377 = vmatprep.subr.mxu0 0.0
    %1378 = vmatpush2.msra.mxu0 0.0
    %1379 = vmatprep.subr.mxu0 0.0
    %1380 = vmatpush2.msra.mxu0 0.0
    %1381 = vmatprep.subr.mxu0 0.0
    %1382 = vmatpush2.msra.mxu0 0.0
    %1383 = vmatprep.subr.mxu0 0.0
    %1384 = vmatpush2.msra.mxu0 0.0
    %1385 = vmatprep.subr.mxu0 0.0
    %1386 = vmatpush2.msra.mxu0 0.0
    %1387 = vmatprep.subr.mxu0 0.0
    %1388 = vmatpush2.msra.mxu0 0.0
    %1389 = vmatprep.subr.mxu0 0.0
    %1390 = vmatpush2.msra.mxu0 0.0
    %1391 = vmatprep.subr.mxu0 0.0
    %1392 = vmatpush2.msra.mxu0 0.0
    %1393 = vmatprep.subr.mxu0 0.0
    %1394 = vmatpush2.msra.mxu0 0.0
    %1395 = vmatprep.subr.mxu0 0.0
    %1396 = vmatpush2.msra.mxu0 0.0
    %1397 = vmatprep.subr.mxu0 0.0
    %1398 = vmatpush2.msra.mxu0 0.0
    %1399 = vmatprep.subr.mxu0 0.0
    %1400 = vmatpush2.msra.mxu0 0.0
    %1401 = vmatprep.subr.mxu0 0.0
    %1402 = vmatpush2.msra.mxu0 0.0
    %1403 = vmatprep.mubr.f32.mxu0 0.0
    %1404 = vmatmul.mubr.f32.gmra.mxu0 %v1337
    %v1405 = vpop.f32.mrf.mxu0
    %v1406 = vadd.f32 %v114, %v1405
    %v1407 = vpop.f32.mrf.mxu0
    %1408 = vdwg.mxu0
    %v1409 = vmax.f32 %v1406, 0.0
    %v1411 = vsel %vm307, %v1409, 0
    %1413 = vmatprep.subr.mxu0 0.0
    %1414 = vmatpush1.msra.mxu0 0.0
    %1415 = vmatprep.subr.mxu0 0.0
    %1416 = vmatpush1.msra.mxu0 0.0
    %1417 = vmatprep.subr.mxu0 0.0
    %1418 = vmatpush1.msra.mxu0 0.0
    %1419 = vmatprep.subr.mxu0 0.0
    %1420 = vmatpush1.msra.mxu0 0.0
    %1421 = vmatprep.subr.mxu0 0.0
    %1422 = vmatpush1.msra.mxu0 0.0
    %1423 = vmatprep.subr.mxu0 0.0
    %1424 = vmatpush1.msra.mxu0 0.0
    %1425 = vmatprep.subr.mxu0 0.0
    %1426 = vmatpush1.msra.mxu0 0.0
    %1427 = vmatprep.subr.mxu0 0.0
    %1428 = vmatpush1.msra.mxu0 0.0
    %1429 = vmatprep.subr.mxu0 0.0
    %1430 = vmatpush1.msra.mxu0 %v87
    %1431 = vmatprep.subr.mxu0 0.0
    %1432 = vmatpush1.msra.mxu0 %v86
    %1433 = vmatprep.subr.mxu0 0.0
    %1434 = vmatpush1.msra.mxu0 %v85
    %1435 = vmatprep.subr.mxu0 0.0
    %1436 = vmatpush1.msra.mxu0 %v84
    %1437 = vmatprep.subr.mxu0 0.0
    %1438 = vmatpush1.msra.mxu0 %v83
    %1439 = vmatprep.subr.mxu0 0.0
    %1440 = vmatpush1.msra.mxu0 %v82
    %1441 = vmatprep.subr.mxu0 0.0
    %1442 = vmatpush1.msra.mxu0 %v81
    %1443 = vmatprep.subr.mxu0 0.0
    %1444 = vmatpush1.msra.mxu0 %v80
    %1445 = vmatprep.subr.mxu0 0.0
    %1446 = vmatpush2.msra.mxu0 0.0
    %1447 = vmatprep.subr.mxu0 0.0
    %1448 = vmatpush2.msra.mxu0 0.0
    %1449 = vmatprep.subr.mxu0 0.0
    %1450 = vmatpush2.msra.mxu0 0.0
    %1451 = vmatprep.subr.mxu0 0.0
    %1452 = vmatpush2.msra.mxu0 0.0
    %1453 = vmatprep.subr.mxu0 0.0
    %1454 = vmatpush2.msra.mxu0 0.0
    %1455 = vmatprep.subr.mxu0 0.0
    %1456 = vmatpush2.msra.mxu0 0.0
    %1457 = vmatprep.subr.mxu0 0.0
    %1458 = vmatpush2.msra.mxu0 0.0
    %1459 = vmatprep.subr.mxu0 0.0
    %1460 = vmatpush2.msra.mxu0 0.0
    %1461 = vmatprep.subr.mxu0 0.0
    %1462 = vmatpush2.msra.mxu0 0.0
    %1463 = vmatprep.subr.mxu0 0.0
    %1464 = vmatpush2.msra.mxu0 0.0
    %1465 = vmatprep.subr.mxu0 0.0
    %1466 = vmatpush2.msra.mxu0 0.0
    %1467 = vmatprep.subr.mxu0 0.0
    %1468 = vmatpush2.msra.mxu0 0.0
    %1469 = vmatprep.subr.mxu0 0.0
    %1470 = vmatpush2.msra.mxu0 0.0
    %1471 = vmatprep.subr.mxu0 0.0
    %1472 = vmatpush2.msra.mxu0 0.0
    %1473 = vmatprep.subr.mxu0 0.0
    %1474 = vmatpush2.msra.mxu0 0.0
    %1475 = vmatprep.subr.mxu0 0.0
    %1476 = vmatpush2.msra.mxu0 0.0
    %1477 = vmatprep.mubr.f32.mxu0 0.0
    %1478 = vmatmul.mubr.f32.gmra.mxu0 %v1411
    %v1479 = vpop.f32.mrf.mxu0
    %v1480 = vadd.f32 %v121, %v1479
    %v1481 = vpop.f32.mrf.mxu0
    %1482 = vdwg.mxu0
    %v1483 = vsel %vm455, %v1480, -inf
    %1484 = vmax.xlane.f32.xlu0 %v1483
    %v1485 = vpop.xlane.xlu0 %1484
    %v1486 = vsub.f32 %v1480, %v1485
    %v1487 = vmul.f32 %v1486, 1.442695
    %v1488 = vpow.pop %v1487
    %v1489 = vsel %vm455, %v1488, 0.0
    %1490 = vadd.xlane.f32.xlu0 %v1489
    %v1491 = vpop.xlane.xlu0 %1490
    %v1492 = vrcp.pop %v1491
    %v1493 = vmul.f32 %v1488, %v1492
    %1495 = vrot.lane.b32.xlu0 %v1493, 12
    %v1496 = vpop.permute.xlu0 %1495
    %vm1498 = vcmask 124000
    %1499 = vst.msk [vmem:[#allocation7] sm:$0x3] %vm1498, %v1496
    %v1500 = vld [vmem:[%s0] sm:$0x3]
    %1502 = vset.pattern.permute.xlu0 4
    %1503 = vperm.xlu0 %1502, %v1500
    %v1504 = vpop.permute.xlu0 %1503
    %v1506 = vmul.f32 %v1504, %v93
    %1507 = vmatprep.subr.mxu0 0.0
    %1508 = vmatpush1.msra.mxu0 0.0
    %1509 = vmatprep.subr.mxu0 0.0
    %1510 = vmatpush1.msra.mxu0 0.0
    %1511 = vmatprep.subr.mxu0 0.0
    %1512 = vmatpush1.msra.mxu0 0.0
    %1513 = vmatprep.subr.mxu0 0.0
    %1514 = vmatpush1.msra.mxu0 0.0
    %1515 = vmatprep.subr.mxu0 0.0
    %1516 = vmatpush1.msra.mxu0 0.0
    %1517 = vmatprep.subr.mxu0 0.0
    %1518 = vmatpush1.msra.mxu0 0.0
    %1519 = vmatprep.subr.mxu0 0.0
    %1520 = vmatpush1.msra.mxu0 0.0
    %1521 = vmatprep.subr.mxu0 0.0
    %1522 = vmatpush1.msra.mxu0 0.0
    %1523 = vmatprep.subr.mxu0 0.0
    %1524 = vmatpush1.msra.mxu0 0.0
    %1525 = vmatprep.subr.mxu0 0.0
    %1526 = vmatpush1.msra.mxu0 0.0
    %1527 = vmatprep.subr.mxu0 0.0
    %1528 = vmatpush1.msra.mxu0 0.0
    %1529 = vmatprep.subr.mxu0 0.0
    %1530 = vmatpush1.msra.mxu0 0.0
    %1531 = vmatprep.subr.mxu0 0.0
    %1532 = vmatpush1.msra.mxu0 %v67
    %1533 = vmatprep.subr.mxu0 0.0
    %1534 = vmatpush1.msra.mxu0 %v66
    %1535 = vmatprep.subr.mxu0 0.0
    %1536 = vmatpush1.msra.mxu0 %v65
    %1537 = vmatprep.subr.mxu0 0.0
    %1538 = vmatpush1.msra.mxu0 %v64
    %1539 = vmatprep.subr.mxu0 0.0
    %1540 = vmatpush2.msra.mxu0 0.0
    %1541 = vmatprep.subr.mxu0 0.0
    %1542 = vmatpush2.msra.mxu0 0.0
    %1543 = vmatprep.subr.mxu0 0.0
    %1544 = vmatpush2.msra.mxu0 0.0
    %1545 = vmatprep.subr.mxu0 0.0
    %1546 = vmatpush2.msra.mxu0 0.0
    %1547 = vmatprep.subr.mxu0 0.0
    %1548 = vmatpush2.msra.mxu0 0.0
    %1549 = vmatprep.subr.mxu0 0.0
    %1550 = vmatpush2.msra.mxu0 0.0
    %1551 = vmatprep.subr.mxu0 0.0
    %1552 = vmatpush2.msra.mxu0 0.0
    %1553 = vmatprep.subr.mxu0 0.0
    %1554 = vmatpush2.msra.mxu0 0.0
    %1555 = vmatprep.subr.mxu0 0.0
    %1556 = vmatpush2.msra.mxu0 0.0
    %1557 = vmatprep.subr.mxu0 0.0
    %1558 = vmatpush2.msra.mxu0 0.0
    %1559 = vmatprep.subr.mxu0 0.0
    %1560 = vmatpush2.msra.mxu0 0.0
    %1561 = vmatprep.subr.mxu0 0.0
    %1562 = vmatpush2.msra.mxu0 0.0
    %1563 = vmatprep.subr.mxu0 0.0
    %1564 = vmatpush2.msra.mxu0 0.0
    %1565 = vmatprep.subr.mxu0 0.0
    %1566 = vmatpush2.msra.mxu0 0.0
    %1567 = vmatprep.subr.mxu0 0.0
    %1568 = vmatpush2.msra.mxu0 0.0
    %1569 = vmatprep.subr.mxu0 0.0
    %1570 = vmatpush2.msra.mxu0 0.0
    %1571 = vmatprep.mubr.f32.mxu0 0.0
    %1572 = vmatmul.mubr.f32.gmra.mxu0 %v1263
    %v1573 = vpop.f32.mrf.mxu0
    %v1574 = vadd.f32 0.0, %v1573
    %v1575 = vpop.f32.mrf.mxu0
    %1576 = vdwg.mxu0
    %v1577 = vadd.f32 %v1506, %v1574
    %v1578 = vadd.f32 %v1577, %v100
    %v1579 = vxor.u32 %v1578, 2147483648
    %v1580 = vmul.f32 %v1579, 1.442695
    %v1581 = vpow.pop %v1580
    %v1582 = vadd.f32 %v1581, 1.0
    %v1583 = vrcp.pop %v1582
    %v1584 = vmul.f32 1.0, %v1583
    %v1585 = vmul.f32 %v1584, 2.0
    %v1586 = vsub.f32 %v1585, 1.0
    %v1587 = vmul.f32 %v1584, %v1253
    %1589 = vrot.lane.b32.xlu0 %v1586, 64
    %v1590 = vpop.permute.xlu0 %1589
    %v1592 = vmul.f32 %v1584, %v1590
    %1594 = vrot.lane.b32.xlu0 %v1592, 32
    %v1595 = vpop.permute.xlu0 %1594
    %v1597 = vadd.f32 %v1587, %v1595
    %v1598 = vtanh.pop %v1597
    %1600 = vrot.lane.b32.xlu0 %v1598, 64
    %v1601 = vpop.permute.xlu0 %1600
    %v1603 = vmul.f32 %v1584, %v1601
    %1605 = vrot.lane.b32.xlu0 %v1603, 32
    %v1606 = vpop.permute.xlu0 %1605
    %v1607 = vsel %vm130, %v1606, 0
    %1609 = vmatprep.subr.mxu0 0.0
    %1610 = vmatpush1.msra.mxu0 0.0
    %1611 = vmatprep.subr.mxu0 0.0
    %1612 = vmatpush1.msra.mxu0 0.0
    %1613 = vmatprep.subr.mxu0 0.0
    %1614 = vmatpush1.msra.mxu0 0.0
    %1615 = vmatprep.subr.mxu0 0.0
    %1616 = vmatpush1.msra.mxu0 0.0
    %1617 = vmatprep.subr.mxu0 0.0
    %1618 = vmatpush1.msra.mxu0 0.0
    %1619 = vmatprep.subr.mxu0 0.0
    %1620 = vmatpush1.msra.mxu0 0.0
    %1621 = vmatprep.subr.mxu0 0.0
    %1622 = vmatpush1.msra.mxu0 0.0
    %1623 = vmatprep.subr.mxu0 0.0
    %1624 = vmatpush1.msra.mxu0 0.0
    %1625 = vmatprep.subr.mxu0 0.0
    %1626 = vmatpush1.msra.mxu0 0.0
    %1627 = vmatprep.subr.mxu0 0.0
    %1628 = vmatpush1.msra.mxu0 0.0
    %1629 = vmatprep.subr.mxu0 0.0
    %1630 = vmatpush1.msra.mxu0 0.0
    %1631 = vmatprep.subr.mxu0 0.0
    %1632 = vmatpush1.msra.mxu0 0.0
    %1633 = vmatprep.subr.mxu0 0.0
    %1634 = vmatpush1.msra.mxu0 %v71
    %1635 = vmatprep.subr.mxu0 0.0
    %1636 = vmatpush1.msra.mxu0 %v70
    %1637 = vmatprep.subr.mxu0 0.0
    %1638 = vmatpush1.msra.mxu0 %v69
    %1639 = vmatprep.subr.mxu0 0.0
    %1640 = vmatpush1.msra.mxu0 %v68
    %1641 = vmatprep.subr.mxu0 0.0
    %1642 = vmatpush2.msra.mxu0 0.0
    %1643 = vmatprep.subr.mxu0 0.0
    %1644 = vmatpush2.msra.mxu0 0.0
    %1645 = vmatprep.subr.mxu0 0.0
    %1646 = vmatpush2.msra.mxu0 0.0
    %1647 = vmatprep.subr.mxu0 0.0
    %1648 = vmatpush2.msra.mxu0 0.0
    %1649 = vmatprep.subr.mxu0 0.0
    %1650 = vmatpush2.msra.mxu0 0.0
    %1651 = vmatprep.subr.mxu0 0.0
    %1652 = vmatpush2.msra.mxu0 0.0
    %1653 = vmatprep.subr.mxu0 0.0
    %1654 = vmatpush2.msra.mxu0 0.0
    %1655 = vmatprep.subr.mxu0 0.0
    %1656 = vmatpush2.msra.mxu0 0.0
    %1657 = vmatprep.subr.mxu0 0.0
    %1658 = vmatpush2.msra.mxu0 0.0
    %1659 = vmatprep.subr.mxu0 0.0
    %1660 = vmatpush2.msra.mxu0 0.0
    %1661 = vmatprep.subr.mxu0 0.0
    %1662 = vmatpush2.msra.mxu0 0.0
    %1663 = vmatprep.subr.mxu0 0.0
    %1664 = vmatpush2.msra.mxu0 0.0
    %1665 = vmatprep.subr.mxu0 0.0
    %1666 = vmatpush2.msra.mxu0 0.0
    %1667 = vmatprep.subr.mxu0 0.0
    %1668 = vmatpush2.msra.mxu0 0.0
    %1669 = vmatprep.subr.mxu0 0.0
    %1670 = vmatpush2.msra.mxu0 0.0
    %1671 = vmatprep.subr.mxu0 0.0
    %1672 = vmatpush2.msra.mxu0 0.0
    %1673 = vmatprep.mubr.f32.mxu0 0.0
    %1674 = vmatmul.mubr.f32.gmra.mxu0 %v1607
    %v1675 = vpop.f32.mrf.mxu0
    %v1676 = vadd.f32 %v107, %v1675
    %v1677 = vpop.f32.mrf.mxu0
    %1678 = vdwg.mxu0
    %v1679 = vmax.f32 %v1676, 0.0
    %v1681 = vsel %vm307, %v1679, 0
    %1683 = vmatprep.subr.mxu0 0.0
    %1684 = vmatpush1.msra.mxu0 0.0
    %1685 = vmatprep.subr.mxu0 0.0
    %1686 = vmatpush1.msra.mxu0 0.0
    %1687 = vmatprep.subr.mxu0 0.0
    %1688 = vmatpush1.msra.mxu0 0.0
    %1689 = vmatprep.subr.mxu0 0.0
    %1690 = vmatpush1.msra.mxu0 0.0
    %1691 = vmatprep.subr.mxu0 0.0
    %1692 = vmatpush1.msra.mxu0 0.0
    %1693 = vmatprep.subr.mxu0 0.0
    %1694 = vmatpush1.msra.mxu0 0.0
    %1695 = vmatprep.subr.mxu0 0.0
    %1696 = vmatpush1.msra.mxu0 0.0
    %1697 = vmatprep.subr.mxu0 0.0
    %1698 = vmatpush1.msra.mxu0 0.0
    %1699 = vmatprep.subr.mxu0 0.0
    %1700 = vmatpush1.msra.mxu0 %v79
    %1701 = vmatprep.subr.mxu0 0.0
    %1702 = vmatpush1.msra.mxu0 %v78
    %1703 = vmatprep.subr.mxu0 0.0
    %1704 = vmatpush1.msra.mxu0 %v77
    %1705 = vmatprep.subr.mxu0 0.0
    %1706 = vmatpush1.msra.mxu0 %v76
    %1707 = vmatprep.subr.mxu0 0.0
    %1708 = vmatpush1.msra.mxu0 %v75
    %1709 = vmatprep.subr.mxu0 0.0
    %1710 = vmatpush1.msra.mxu0 %v74
    %1711 = vmatprep.subr.mxu0 0.0
    %1712 = vmatpush1.msra.mxu0 %v73
    %1713 = vmatprep.subr.mxu0 0.0
    %1714 = vmatpush1.msra.mxu0 %v72
    %1715 = vmatprep.subr.mxu0 0.0
    %1716 = vmatpush2.msra.mxu0 0.0
    %1717 = vmatprep.subr.mxu0 0.0
    %1718 = vmatpush2.msra.mxu0 0.0
    %1719 = vmatprep.subr.mxu0 0.0
    %1720 = vmatpush2.msra.mxu0 0.0
    %1721 = vmatprep.subr.mxu0 0.0
    %1722 = vmatpush2.msra.mxu0 0.0
    %1723 = vmatprep.subr.mxu0 0.0
    %1724 = vmatpush2.msra.mxu0 0.0
    %1725 = vmatprep.subr.mxu0 0.0
    %1726 = vmatpush2.msra.mxu0 0.0
    %1727 = vmatprep.subr.mxu0 0.0
    %1728 = vmatpush2.msra.mxu0 0.0
    %1729 = vmatprep.subr.mxu0 0.0
    %1730 = vmatpush2.msra.mxu0 0.0
    %1731 = vmatprep.subr.mxu0 0.0
    %1732 = vmatpush2.msra.mxu0 0.0
    %1733 = vmatprep.subr.mxu0 0.0
    %1734 = vmatpush2.msra.mxu0 0.0
    %1735 = vmatprep.subr.mxu0 0.0
    %1736 = vmatpush2.msra.mxu0 0.0
    %1737 = vmatprep.subr.mxu0 0.0
    %1738 = vmatpush2.msra.mxu0 0.0
    %1739 = vmatprep.subr.mxu0 0.0
    %1740 = vmatpush2.msra.mxu0 0.0
    %1741 = vmatprep.subr.mxu0 0.0
    %1742 = vmatpush2.msra.mxu0 0.0
    %1743 = vmatprep.subr.mxu0 0.0
    %1744 = vmatpush2.msra.mxu0 0.0
    %1745 = vmatprep.subr.mxu0 0.0
    %1746 = vmatpush2.msra.mxu0 0.0
    %1747 = vmatprep.mubr.f32.mxu0 0.0
    %1748 = vmatmul.mubr.f32.gmra.mxu0 %v1681
    %v1749 = vpop.f32.mrf.mxu0
    %v1750 = vadd.f32 %v114, %v1749
    %v1751 = vpop.f32.mrf.mxu0
    %1752 = vdwg.mxu0
    %v1753 = vmax.f32 %v1750, 0.0
    %v1755 = vsel %vm307, %v1753, 0
    %1757 = vmatprep.subr.mxu0 0.0
    %1758 = vmatpush1.msra.mxu0 0.0
    %1759 = vmatprep.subr.mxu0 0.0
    %1760 = vmatpush1.msra.mxu0 0.0
    %1761 = vmatprep.subr.mxu0 0.0
    %1762 = vmatpush1.msra.mxu0 0.0
    %1763 = vmatprep.subr.mxu0 0.0
    %1764 = vmatpush1.msra.mxu0 0.0
    %1765 = vmatprep.subr.mxu0 0.0
    %1766 = vmatpush1.msra.mxu0 0.0
    %1767 = vmatprep.subr.mxu0 0.0
    %1768 = vmatpush1.msra.mxu0 0.0
    %1769 = vmatprep.subr.mxu0 0.0
    %1770 = vmatpush1.msra.mxu0 0.0
    %1771 = vmatprep.subr.mxu0 0.0
    %1772 = vmatpush1.msra.mxu0 0.0
    %1773 = vmatprep.subr.mxu0 0.0
    %1774 = vmatpush1.msra.mxu0 %v87
    %1775 = vmatprep.subr.mxu0 0.0
    %1776 = vmatpush1.msra.mxu0 %v86
    %1777 = vmatprep.subr.mxu0 0.0
    %1778 = vmatpush1.msra.mxu0 %v85
    %1779 = vmatprep.subr.mxu0 0.0
    %1780 = vmatpush1.msra.mxu0 %v84
    %1781 = vmatprep.subr.mxu0 0.0
    %1782 = vmatpush1.msra.mxu0 %v83
    %1783 = vmatprep.subr.mxu0 0.0
    %1784 = vmatpush1.msra.mxu0 %v82
    %1785 = vmatprep.subr.mxu0 0.0
    %1786 = vmatpush1.msra.mxu0 %v81
    %1787 = vmatprep.subr.mxu0 0.0
    %1788 = vmatpush1.msra.mxu0 %v80
    %1789 = vmatprep.subr.mxu0 0.0
    %1790 = vmatpush2.msra.mxu0 0.0
    %1791 = vmatprep.subr.mxu0 0.0
    %1792 = vmatpush2.msra.mxu0 0.0
    %1793 = vmatprep.subr.mxu0 0.0
    %1794 = vmatpush2.msra.mxu0 0.0
    %1795 = vmatprep.subr.mxu0 0.0
    %1796 = vmatpush2.msra.mxu0 0.0
    %1797 = vmatprep.subr.mxu0 0.0
    %1798 = vmatpush2.msra.mxu0 0.0
    %1799 = vmatprep.subr.mxu0 0.0
    %1800 = vmatpush2.msra.mxu0 0.0
    %1801 = vmatprep.subr.mxu0 0.0
    %1802 = vmatpush2.msra.mxu0 0.0
    %1803 = vmatprep.subr.mxu0 0.0
    %1804 = vmatpush2.msra.mxu0 0.0
    %1805 = vmatprep.subr.mxu0 0.0
    %1806 = vmatpush2.msra.mxu0 0.0
    %1807 = vmatprep.subr.mxu0 0.0
    %1808 = vmatpush2.msra.mxu0 0.0
    %1809 = vmatprep.subr.mxu0 0.0
    %1810 = vmatpush2.msra.mxu0 0.0
    %1811 = vmatprep.subr.mxu0 0.0
    %1812 = vmatpush2.msra.mxu0 0.0
    %1813 = vmatprep.subr.mxu0 0.0
    %1814 = vmatpush2.msra.mxu0 0.0
    %1815 = vmatprep.subr.mxu0 0.0
    %1816 = vmatpush2.msra.mxu0 0.0
    %1817 = vmatprep.subr.mxu0 0.0
    %1818 = vmatpush2.msra.mxu0 0.0
    %1819 = vmatprep.subr.mxu0 0.0
    %1820 = vmatpush2.msra.mxu0 0.0
    %1821 = vmatprep.mubr.f32.mxu0 0.0
    %1822 = vmatmul.mubr.f32.gmra.mxu0 %v1755
    %v1823 = vpop.f32.mrf.mxu0
    %v1824 = vadd.f32 %v121, %v1823
    %v1825 = vpop.f32.mrf.mxu0
    %1826 = vdwg.mxu0
    %v1827 = vsel %vm455, %v1824, -inf
    %1828 = vmax.xlane.f32.xlu0 %v1827
    %v1829 = vpop.xlane.xlu0 %1828
    %v1830 = vsub.f32 %v1824, %v1829
    %v1831 = vmul.f32 %v1830, 1.442695
    %v1832 = vpow.pop %v1831
    %v1833 = vsel %vm455, %v1832, 0.0
    %1834 = vadd.xlane.f32.xlu0 %v1833
    %v1835 = vpop.xlane.xlu0 %1834
    %v1836 = vrcp.pop %v1835
    %v1837 = vmul.f32 %v1832, %v1836
    %1839 = vrot.lane.b32.xlu0 %v1837, 16
    %v1840 = vpop.permute.xlu0 %1839
    %vm1842 = vcmask 156800
    %1843 = vst.msk [vmem:[#allocation7] sm:$0x3] %vm1842, %v1840
    %v1844 = vld [vmem:[%s0] sm:$0x3]
    %1846 = vset.pattern.permute.xlu0 5
    %1847 = vperm.xlu0 %1846, %v1844
    %v1848 = vpop.permute.xlu0 %1847
    %v1850 = vmul.f32 %v1848, %v93
    %1851 = vmatprep.subr.mxu0 0.0
    %1852 = vmatpush1.msra.mxu0 0.0
    %1853 = vmatprep.subr.mxu0 0.0
    %1854 = vmatpush1.msra.mxu0 0.0
    %1855 = vmatprep.subr.mxu0 0.0
    %1856 = vmatpush1.msra.mxu0 0.0
    %1857 = vmatprep.subr.mxu0 0.0
    %1858 = vmatpush1.msra.mxu0 0.0
    %1859 = vmatprep.subr.mxu0 0.0
    %1860 = vmatpush1.msra.mxu0 0.0
    %1861 = vmatprep.subr.mxu0 0.0
    %1862 = vmatpush1.msra.mxu0 0.0
    %1863 = vmatprep.subr.mxu0 0.0
    %1864 = vmatpush1.msra.mxu0 0.0
    %1865 = vmatprep.subr.mxu0 0.0
    %1866 = vmatpush1.msra.mxu0 0.0
    %1867 = vmatprep.subr.mxu0 0.0
    %1868 = vmatpush1.msra.mxu0 0.0
    %1869 = vmatprep.subr.mxu0 0.0
    %1870 = vmatpush1.msra.mxu0 0.0
    %1871 = vmatprep.subr.mxu0 0.0
    %1872 = vmatpush1.msra.mxu0 0.0
    %1873 = vmatprep.subr.mxu0 0.0
    %1874 = vmatpush1.msra.mxu0 0.0
    %1875 = vmatprep.subr.mxu0 0.0
    %1876 = vmatpush1.msra.mxu0 %v67
    %1877 = vmatprep.subr.mxu0 0.0
    %1878 = vmatpush1.msra.mxu0 %v66
    %1879 = vmatprep.subr.mxu0 0.0
    %1880 = vmatpush1.msra.mxu0 %v65
    %1881 = vmatprep.subr.mxu0 0.0
    %1882 = vmatpush1.msra.mxu0 %v64
    %1883 = vmatprep.subr.mxu0 0.0
    %1884 = vmatpush2.msra.mxu0 0.0
    %1885 = vmatprep.subr.mxu0 0.0
    %1886 = vmatpush2.msra.mxu0 0.0
    %1887 = vmatprep.subr.mxu0 0.0
    %1888 = vmatpush2.msra.mxu0 0.0
    %1889 = vmatprep.subr.mxu0 0.0
    %1890 = vmatpush2.msra.mxu0 0.0
    %1891 = vmatprep.subr.mxu0 0.0
    %1892 = vmatpush2.msra.mxu0 0.0
    %1893 = vmatprep.subr.mxu0 0.0
    %1894 = vmatpush2.msra.mxu0 0.0
    %1895 = vmatprep.subr.mxu0 0.0
    %1896 = vmatpush2.msra.mxu0 0.0
    %1897 = vmatprep.subr.mxu0 0.0
    %1898 = vmatpush2.msra.mxu0 0.0
    %1899 = vmatprep.subr.mxu0 0.0
    %1900 = vmatpush2.msra.mxu0 0.0
    %1901 = vmatprep.subr.mxu0 0.0
    %1902 = vmatpush2.msra.mxu0 0.0
    %1903 = vmatprep.subr.mxu0 0.0
    %1904 = vmatpush2.msra.mxu0 0.0
    %1905 = vmatprep.subr.mxu0 0.0
    %1906 = vmatpush2.msra.mxu0 0.0
    %1907 = vmatprep.subr.mxu0 0.0
    %1908 = vmatpush2.msra.mxu0 0.0
    %1909 = vmatprep.subr.mxu0 0.0
    %1910 = vmatpush2.msra.mxu0 0.0
    %1911 = vmatprep.subr.mxu0 0.0
    %1912 = vmatpush2.msra.mxu0 0.0
    %1913 = vmatprep.subr.mxu0 0.0
    %1914 = vmatpush2.msra.mxu0 0.0
    %1915 = vmatprep.mubr.f32.mxu0 0.0
    %1916 = vmatmul.mubr.f32.gmra.mxu0 %v1607
    %v1917 = vpop.f32.mrf.mxu0
    %v1918 = vadd.f32 0.0, %v1917
    %v1919 = vpop.f32.mrf.mxu0
    %1920 = vdwg.mxu0
    %v1921 = vadd.f32 %v1850, %v1918
    %v1922 = vadd.f32 %v1921, %v100
    %v1923 = vxor.u32 %v1922, 2147483648
    %v1924 = vmul.f32 %v1923, 1.442695
    %v1925 = vpow.pop %v1924
    %v1926 = vadd.f32 %v1925, 1.0
    %v1927 = vrcp.pop %v1926
    %v1928 = vmul.f32 1.0, %v1927
    %v1929 = vmul.f32 %v1928, 2.0
    %v1930 = vsub.f32 %v1929, 1.0
    %v1931 = vmul.f32 %v1928, %v1597
    %1933 = vrot.lane.b32.xlu0 %v1930, 64
    %v1934 = vpop.permute.xlu0 %1933
    %v1936 = vmul.f32 %v1928, %v1934
    %1938 = vrot.lane.b32.xlu0 %v1936, 32
    %v1939 = vpop.permute.xlu0 %1938
    %v1941 = vadd.f32 %v1931, %v1939
    %v1942 = vtanh.pop %v1941
    %1944 = vrot.lane.b32.xlu0 %v1942, 64
    %v1945 = vpop.permute.xlu0 %1944
    %v1947 = vmul.f32 %v1928, %v1945
    %1949 = vrot.lane.b32.xlu0 %v1947, 32
    %v1950 = vpop.permute.xlu0 %1949
    %v1951 = vsel %vm130, %v1950, 0
    %1953 = vmatprep.subr.mxu0 0.0
    %1954 = vmatpush1.msra.mxu0 0.0
    %1955 = vmatprep.subr.mxu0 0.0
    %1956 = vmatpush1.msra.mxu0 0.0
    %1957 = vmatprep.subr.mxu0 0.0
    %1958 = vmatpush1.msra.mxu0 0.0
    %1959 = vmatprep.subr.mxu0 0.0
    %1960 = vmatpush1.msra.mxu0 0.0
    %1961 = vmatprep.subr.mxu0 0.0
    %1962 = vmatpush1.msra.mxu0 0.0
    %1963 = vmatprep.subr.mxu0 0.0
    %1964 = vmatpush1.msra.mxu0 0.0
    %1965 = vmatprep.subr.mxu0 0.0
    %1966 = vmatpush1.msra.mxu0 0.0
    %1967 = vmatprep.subr.mxu0 0.0
    %1968 = vmatpush1.msra.mxu0 0.0
    %1969 = vmatprep.subr.mxu0 0.0
    %1970 = vmatpush1.msra.mxu0 0.0
    %1971 = vmatprep.subr.mxu0 0.0
    %1972 = vmatpush1.msra.mxu0 0.0
    %1973 = vmatprep.subr.mxu0 0.0
    %1974 = vmatpush1.msra.mxu0 0.0
    %1975 = vmatprep.subr.mxu0 0.0
    %1976 = vmatpush1.msra.mxu0 0.0
    %1977 = vmatprep.subr.mxu0 0.0
    %1978 = vmatpush1.msra.mxu0 %v71
    %1979 = vmatprep.subr.mxu0 0.0
    %1980 = vmatpush1.msra.mxu0 %v70
    %1981 = vmatprep.subr.mxu0 0.0
    %1982 = vmatpush1.msra.mxu0 %v69
    %1983 = vmatprep.subr.mxu0 0.0
    %1984 = vmatpush1.msra.mxu0 %v68
    %1985 = vmatprep.subr.mxu0 0.0
    %1986 = vmatpush2.msra.mxu0 0.0
    %1987 = vmatprep.subr.mxu0 0.0
    %1988 = vmatpush2.msra.mxu0 0.0
    %1989 = vmatprep.subr.mxu0 0.0
    %1990 = vmatpush2.msra.mxu0 0.0
    %1991 = vmatprep.subr.mxu0 0.0
    %1992 = vmatpush2.msra.mxu0 0.0
    %1993 = vmatprep.subr.mxu0 0.0
    %1994 = vmatpush2.msra.mxu0 0.0
    %1995 = vmatprep.subr.mxu0 0.0
    %1996 = vmatpush2.msra.mxu0 0.0
    %1997 = vmatprep.subr.mxu0 0.0
    %1998 = vmatpush2.msra.mxu0 0.0
    %1999 = vmatprep.subr.mxu0 0.0
    %2000 = vmatpush2.msra.mxu0 0.0
    %2001 = vmatprep.subr.mxu0 0.0
    %2002 = vmatpush2.msra.mxu0 0.0
    %2003 = vmatprep.subr.mxu0 0.0
    %2004 = vmatpush2.msra.mxu0 0.0
    %2005 = vmatprep.subr.mxu0 0.0
    %2006 = vmatpush2.msra.mxu0 0.0
    %2007 = vmatprep.subr.mxu0 0.0
    %2008 = vmatpush2.msra.mxu0 0.0
    %2009 = vmatprep.subr.mxu0 0.0
    %2010 = vmatpush2.msra.mxu0 0.0
    %2011 = vmatprep.subr.mxu0 0.0
    %2012 = vmatpush2.msra.mxu0 0.0
    %2013 = vmatprep.subr.mxu0 0.0
    %2014 = vmatpush2.msra.mxu0 0.0
    %2015 = vmatprep.subr.mxu0 0.0
    %2016 = vmatpush2.msra.mxu0 0.0
    %2017 = vmatprep.mubr.f32.mxu0 0.0
    %2018 = vmatmul.mubr.f32.gmra.mxu0 %v1951
    %v2019 = vpop.f32.mrf.mxu0
    %v2020 = vadd.f32 %v107, %v2019
    %v2021 = vpop.f32.mrf.mxu0
    %2022 = vdwg.mxu0
    %v2023 = vmax.f32 %v2020, 0.0
    %v2025 = vsel %vm307, %v2023, 0
    %2027 = vmatprep.subr.mxu0 0.0
    %2028 = vmatpush1.msra.mxu0 0.0
    %2029 = vmatprep.subr.mxu0 0.0
    %2030 = vmatpush1.msra.mxu0 0.0
    %2031 = vmatprep.subr.mxu0 0.0
    %2032 = vmatpush1.msra.mxu0 0.0
    %2033 = vmatprep.subr.mxu0 0.0
    %2034 = vmatpush1.msra.mxu0 0.0
    %2035 = vmatprep.subr.mxu0 0.0
    %2036 = vmatpush1.msra.mxu0 0.0
    %2037 = vmatprep.subr.mxu0 0.0
    %2038 = vmatpush1.msra.mxu0 0.0
    %2039 = vmatprep.subr.mxu0 0.0
    %2040 = vmatpush1.msra.mxu0 0.0
    %2041 = vmatprep.subr.mxu0 0.0
    %2042 = vmatpush1.msra.mxu0 0.0
    %2043 = vmatprep.subr.mxu0 0.0
    %2044 = vmatpush1.msra.mxu0 %v79
    %2045 = vmatprep.subr.mxu0 0.0
    %2046 = vmatpush1.msra.mxu0 %v78
    %2047 = vmatprep.subr.mxu0 0.0
    %2048 = vmatpush1.msra.mxu0 %v77
    %2049 = vmatprep.subr.mxu0 0.0
    %2050 = vmatpush1.msra.mxu0 %v76
    %2051 = vmatprep.subr.mxu0 0.0
    %2052 = vmatpush1.msra.mxu0 %v75
    %2053 = vmatprep.subr.mxu0 0.0
    %2054 = vmatpush1.msra.mxu0 %v74
    %2055 = vmatprep.subr.mxu0 0.0
    %2056 = vmatpush1.msra.mxu0 %v73
    %2057 = vmatprep.subr.mxu0 0.0
    %2058 = vmatpush1.msra.mxu0 %v72
    %2059 = vmatprep.subr.mxu0 0.0
    %2060 = vmatpush2.msra.mxu0 0.0
    %2061 = vmatprep.subr.mxu0 0.0
    %2062 = vmatpush2.msra.mxu0 0.0
    %2063 = vmatprep.subr.mxu0 0.0
    %2064 = vmatpush2.msra.mxu0 0.0
    %2065 = vmatprep.subr.mxu0 0.0
    %2066 = vmatpush2.msra.mxu0 0.0
    %2067 = vmatprep.subr.mxu0 0.0
    %2068 = vmatpush2.msra.mxu0 0.0
    %2069 = vmatprep.subr.mxu0 0.0
    %2070 = vmatpush2.msra.mxu0 0.0
    %2071 = vmatprep.subr.mxu0 0.0
    %2072 = vmatpush2.msra.mxu0 0.0
    %2073 = vmatprep.subr.mxu0 0.0
    %2074 = vmatpush2.msra.mxu0 0.0
    %2075 = vmatprep.subr.mxu0 0.0
    %2076 = vmatpush2.msra.mxu0 0.0
    %2077 = vmatprep.subr.mxu0 0.0
    %2078 = vmatpush2.msra.mxu0 0.0
    %2079 = vmatprep.subr.mxu0 0.0
    %2080 = vmatpush2.msra.mxu0 0.0
    %2081 = vmatprep.subr.mxu0 0.0
    %2082 = vmatpush2.msra.mxu0 0.0
    %2083 = vmatprep.subr.mxu0 0.0
    %2084 = vmatpush2.msra.mxu0 0.0
    %2085 = vmatprep.subr.mxu0 0.0
    %2086 = vmatpush2.msra.mxu0 0.0
    %2087 = vmatprep.subr.mxu0 0.0
    %2088 = vmatpush2.msra.mxu0 0.0
    %2089 = vmatprep.subr.mxu0 0.0
    %2090 = vmatpush2.msra.mxu0 0.0
    %2091 = vmatprep.mubr.f32.mxu0 0.0
    %2092 = vmatmul.mubr.f32.gmra.mxu0 %v2025
    %v2093 = vpop.f32.mrf.mxu0
    %v2094 = vadd.f32 %v114, %v2093
    %v2095 = vpop.f32.mrf.mxu0
    %2096 = vdwg.mxu0
    %v2097 = vmax.f32 %v2094, 0.0
    %v2099 = vsel %vm307, %v2097, 0
    %2101 = vmatprep.subr.mxu0 0.0
    %2102 = vmatpush1.msra.mxu0 0.0
    %2103 = vmatprep.subr.mxu0 0.0
    %2104 = vmatpush1.msra.mxu0 0.0
    %2105 = vmatprep.subr.mxu0 0.0
    %2106 = vmatpush1.msra.mxu0 0.0
    %2107 = vmatprep.subr.mxu0 0.0
    %2108 = vmatpush1.msra.mxu0 0.0
    %2109 = vmatprep.subr.mxu0 0.0
    %2110 = vmatpush1.msra.mxu0 0.0
    %2111 = vmatprep.subr.mxu0 0.0
    %2112 = vmatpush1.msra.mxu0 0.0
    %2113 = vmatprep.subr.mxu0 0.0
    %2114 = vmatpush1.msra.mxu0 0.0
    %2115 = vmatprep.subr.mxu0 0.0
    %2116 = vmatpush1.msra.mxu0 0.0
    %2117 = vmatprep.subr.mxu0 0.0
    %2118 = vmatpush1.msra.mxu0 %v87
    %2119 = vmatprep.subr.mxu0 0.0
    %2120 = vmatpush1.msra.mxu0 %v86
    %2121 = vmatprep.subr.mxu0 0.0
    %2122 = vmatpush1.msra.mxu0 %v85
    %2123 = vmatprep.subr.mxu0 0.0
    %2124 = vmatpush1.msra.mxu0 %v84
    %2125 = vmatprep.subr.mxu0 0.0
    %2126 = vmatpush1.msra.mxu0 %v83
    %2127 = vmatprep.subr.mxu0 0.0
    %2128 = vmatpush1.msra.mxu0 %v82
    %2129 = vmatprep.subr.mxu0 0.0
    %2130 = vmatpush1.msra.mxu0 %v81
    %2131 = vmatprep.subr.mxu0 0.0
    %2132 = vmatpush1.msra.mxu0 %v80
    %2133 = vmatprep.subr.mxu0 0.0
    %2134 = vmatpush2.msra.mxu0 0.0
    %2135 = vmatprep.subr.mxu0 0.0
    %2136 = vmatpush2.msra.mxu0 0.0
    %2137 = vmatprep.subr.mxu0 0.0
    %2138 = vmatpush2.msra.mxu0 0.0
    %2139 = vmatprep.subr.mxu0 0.0
    %2140 = vmatpush2.msra.mxu0 0.0
    %2141 = vmatprep.subr.mxu0 0.0
    %2142 = vmatpush2.msra.mxu0 0.0
    %2143 = vmatprep.subr.mxu0 0.0
    %2144 = vmatpush2.msra.mxu0 0.0
    %2145 = vmatprep.subr.mxu0 0.0
    %2146 = vmatpush2.msra.mxu0 0.0
    %2147 = vmatprep.subr.mxu0 0.0
    %2148 = vmatpush2.msra.mxu0 0.0
    %2149 = vmatprep.subr.mxu0 0.0
    %2150 = vmatpush2.msra.mxu0 0.0
    %2151 = vmatprep.subr.mxu0 0.0
    %2152 = vmatpush2.msra.mxu0 0.0
    %2153 = vmatprep.subr.mxu0 0.0
    %2154 = vmatpush2.msra.mxu0 0.0
    %2155 = vmatprep.subr.mxu0 0.0
    %2156 = vmatpush2.msra.mxu0 0.0
    %2157 = vmatprep.subr.mxu0 0.0
    %2158 = vmatpush2.msra.mxu0 0.0
    %2159 = vmatprep.subr.mxu0 0.0
    %2160 = vmatpush2.msra.mxu0 0.0
    %2161 = vmatprep.subr.mxu0 0.0
    %2162 = vmatpush2.msra.mxu0 0.0
    %2163 = vmatprep.subr.mxu0 0.0
    %2164 = vmatpush2.msra.mxu0 0.0
    %2165 = vmatprep.mubr.f32.mxu0 0.0
    %2166 = vmatmul.mubr.f32.gmra.mxu0 %v2099
    %v2167 = vpop.f32.mrf.mxu0
    %v2168 = vadd.f32 %v121, %v2167
    %v2169 = vpop.f32.mrf.mxu0
    %2170 = vdwg.mxu0
    %v2171 = vsel %vm455, %v2168, -inf
    %2172 = vmax.xlane.f32.xlu0 %v2171
    %v2173 = vpop.xlane.xlu0 %2172
    %v2174 = vsub.f32 %v2168, %v2173
    %v2175 = vmul.f32 %v2174, 1.442695
    %v2176 = vpow.pop %v2175
    %v2177 = vsel %vm455, %v2176, 0.0
    %2178 = vadd.xlane.f32.xlu0 %v2177
    %v2179 = vpop.xlane.xlu0 %2178
    %v2180 = vrcp.pop %v2179
    %v2181 = vmul.f32 %v2176, %v2180
    %2183 = vrot.lane.b32.xlu0 %v2181, 20
    %v2184 = vpop.permute.xlu0 %2183
    %vm2186 = vcmask 189600
    %2187 = vst.msk [vmem:[#allocation7] sm:$0x3] %vm2186, %v2184
    %v2188 = vld [vmem:[%s0] sm:$0x3]
    %2190 = vset.pattern.permute.xlu0 6
    %2191 = vperm.xlu0 %2190, %v2188
    %v2192 = vpop.permute.xlu0 %2191
    %v2194 = vmul.f32 %v2192, %v93
    %2195 = vmatprep.subr.mxu0 0.0
    %2196 = vmatpush1.msra.mxu0 0.0
    %2197 = vmatprep.subr.mxu0 0.0
    %2198 = vmatpush1.msra.mxu0 0.0
    %2199 = vmatprep.subr.mxu0 0.0
    %2200 = vmatpush1.msra.mxu0 0.0
    %2201 = vmatprep.subr.mxu0 0.0
    %2202 = vmatpush1.msra.mxu0 0.0
    %2203 = vmatprep.subr.mxu0 0.0
    %2204 = vmatpush1.msra.mxu0 0.0
    %2205 = vmatprep.subr.mxu0 0.0
    %2206 = vmatpush1.msra.mxu0 0.0
    %2207 = vmatprep.subr.mxu0 0.0
    %2208 = vmatpush1.msra.mxu0 0.0
    %2209 = vmatprep.subr.mxu0 0.0
    %2210 = vmatpush1.msra.mxu0 0.0
    %2211 = vmatprep.subr.mxu0 0.0
    %2212 = vmatpush1.msra.mxu0 0.0
    %2213 = vmatprep.subr.mxu0 0.0
    %2214 = vmatpush1.msra.mxu0 0.0
    %2215 = vmatprep.subr.mxu0 0.0
    %2216 = vmatpush1.msra.mxu0 0.0
    %2217 = vmatprep.subr.mxu0 0.0
    %2218 = vmatpush1.msra.mxu0 0.0
    %2219 = vmatprep.subr.mxu0 0.0
    %2220 = vmatpush1.msra.mxu0 %v67
    %2221 = vmatprep.subr.mxu0 0.0
    %2222 = vmatpush1.msra.mxu0 %v66
    %2223 = vmatprep.subr.mxu0 0.0
    %2224 = vmatpush1.msra.mxu0 %v65
    %2225 = vmatprep.subr.mxu0 0.0
    %2226 = vmatpush1.msra.mxu0 %v64
    %2227 = vmatprep.subr.mxu0 0.0
    %2228 = vmatpush2.msra.mxu0 0.0
    %2229 = vmatprep.subr.mxu0 0.0
    %2230 = vmatpush2.msra.mxu0 0.0
    %2231 = vmatprep.subr.mxu0 0.0
    %2232 = vmatpush2.msra.mxu0 0.0
    %2233 = vmatprep.subr.mxu0 0.0
    %2234 = vmatpush2.msra.mxu0 0.0
    %2235 = vmatprep.subr.mxu0 0.0
    %2236 = vmatpush2.msra.mxu0 0.0
    %2237 = vmatprep.subr.mxu0 0.0
    %2238 = vmatpush2.msra.mxu0 0.0
    %2239 = vmatprep.subr.mxu0 0.0
    %2240 = vmatpush2.msra.mxu0 0.0
    %2241 = vmatprep.subr.mxu0 0.0
    %2242 = vmatpush2.msra.mxu0 0.0
    %2243 = vmatprep.subr.mxu0 0.0
    %2244 = vmatpush2.msra.mxu0 0.0
    %2245 = vmatprep.subr.mxu0 0.0
    %2246 = vmatpush2.msra.mxu0 0.0
    %2247 = vmatprep.subr.mxu0 0.0
    %2248 = vmatpush2.msra.mxu0 0.0
    %2249 = vmatprep.subr.mxu0 0.0
    %2250 = vmatpush2.msra.mxu0 0.0
    %2251 = vmatprep.subr.mxu0 0.0
    %2252 = vmatpush2.msra.mxu0 0.0
    %2253 = vmatprep.subr.mxu0 0.0
    %2254 = vmatpush2.msra.mxu0 0.0
    %2255 = vmatprep.subr.mxu0 0.0
    %2256 = vmatpush2.msra.mxu0 0.0
    %2257 = vmatprep.subr.mxu0 0.0
    %2258 = vmatpush2.msra.mxu0 0.0
    %2259 = vmatprep.mubr.f32.mxu0 0.0
    %2260 = vmatmul.mubr.f32.gmra.mxu0 %v1951
    %v2261 = vpop.f32.mrf.mxu0
    %v2262 = vadd.f32 0.0, %v2261
    %v2263 = vpop.f32.mrf.mxu0
    %2264 = vdwg.mxu0
    %v2265 = vadd.f32 %v2194, %v2262
    %v2266 = vadd.f32 %v2265, %v100
    %v2267 = vxor.u32 %v2266, 2147483648
    %v2268 = vmul.f32 %v2267, 1.442695
    %v2269 = vpow.pop %v2268
    %v2270 = vadd.f32 %v2269, 1.0
    %v2271 = vrcp.pop %v2270
    %v2272 = vmul.f32 1.0, %v2271
    %v2273 = vmul.f32 %v2272, 2.0
    %v2274 = vsub.f32 %v2273, 1.0
    %v2275 = vmul.f32 %v2272, %v1941
    %2277 = vrot.lane.b32.xlu0 %v2274, 64
    %v2278 = vpop.permute.xlu0 %2277
    %v2280 = vmul.f32 %v2272, %v2278
    %2282 = vrot.lane.b32.xlu0 %v2280, 32
    %v2283 = vpop.permute.xlu0 %2282
    %v2285 = vadd.f32 %v2275, %v2283
    %v2286 = vtanh.pop %v2285
    %2288 = vrot.lane.b32.xlu0 %v2286, 64
    %v2289 = vpop.permute.xlu0 %2288
    %v2291 = vmul.f32 %v2272, %v2289
    %2293 = vrot.lane.b32.xlu0 %v2291, 32
    %v2294 = vpop.permute.xlu0 %2293
    %v2295 = vsel %vm130, %v2294, 0
    %2297 = vmatprep.subr.mxu0 0.0
    %2298 = vmatpush1.msra.mxu0 0.0
    %2299 = vmatprep.subr.mxu0 0.0
    %2300 = vmatpush1.msra.mxu0 0.0
    %2301 = vmatprep.subr.mxu0 0.0
    %2302 = vmatpush1.msra.mxu0 0.0
    %2303 = vmatprep.subr.mxu0 0.0
    %2304 = vmatpush1.msra.mxu0 0.0
    %2305 = vmatprep.subr.mxu0 0.0
    %2306 = vmatpush1.msra.mxu0 0.0
    %2307 = vmatprep.subr.mxu0 0.0
    %2308 = vmatpush1.msra.mxu0 0.0
    %2309 = vmatprep.subr.mxu0 0.0
    %2310 = vmatpush1.msra.mxu0 0.0
    %2311 = vmatprep.subr.mxu0 0.0
    %2312 = vmatpush1.msra.mxu0 0.0
    %2313 = vmatprep.subr.mxu0 0.0
    %2314 = vmatpush1.msra.mxu0 0.0
    %2315 = vmatprep.subr.mxu0 0.0
    %2316 = vmatpush1.msra.mxu0 0.0
    %2317 = vmatprep.subr.mxu0 0.0
    %2318 = vmatpush1.msra.mxu0 0.0
    %2319 = vmatprep.subr.mxu0 0.0
    %2320 = vmatpush1.msra.mxu0 0.0
    %2321 = vmatprep.subr.mxu0 0.0
    %2322 = vmatpush1.msra.mxu0 %v71
    %2323 = vmatprep.subr.mxu0 0.0
    %2324 = vmatpush1.msra.mxu0 %v70
    %2325 = vmatprep.subr.mxu0 0.0
    %2326 = vmatpush1.msra.mxu0 %v69
    %2327 = vmatprep.subr.mxu0 0.0
    %2328 = vmatpush1.msra.mxu0 %v68
    %2329 = vmatprep.subr.mxu0 0.0
    %2330 = vmatpush2.msra.mxu0 0.0
    %2331 = vmatprep.subr.mxu0 0.0
    %2332 = vmatpush2.msra.mxu0 0.0
    %2333 = vmatprep.subr.mxu0 0.0
    %2334 = vmatpush2.msra.mxu0 0.0
    %2335 = vmatprep.subr.mxu0 0.0
    %2336 = vmatpush2.msra.mxu0 0.0
    %2337 = vmatprep.subr.mxu0 0.0
    %2338 = vmatpush2.msra.mxu0 0.0
    %2339 = vmatprep.subr.mxu0 0.0
    %2340 = vmatpush2.msra.mxu0 0.0
    %2341 = vmatprep.subr.mxu0 0.0
    %2342 = vmatpush2.msra.mxu0 0.0
    %2343 = vmatprep.subr.mxu0 0.0
    %2344 = vmatpush2.msra.mxu0 0.0
    %2345 = vmatprep.subr.mxu0 0.0
    %2346 = vmatpush2.msra.mxu0 0.0
    %2347 = vmatprep.subr.mxu0 0.0
    %2348 = vmatpush2.msra.mxu0 0.0
    %2349 = vmatprep.subr.mxu0 0.0
    %2350 = vmatpush2.msra.mxu0 0.0
    %2351 = vmatprep.subr.mxu0 0.0
    %2352 = vmatpush2.msra.mxu0 0.0
    %2353 = vmatprep.subr.mxu0 0.0
    %2354 = vmatpush2.msra.mxu0 0.0
    %2355 = vmatprep.subr.mxu0 0.0
    %2356 = vmatpush2.msra.mxu0 0.0
    %2357 = vmatprep.subr.mxu0 0.0
    %2358 = vmatpush2.msra.mxu0 0.0
    %2359 = vmatprep.subr.mxu0 0.0
    %2360 = vmatpush2.msra.mxu0 0.0
    %2361 = vmatprep.mubr.f32.mxu0 0.0
    %2362 = vmatmul.mubr.f32.gmra.mxu0 %v2295
    %v2363 = vpop.f32.mrf.mxu0
    %v2364 = vadd.f32 %v107, %v2363
    %v2365 = vpop.f32.mrf.mxu0
    %2366 = vdwg.mxu0
    %v2367 = vmax.f32 %v2364, 0.0
    %v2369 = vsel %vm307, %v2367, 0
    %2371 = vmatprep.subr.mxu0 0.0
    %2372 = vmatpush1.msra.mxu0 0.0
    %2373 = vmatprep.subr.mxu0 0.0
    %2374 = vmatpush1.msra.mxu0 0.0
    %2375 = vmatprep.subr.mxu0 0.0
    %2376 = vmatpush1.msra.mxu0 0.0
    %2377 = vmatprep.subr.mxu0 0.0
    %2378 = vmatpush1.msra.mxu0 0.0
    %2379 = vmatprep.subr.mxu0 0.0
    %2380 = vmatpush1.msra.mxu0 0.0
    %2381 = vmatprep.subr.mxu0 0.0
    %2382 = vmatpush1.msra.mxu0 0.0
    %2383 = vmatprep.subr.mxu0 0.0
    %2384 = vmatpush1.msra.mxu0 0.0
    %2385 = vmatprep.subr.mxu0 0.0
    %2386 = vmatpush1.msra.mxu0 0.0
    %2387 = vmatprep.subr.mxu0 0.0
    %2388 = vmatpush1.msra.mxu0 %v79
    %2389 = vmatprep.subr.mxu0 0.0
    %2390 = vmatpush1.msra.mxu0 %v78
    %2391 = vmatprep.subr.mxu0 0.0
    %2392 = vmatpush1.msra.mxu0 %v77
    %2393 = vmatprep.subr.mxu0 0.0
    %2394 = vmatpush1.msra.mxu0 %v76
    %2395 = vmatprep.subr.mxu0 0.0
    %2396 = vmatpush1.msra.mxu0 %v75
    %2397 = vmatprep.subr.mxu0 0.0
    %2398 = vmatpush1.msra.mxu0 %v74
    %2399 = vmatprep.subr.mxu0 0.0
    %2400 = vmatpush1.msra.mxu0 %v73
    %2401 = vmatprep.subr.mxu0 0.0
    %2402 = vmatpush1.msra.mxu0 %v72
    %2403 = vmatprep.subr.mxu0 0.0
    %2404 = vmatpush2.msra.mxu0 0.0
    %2405 = vmatprep.subr.mxu0 0.0
    %2406 = vmatpush2.msra.mxu0 0.0
    %2407 = vmatprep.subr.mxu0 0.0
    %2408 = vmatpush2.msra.mxu0 0.0
    %2409 = vmatprep.subr.mxu0 0.0
    %2410 = vmatpush2.msra.mxu0 0.0
    %2411 = vmatprep.subr.mxu0 0.0
    %2412 = vmatpush2.msra.mxu0 0.0
    %2413 = vmatprep.subr.mxu0 0.0
    %2414 = vmatpush2.msra.mxu0 0.0
    %2415 = vmatprep.subr.mxu0 0.0
    %2416 = vmatpush2.msra.mxu0 0.0
    %2417 = vmatprep.subr.mxu0 0.0
    %2418 = vmatpush2.msra.mxu0 0.0
    %2419 = vmatprep.subr.mxu0 0.0
    %2420 = vmatpush2.msra.mxu0 0.0
    %2421 = vmatprep.subr.mxu0 0.0
    %2422 = vmatpush2.msra.mxu0 0.0
    %2423 = vmatprep.subr.mxu0 0.0
    %2424 = vmatpush2.msra.mxu0 0.0
    %2425 = vmatprep.subr.mxu0 0.0
    %2426 = vmatpush2.msra.mxu0 0.0
    %2427 = vmatprep.subr.mxu0 0.0
    %2428 = vmatpush2.msra.mxu0 0.0
    %2429 = vmatprep.subr.mxu0 0.0
    %2430 = vmatpush2.msra.mxu0 0.0
    %2431 = vmatprep.subr.mxu0 0.0
    %2432 = vmatpush2.msra.mxu0 0.0
    %2433 = vmatprep.subr.mxu0 0.0
    %2434 = vmatpush2.msra.mxu0 0.0
    %2435 = vmatprep.mubr.f32.mxu0 0.0
    %2436 = vmatmul.mubr.f32.gmra.mxu0 %v2369
    %v2437 = vpop.f32.mrf.mxu0
    %v2438 = vadd.f32 %v114, %v2437
    %v2439 = vpop.f32.mrf.mxu0
    %2440 = vdwg.mxu0
    %v2441 = vmax.f32 %v2438, 0.0
    %v2443 = vsel %vm307, %v2441, 0
    %2445 = vmatprep.subr.mxu0 0.0
    %2446 = vmatpush1.msra.mxu0 0.0
    %2447 = vmatprep.subr.mxu0 0.0
    %2448 = vmatpush1.msra.mxu0 0.0
    %2449 = vmatprep.subr.mxu0 0.0
    %2450 = vmatpush1.msra.mxu0 0.0
    %2451 = vmatprep.subr.mxu0 0.0
    %2452 = vmatpush1.msra.mxu0 0.0
    %2453 = vmatprep.subr.mxu0 0.0
    %2454 = vmatpush1.msra.mxu0 0.0
    %2455 = vmatprep.subr.mxu0 0.0
    %2456 = vmatpush1.msra.mxu0 0.0
    %2457 = vmatprep.subr.mxu0 0.0
    %2458 = vmatpush1.msra.mxu0 0.0
    %2459 = vmatprep.subr.mxu0 0.0
    %2460 = vmatpush1.msra.mxu0 0.0
    %2461 = vmatprep.subr.mxu0 0.0
    %2462 = vmatpush1.msra.mxu0 %v87
    %2463 = vmatprep.subr.mxu0 0.0
    %2464 = vmatpush1.msra.mxu0 %v86
    %2465 = vmatprep.subr.mxu0 0.0
    %2466 = vmatpush1.msra.mxu0 %v85
    %2467 = vmatprep.subr.mxu0 0.0
    %2468 = vmatpush1.msra.mxu0 %v84
    %2469 = vmatprep.subr.mxu0 0.0
    %2470 = vmatpush1.msra.mxu0 %v83
    %2471 = vmatprep.subr.mxu0 0.0
    %2472 = vmatpush1.msra.mxu0 %v82
    %2473 = vmatprep.subr.mxu0 0.0
    %2474 = vmatpush1.msra.mxu0 %v81
    %2475 = vmatprep.subr.mxu0 0.0
    %2476 = vmatpush1.msra.mxu0 %v80
    %2477 = vmatprep.subr.mxu0 0.0
    %2478 = vmatpush2.msra.mxu0 0.0
    %2479 = vmatprep.subr.mxu0 0.0
    %2480 = vmatpush2.msra.mxu0 0.0
    %2481 = vmatprep.subr.mxu0 0.0
    %2482 = vmatpush2.msra.mxu0 0.0
    %2483 = vmatprep.subr.mxu0 0.0
    %2484 = vmatpush2.msra.mxu0 0.0
    %2485 = vmatprep.subr.mxu0 0.0
    %2486 = vmatpush2.msra.mxu0 0.0
    %2487 = vmatprep.subr.mxu0 0.0
    %2488 = vmatpush2.msra.mxu0 0.0
    %2489 = vmatprep.subr.mxu0 0.0
    %2490 = vmatpush2.msra.mxu0 0.0
    %2491 = vmatprep.subr.mxu0 0.0
    %2492 = vmatpush2.msra.mxu0 0.0
    %2493 = vmatprep.subr.mxu0 0.0
    %2494 = vmatpush2.msra.mxu0 0.0
    %2495 = vmatprep.subr.mxu0 0.0
    %2496 = vmatpush2.msra.mxu0 0.0
    %2497 = vmatprep.subr.mxu0 0.0
    %2498 = vmatpush2.msra.mxu0 0.0
    %2499 = vmatprep.subr.mxu0 0.0
    %2500 = vmatpush2.msra.mxu0 0.0
    %2501 = vmatprep.subr.mxu0 0.0
    %2502 = vmatpush2.msra.mxu0 0.0
    %2503 = vmatprep.subr.mxu0 0.0
    %2504 = vmatpush2.msra.mxu0 0.0
    %2505 = vmatprep.subr.mxu0 0.0
    %2506 = vmatpush2.msra.mxu0 0.0
    %2507 = vmatprep.subr.mxu0 0.0
    %2508 = vmatpush2.msra.mxu0 0.0
    %2509 = vmatprep.mubr.f32.mxu0 0.0
    %2510 = vmatmul.mubr.f32.gmra.mxu0 %v2443
    %v2511 = vpop.f32.mrf.mxu0
    %v2512 = vadd.f32 %v121, %v2511
    %v2513 = vpop.f32.mrf.mxu0
    %2514 = vdwg.mxu0
    %v2515 = vsel %vm455, %v2512, -inf
    %2516 = vmax.xlane.f32.xlu0 %v2515
    %v2517 = vpop.xlane.xlu0 %2516
    %v2518 = vsub.f32 %v2512, %v2517
    %v2519 = vmul.f32 %v2518, 1.442695
    %v2520 = vpow.pop %v2519
    %v2521 = vsel %vm455, %v2520, 0.0
    %2522 = vadd.xlane.f32.xlu0 %v2521
    %v2523 = vpop.xlane.xlu0 %2522
    %v2524 = vrcp.pop %v2523
    %v2525 = vmul.f32 %v2520, %v2524
    %2527 = vrot.lane.b32.xlu0 %v2525, 24
    %v2528 = vpop.permute.xlu0 %2527
    %vm2530 = vcmask 222400
    %2531 = vst.msk [vmem:[#allocation7] sm:$0x3] %vm2530, %v2528
    %v2532 = vld [vmem:[%s0] sm:$0x3]
    %2534 = vset.pattern.permute.xlu0 7
    %2535 = vperm.xlu0 %2534, %v2532
    %v2536 = vpop.permute.xlu0 %2535
    %v2538 = vmul.f32 %v2536, %v93
    %2539 = vmatprep.subr.mxu0 0.0
    %2540 = vmatpush1.msra.mxu0 0.0
    %2541 = vmatprep.subr.mxu0 0.0
    %2542 = vmatpush1.msra.mxu0 0.0
    %2543 = vmatprep.subr.mxu0 0.0
    %2544 = vmatpush1.msra.mxu0 0.0
    %2545 = vmatprep.subr.mxu0 0.0
    %2546 = vmatpush1.msra.mxu0 0.0
    %2547 = vmatprep.subr.mxu0 0.0
    %2548 = vmatpush1.msra.mxu0 0.0
    %2549 = vmatprep.subr.mxu0 0.0
    %2550 = vmatpush1.msra.mxu0 0.0
    %2551 = vmatprep.subr.mxu0 0.0
    %2552 = vmatpush1.msra.mxu0 0.0
    %2553 = vmatprep.subr.mxu0 0.0
    %2554 = vmatpush1.msra.mxu0 0.0
    %2555 = vmatprep.subr.mxu0 0.0
    %2556 = vmatpush1.msra.mxu0 0.0
    %2557 = vmatprep.subr.mxu0 0.0
    %2558 = vmatpush1.msra.mxu0 0.0
    %2559 = vmatprep.subr.mxu0 0.0
    %2560 = vmatpush1.msra.mxu0 0.0
    %2561 = vmatprep.subr.mxu0 0.0
    %2562 = vmatpush1.msra.mxu0 0.0
    %2563 = vmatprep.subr.mxu0 0.0
    %2564 = vmatpush1.msra.mxu0 %v67
    %2565 = vmatprep.subr.mxu0 0.0
    %2566 = vmatpush1.msra.mxu0 %v66
    %2567 = vmatprep.subr.mxu0 0.0
    %2568 = vmatpush1.msra.mxu0 %v65
    %2569 = vmatprep.subr.mxu0 0.0
    %2570 = vmatpush1.msra.mxu0 %v64
    %2571 = vmatprep.subr.mxu0 0.0
    %2572 = vmatpush2.msra.mxu0 0.0
    %2573 = vmatprep.subr.mxu0 0.0
    %2574 = vmatpush2.msra.mxu0 0.0
    %2575 = vmatprep.subr.mxu0 0.0
    %2576 = vmatpush2.msra.mxu0 0.0
    %2577 = vmatprep.subr.mxu0 0.0
    %2578 = vmatpush2.msra.mxu0 0.0
    %2579 = vmatprep.subr.mxu0 0.0
    %2580 = vmatpush2.msra.mxu0 0.0
    %2581 = vmatprep.subr.mxu0 0.0
    %2582 = vmatpush2.msra.mxu0 0.0
    %2583 = vmatprep.subr.mxu0 0.0
    %2584 = vmatpush2.msra.mxu0 0.0
    %2585 = vmatprep.subr.mxu0 0.0
    %2586 = vmatpush2.msra.mxu0 0.0
    %2587 = vmatprep.subr.mxu0 0.0
    %2588 = vmatpush2.msra.mxu0 0.0
    %2589 = vmatprep.subr.mxu0 0.0
    %2590 = vmatpush2.msra.mxu0 0.0
    %2591 = vmatprep.subr.mxu0 0.0
    %2592 = vmatpush2.msra.mxu0 0.0
    %2593 = vmatprep.subr.mxu0 0.0
    %2594 = vmatpush2.msra.mxu0 0.0
    %2595 = vmatprep.subr.mxu0 0.0
    %2596 = vmatpush2.msra.mxu0 0.0
    %2597 = vmatprep.subr.mxu0 0.0
    %2598 = vmatpush2.msra.mxu0 0.0
    %2599 = vmatprep.subr.mxu0 0.0
    %2600 = vmatpush2.msra.mxu0 0.0
    %2601 = vmatprep.subr.mxu0 0.0
    %2602 = vmatpush2.msra.mxu0 0.0
    %2603 = vmatprep.mubr.f32.mxu0 0.0
    %2604 = vmatmul.mubr.f32.gmra.mxu0 %v2295
    %v2605 = vpop.f32.mrf.mxu0
    %v2606 = vadd.f32 0.0, %v2605
    %v2607 = vpop.f32.mrf.mxu0
    %2608 = vdwg.mxu0
    %v2609 = vadd.f32 %v2538, %v2606
    %v2610 = vadd.f32 %v2609, %v100
    %v2611 = vxor.u32 %v2610, 2147483648
    %v2612 = vmul.f32 %v2611, 1.442695
    %v2613 = vpow.pop %v2612
    %v2614 = vadd.f32 %v2613, 1.0
    %v2615 = vrcp.pop %v2614
    %v2616 = vmul.f32 1.0, %v2615
    %v2617 = vmul.f32 %v2616, 2.0
    %v2618 = vsub.f32 %v2617, 1.0
    %v2619 = vmul.f32 %v2616, %v2285
    %2621 = vrot.lane.b32.xlu0 %v2618, 64
    %v2622 = vpop.permute.xlu0 %2621
    %v2624 = vmul.f32 %v2616, %v2622
    %2626 = vrot.lane.b32.xlu0 %v2624, 32
    %v2627 = vpop.permute.xlu0 %2626
    %v2629 = vadd.f32 %v2619, %v2627
    %v2630 = vtanh.pop %v2629
    %2632 = vrot.lane.b32.xlu0 %v2630, 64
    %v2633 = vpop.permute.xlu0 %2632
    %v2635 = vmul.f32 %v2616, %v2633
    %2637 = vrot.lane.b32.xlu0 %v2635, 32
    %v2638 = vpop.permute.xlu0 %2637
    %v2639 = vsel %vm130, %v2638, 0
    %2641 = vmatprep.subr.mxu0 0.0
    %2642 = vmatpush1.msra.mxu0 0.0
    %2643 = vmatprep.subr.mxu0 0.0
    %2644 = vmatpush1.msra.mxu0 0.0
    %2645 = vmatprep.subr.mxu0 0.0
    %2646 = vmatpush1.msra.mxu0 0.0
    %2647 = vmatprep.subr.mxu0 0.0
    %2648 = vmatpush1.msra.mxu0 0.0
    %2649 = vmatprep.subr.mxu0 0.0
    %2650 = vmatpush1.msra.mxu0 0.0
    %2651 = vmatprep.subr.mxu0 0.0
    %2652 = vmatpush1.msra.mxu0 0.0
    %2653 = vmatprep.subr.mxu0 0.0
    %2654 = vmatpush1.msra.mxu0 0.0
    %2655 = vmatprep.subr.mxu0 0.0
    %2656 = vmatpush1.msra.mxu0 0.0
    %2657 = vmatprep.subr.mxu0 0.0
    %2658 = vmatpush1.msra.mxu0 0.0
    %2659 = vmatprep.subr.mxu0 0.0
    %2660 = vmatpush1.msra.mxu0 0.0
    %2661 = vmatprep.subr.mxu0 0.0
    %2662 = vmatpush1.msra.mxu0 0.0
    %2663 = vmatprep.subr.mxu0 0.0
    %2664 = vmatpush1.msra.mxu0 0.0
    %2665 = vmatprep.subr.mxu0 0.0
    %2666 = vmatpush1.msra.mxu0 %v71
    %2667 = vmatprep.subr.mxu0 0.0
    %2668 = vmatpush1.msra.mxu0 %v70
    %2669 = vmatprep.subr.mxu0 0.0
    %2670 = vmatpush1.msra.mxu0 %v69
    %2671 = vmatprep.subr.mxu0 0.0
    %2672 = vmatpush1.msra.mxu0 %v68
    %2673 = vmatprep.subr.mxu0 0.0
    %2674 = vmatpush2.msra.mxu0 0.0
    %2675 = vmatprep.subr.mxu0 0.0
    %2676 = vmatpush2.msra.mxu0 0.0
    %2677 = vmatprep.subr.mxu0 0.0
    %2678 = vmatpush2.msra.mxu0 0.0
    %2679 = vmatprep.subr.mxu0 0.0
    %2680 = vmatpush2.msra.mxu0 0.0
    %2681 = vmatprep.subr.mxu0 0.0
    %2682 = vmatpush2.msra.mxu0 0.0
    %2683 = vmatprep.subr.mxu0 0.0
    %2684 = vmatpush2.msra.mxu0 0.0
    %2685 = vmatprep.subr.mxu0 0.0
    %2686 = vmatpush2.msra.mxu0 0.0
    %2687 = vmatprep.subr.mxu0 0.0
    %2688 = vmatpush2.msra.mxu0 0.0
    %2689 = vmatprep.subr.mxu0 0.0
    %2690 = vmatpush2.msra.mxu0 0.0
    %2691 = vmatprep.subr.mxu0 0.0
    %2692 = vmatpush2.msra.mxu0 0.0
    %2693 = vmatprep.subr.mxu0 0.0
    %2694 = vmatpush2.msra.mxu0 0.0
    %2695 = vmatprep.subr.mxu0 0.0
    %2696 = vmatpush2.msra.mxu0 0.0
    %2697 = vmatprep.subr.mxu0 0.0
    %2698 = vmatpush2.msra.mxu0 0.0
    %2699 = vmatprep.subr.mxu0 0.0
    %2700 = vmatpush2.msra.mxu0 0.0
    %2701 = vmatprep.subr.mxu0 0.0
    %2702 = vmatpush2.msra.mxu0 0.0
    %2703 = vmatprep.subr.mxu0 0.0
    %2704 = vmatpush2.msra.mxu0 0.0
    %2705 = vmatprep.mubr.f32.mxu0 0.0
    %2706 = vmatmul.mubr.f32.gmra.mxu0 %v2639
    %v2707 = vpop.f32.mrf.mxu0
    %v2708 = vadd.f32 %v107, %v2707
    %v2709 = vpop.f32.mrf.mxu0
    %2710 = vdwg.mxu0
    %v2711 = vmax.f32 %v2708, 0.0
    %v2713 = vsel %vm307, %v2711, 0
    %2715 = vmatprep.subr.mxu0 0.0
    %2716 = vmatpush1.msra.mxu0 0.0
    %2717 = vmatprep.subr.mxu0 0.0
    %2718 = vmatpush1.msra.mxu0 0.0
    %2719 = vmatprep.subr.mxu0 0.0
    %2720 = vmatpush1.msra.mxu0 0.0
    %2721 = vmatprep.subr.mxu0 0.0
    %2722 = vmatpush1.msra.mxu0 0.0
    %2723 = vmatprep.subr.mxu0 0.0
    %2724 = vmatpush1.msra.mxu0 0.0
    %2725 = vmatprep.subr.mxu0 0.0
    %2726 = vmatpush1.msra.mxu0 0.0
    %2727 = vmatprep.subr.mxu0 0.0
    %2728 = vmatpush1.msra.mxu0 0.0
    %2729 = vmatprep.subr.mxu0 0.0
    %2730 = vmatpush1.msra.mxu0 0.0
    %2731 = vmatprep.subr.mxu0 0.0
    %2732 = vmatpush1.msra.mxu0 %v79
    %2733 = vmatprep.subr.mxu0 0.0
    %2734 = vmatpush1.msra.mxu0 %v78
    %2735 = vmatprep.subr.mxu0 0.0
    %2736 = vmatpush1.msra.mxu0 %v77
    %2737 = vmatprep.subr.mxu0 0.0
    %2738 = vmatpush1.msra.mxu0 %v76
    %2739 = vmatprep.subr.mxu0 0.0
    %2740 = vmatpush1.msra.mxu0 %v75
    %2741 = vmatprep.subr.mxu0 0.0
    %2742 = vmatpush1.msra.mxu0 %v74
    %2743 = vmatprep.subr.mxu0 0.0
    %2744 = vmatpush1.msra.mxu0 %v73
    %2745 = vmatprep.subr.mxu0 0.0
    %2746 = vmatpush1.msra.mxu0 %v72
    %2747 = vmatprep.subr.mxu0 0.0
    %2748 = vmatpush2.msra.mxu0 0.0
    %2749 = vmatprep.subr.mxu0 0.0
    %2750 = vmatpush2.msra.mxu0 0.0
    %2751 = vmatprep.subr.mxu0 0.0
    %2752 = vmatpush2.msra.mxu0 0.0
    %2753 = vmatprep.subr.mxu0 0.0
    %2754 = vmatpush2.msra.mxu0 0.0
    %2755 = vmatprep.subr.mxu0 0.0
    %2756 = vmatpush2.msra.mxu0 0.0
    %2757 = vmatprep.subr.mxu0 0.0
    %2758 = vmatpush2.msra.mxu0 0.0
    %2759 = vmatprep.subr.mxu0 0.0
    %2760 = vmatpush2.msra.mxu0 0.0
    %2761 = vmatprep.subr.mxu0 0.0
    %2762 = vmatpush2.msra.mxu0 0.0
    %2763 = vmatprep.subr.mxu0 0.0
    %2764 = vmatpush2.msra.mxu0 0.0
    %2765 = vmatprep.subr.mxu0 0.0
    %2766 = vmatpush2.msra.mxu0 0.0
    %2767 = vmatprep.subr.mxu0 0.0
    %2768 = vmatpush2.msra.mxu0 0.0
    %2769 = vmatprep.subr.mxu0 0.0
    %2770 = vmatpush2.msra.mxu0 0.0
    %2771 = vmatprep.subr.mxu0 0.0
    %2772 = vmatpush2.msra.mxu0 0.0
    %2773 = vmatprep.subr.mxu0 0.0
    %2774 = vmatpush2.msra.mxu0 0.0
    %2775 = vmatprep.subr.mxu0 0.0
    %2776 = vmatpush2.msra.mxu0 0.0
    %2777 = vmatprep.subr.mxu0 0.0
    %2778 = vmatpush2.msra.mxu0 0.0
    %2779 = vmatprep.mubr.f32.mxu0 0.0
    %2780 = vmatmul.mubr.f32.gmra.mxu0 %v2713
    %v2781 = vpop.f32.mrf.mxu0
    %v2782 = vadd.f32 %v114, %v2781
    %v2783 = vpop.f32.mrf.mxu0
    %2784 = vdwg.mxu0
    %v2785 = vmax.f32 %v2782, 0.0
    %v2787 = vsel %vm307, %v2785, 0
    %2789 = vmatprep.subr.mxu0 0.0
    %2790 = vmatpush1.msra.mxu0 0.0
    %2791 = vmatprep.subr.mxu0 0.0
    %2792 = vmatpush1.msra.mxu0 0.0
    %2793 = vmatprep.subr.mxu0 0.0
    %2794 = vmatpush1.msra.mxu0 0.0
    %2795 = vmatprep.subr.mxu0 0.0
    %2796 = vmatpush1.msra.mxu0 0.0
    %2797 = vmatprep.subr.mxu0 0.0
    %2798 = vmatpush1.msra.mxu0 0.0
    %2799 = vmatprep.subr.mxu0 0.0
    %2800 = vmatpush1.msra.mxu0 0.0
    %2801 = vmatprep.subr.mxu0 0.0
    %2802 = vmatpush1.msra.mxu0 0.0
    %2803 = vmatprep.subr.mxu0 0.0
    %2804 = vmatpush1.msra.mxu0 0.0
    %2805 = vmatprep.subr.mxu0 0.0
    %2806 = vmatpush1.msra.mxu0 %v87
    %2807 = vmatprep.subr.mxu0 0.0
    %2808 = vmatpush1.msra.mxu0 %v86
    %2809 = vmatprep.subr.mxu0 0.0
    %2810 = vmatpush1.msra.mxu0 %v85
    %2811 = vmatprep.subr.mxu0 0.0
    %2812 = vmatpush1.msra.mxu0 %v84
    %2813 = vmatprep.subr.mxu0 0.0
    %2814 = vmatpush1.msra.mxu0 %v83
    %2815 = vmatprep.subr.mxu0 0.0
    %2816 = vmatpush1.msra.mxu0 %v82
    %2817 = vmatprep.subr.mxu0 0.0
    %2818 = vmatpush1.msra.mxu0 %v81
    %2819 = vmatprep.subr.mxu0 0.0
    %2820 = vmatpush1.msra.mxu0 %v80
    %2821 = vmatprep.subr.mxu0 0.0
    %2822 = vmatpush2.msra.mxu0 0.0
    %2823 = vmatprep.subr.mxu0 0.0
    %2824 = vmatpush2.msra.mxu0 0.0
    %2825 = vmatprep.subr.mxu0 0.0
    %2826 = vmatpush2.msra.mxu0 0.0
    %2827 = vmatprep.subr.mxu0 0.0
    %2828 = vmatpush2.msra.mxu0 0.0
    %2829 = vmatprep.subr.mxu0 0.0
    %2830 = vmatpush2.msra.mxu0 0.0
    %2831 = vmatprep.subr.mxu0 0.0
    %2832 = vmatpush2.msra.mxu0 0.0
    %2833 = vmatprep.subr.mxu0 0.0
    %2834 = vmatpush2.msra.mxu0 0.0
    %2835 = vmatprep.subr.mxu0 0.0
    %2836 = vmatpush2.msra.mxu0 0.0
    %2837 = vmatprep.subr.mxu0 0.0
    %2838 = vmatpush2.msra.mxu0 0.0
    %2839 = vmatprep.subr.mxu0 0.0
    %2840 = vmatpush2.msra.mxu0 0.0
    %2841 = vmatprep.subr.mxu0 0.0
    %2842 = vmatpush2.msra.mxu0 0.0
    %2843 = vmatprep.subr.mxu0 0.0
    %2844 = vmatpush2.msra.mxu0 0.0
    %2845 = vmatprep.subr.mxu0 0.0
    %2846 = vmatpush2.msra.mxu0 0.0
    %2847 = vmatprep.subr.mxu0 0.0
    %2848 = vmatpush2.msra.mxu0 0.0
    %2849 = vmatprep.subr.mxu0 0.0
    %2850 = vmatpush2.msra.mxu0 0.0
    %2851 = vmatprep.subr.mxu0 0.0
    %2852 = vmatpush2.msra.mxu0 0.0
    %2853 = vmatprep.mubr.f32.mxu0 0.0
    %2854 = vmatmul.mubr.f32.gmra.mxu0 %v2787
    %v2855 = vpop.f32.mrf.mxu0
    %v2856 = vadd.f32 %v121, %v2855
    %v2857 = vpop.f32.mrf.mxu0
    %2858 = vdwg.mxu0
    %v2859 = vsel %vm455, %v2856, -inf
    %2860 = vmax.xlane.f32.xlu0 %v2859
    %v2861 = vpop.xlane.xlu0 %2860
    %v2862 = vsub.f32 %v2856, %v2861
    %v2863 = vmul.f32 %v2862, 1.442695
    %v2864 = vpow.pop %v2863
    %v2865 = vsel %vm455, %v2864, 0.0
    %2866 = vadd.xlane.f32.xlu0 %v2865
    %v2867 = vpop.xlane.xlu0 %2866
    %v2868 = vrcp.pop %v2867
    %v2869 = vmul.f32 %v2864, %v2868
    %2871 = vrot.lane.b32.xlu0 %v2869, 28
    %v2872 = vpop.permute.xlu0 %2871
    %vm2874 = vcmask 255200
    %2875 = vst.msk [vmem:[#allocation7] sm:$0x3] %vm2874, %v2872
    // Predicated region
    $region50: #{tpu_custom_call.1} parent=1 // pred_check
      _
    $region51: #{tpu_custom_call.1} parent=1 // pred_check_branch
      %2877 = sbr.rel (0) target = $region53
    $region52: #{tpu_custom_call.1} parent=1 // pred_region
      %s2879 = ssub.s32 32, 32
      %2880 = vsyncadd [#allocation4], %s2879
      %s2882 = sshll.u32 [#allocation7], 4
      %s2883 = int_to_ptr.vmem [resolvable:$true] %s2882
      %2885 = dma.vmem_to_hbm [thread:$0]  %s2883, 32, %s10, [#allocation4]
    $region53: #{tpu_custom_call.1} parent=1 // pred_fallthru
      _
    // Predicated region
    $region54: #{tpu_custom_call.1} parent=1 // pred_check
      _
    $region55: #{tpu_custom_call.1} parent=1 // pred_check_branch
      %2887 = sbr.rel (0) target = $region57
    $region56: #{tpu_custom_call.1} parent=1 // pred_region
      %2888 = dma.done [#allocation4], 32
    $region57: #{tpu_custom_call.1} parent=1 // pred_fallthru
      _
    %2889 = vsyncpa [#allocation3], 1
    %2890 = vsyncpa [#allocation6], 1
    %2891 = vsyncpa [#allocation4], 1

</llo_original>
